<compile_context>
chip_gen: v7x
topology: tpu7x:2x2x1
jax: 0.10.0
libtpu: 0.0.40
codegen_flags: <defaults>
</compile_context>

<pallas_src>
import functools

import jax
import jax.numpy as jnp
from jax.experimental import pallas as pl
from jax.experimental.pallas import tpu as pltpu

CLIP_VAL = 8
FRACTION_BITS = 12
_SCALE = float(1 << FRACTION_BITS)        # 4096.0
_INV_SCALE = 1.0 / _SCALE
_EPS = _INV_SCALE
_LN_EPS = 1e-5


# ----------------------------- in-kernel math -----------------------------

def _make_fxp(x):
    # torch make_fxp: clip to [-(8 - eps), 8 - eps], scale by 2**12,
    # truncate toward zero (f32->i32 convert truncates), rescale.
    hi = CLIP_VAL - _EPS
    x = jnp.minimum(x, hi)
    x = jnp.maximum(x, -hi)
    q = (x * _SCALE).astype(jnp.int32).astype(jnp.float32)
    return q * _INV_SCALE


def _erf(x):
    # TODO(synk): exact lax.erf (torch nn.GELU default) may not lower in
    # Mosaic; Abramowitz&Stegun 7.1.26 rational approx (max abs err ~1.5e-7,
    # far below the 2^-12 fxp LSB), built from exp/mul/add + EUP reciprocal.
    a1, a2, a3, a4, a5 = 0.254829592, -0.284496736, 1.421413741, -1.453152027, 1.061405429
    p = 0.3275911
    sgn = jnp.where(x >= 0.0, 1.0, -1.0)
    ax = jnp.abs(x)
    t = pl.reciprocal(1.0 + p * ax, approx=True)        # EUP slot, not VALU
    poly = ((((a5 * t + a4) * t + a3) * t + a2) * t + a1) * t
    return sgn * (1.0 - poly * jnp.exp(-ax * ax))


def _gelu_exact(x):
    # PyTorch nn.GELU() default ('none') = erf-based GELU.
    return 0.5 * x * (1.0 + _erf(x * 0.7071067811865476))


def _layernorm(x, g, b):
    mean = jnp.mean(x, axis=-1, keepdims=True)
    d = x - mean
    var = jnp.mean(d * d, axis=-1, keepdims=True)
    return d * jax.lax.rsqrt(var + _LN_EPS) * g + b


def _softmax_last(x):
    m = jnp.max(x, axis=-1, keepdims=True)
    e = jnp.exp(x - m)
    return e * pl.reciprocal(jnp.sum(e, axis=-1, keepdims=True), approx=True)


# ------------------------------ fused kernel ------------------------------

def _stack_kernel(x_ref, ln1_g_ref, ln1_b_ref, wq_ref, wk_ref, wv_ref,
                  wproj_ref, bproj_ref, ln2_g_ref, ln2_b_ref,
                  w1_ref, b1_ref, w2_ref, b2_ref,
                  o_ref, *, heads, dim_head):
    l = pl.program_id(1)
    scale = dim_head ** (-0.5)

    # First layer for this batch element: pull the activation into the
    # VMEM-resident output block (its index_map ignores the depth axis, so it
    # stays resident; HBM writeback happens only once, after the last layer).
    @pl.when(l == 0)
    def _():
        o_ref[0] = x_ref[0]

    x = o_ref[0]                                   # (N, D)

    # ---------------- PreNorm + Attention + residual ----------------
    h = _make_fxp(_layernorm(x, ln1_g_ref[0], ln1_b_ref[0]))
    q = _make_fxp(jnp.dot(h, wq_ref[0], preferred_element_type=jnp.float32))
    k = _make_fxp(jnp.dot(h, wk_ref[0], preferred_element_type=jnp.float32))
    v = _make_fxp(jnp.dot(h, wv_ref[0], preferred_element_type=jnp.float32))
    wp = wproj_ref[0]                              # (inner, D)

    # Per-head attention (static unroll, heads is small); the output
    # projection is accumulated head-by-head so per-head outputs never need
    # to be concatenated back to (N, inner).
    proj = jnp.zeros_like(x)                       # (N, D) f32
    for hd in range(heads):
        lo = hd * dim_head
        qh = q[:, lo:lo + dim_head]
        kh = k[:, lo:lo + dim_head]
        vh = v[:, lo:lo + dim_head]
        # scale kept on dots (not folded into q) to preserve pre-truncation
        # rounding semantics of the reference.
        dots = jax.lax.dot_general(
            qh, kh, (((1,), (1,)), ((), ())),
            preferred_element_type=jnp.float32) * scale       # (N, N)
        attn = _make_fxp(_softmax_last(_make_fxp(dots)))      # dropout(p=0)=id
        oh = _make_fxp(jnp.dot(attn, vh, preferred_element_type=jnp.float32))
        proj = proj + jnp.dot(oh, wp[lo:lo + dim_head, :],
                              preferred_element_type=jnp.float32)
    att = _make_fxp(proj + bproj_ref[0])           # drop_projection(p=0)=id
    x = _make_fxp(att + x)                         # residual

    # ---------------- PreNorm + FeedForward + residual ----------------
    h2 = _make_fxp(_layernorm(x, ln2_g_ref[0], ln2_b_ref[0]))
    y = _make_fxp(jnp.dot(h2, w1_ref[0], preferred_element_type=jnp.float32)
                  + b1_ref[0])
    y = _make_fxp(_gelu_exact(y))                  # drop1(p=0)=id
    y = _make_fxp(jnp.dot(y, w2_ref[0], preferred_element_type=jnp.float32)
                  + b2_ref[0])                     # drop2(p=0)=id
    x = _make_fxp(y + x)                           # residual

    o_ref[0] = x                                   # resident until last layer


# ------------------------------ host wrapper ------------------------------

def transformer_forward(x, params, *, heads, dim_head):
    """Run the full fixed-point Transformer stack in a single pallas_call."""
    B, N, D = x.shape
    depth, _, inner = params["wq"].shape
    mlp = params["w1"].shape[-1]

    def wspec(*tail):
        # per-layer weight block, indexed by the depth grid axis only
        return pl.BlockSpec((1,) + tuple(tail),
                            lambda b, l: (l,) + (0,) * len(tail))

    kernel = functools.partial(_stack_kernel, heads=heads, dim_head=dim_head)
    return pl.pallas_call(
        kernel,
        out_shape=jax.ShapeDtypeStruct((B, N, D), jnp.float32),
        grid=(B, depth),
        in_specs=[
            pl.BlockSpec((1, N, D), lambda b, l: (b, 0, 0)),   # x (per batch)
            wspec(1, D), wspec(1, D),                          # ln1 gamma/beta
            wspec(D, inner), wspec(D, inner), wspec(D, inner), # Wq, Wk, Wv
            wspec(inner, D), wspec(1, D),                      # Wproj, bproj
            wspec(1, D), wspec(1, D),                          # ln2 gamma/beta
            wspec(D, mlp), wspec(1, mlp),                      # W1, b1
            wspec(mlp, D), wspec(1, D),                        # W2, b2
        ],
        out_specs=pl.BlockSpec((1, N, D), lambda b, l: (b, 0, 0)),
        compiler_params=pltpu.CompilerParams(
            # batch axis parallel (v7x has 2 TensorCores); depth carries the
            # resident activation -> arbitrary.
            dimension_semantics=("parallel", "arbitrary"),
            # TODO(synk): re-derive for real ViT sizes (tile mlp_dim /
            # single-buffer weights under v7x's 64 MiB VMEM); ample here.
            vmem_limit_bytes=32 * 1024 * 1024),
    )(x, params["ln1_g"], params["ln1_b"],
      params["wq"], params["wk"], params["wv"],
      params["wproj"], params["bproj"],
      params["ln2_g"], params["ln2_b"],
      params["w1"], params["b1"], params["w2"], params["b2"])


def init_params(key, depth, dim, heads, dim_head, mlp_dim):
    inner = heads * dim_head
    ks = jax.random.split(key, 7)
    s = 0.05
    return dict(
        ln1_g=jnp.ones((depth, 1, dim), jnp.float32),
        ln1_b=jnp.zeros((depth, 1, dim), jnp.float32),
        wq=s * jax.random.normal(ks[0], (depth, dim, inner), jnp.float32),
        wk=s * jax.random.normal(ks[1], (depth, dim, inner), jnp.float32),
        wv=s * jax.random.normal(ks[2], (depth, dim, inner), jnp.float32),
        wproj=s * jax.random.normal(ks[3], (depth, inner, dim), jnp.float32),
        bproj=s * jax.random.normal(ks[4], (depth, 1, dim), jnp.float32),
        ln2_g=jnp.ones((depth, 1, dim), jnp.float32),
        ln2_b=jnp.zeros((depth, 1, dim), jnp.float32),
        w1=s * jax.random.normal(ks[5], (depth, dim, mlp_dim), jnp.float32),
        b1=s * jax.random.normal(ks[6], (depth, 1, mlp_dim), jnp.float32),
        w2=s * jax.random.normal(jax.random.fold_in(key, 123),
                                 (depth, mlp_dim, dim), jnp.float32),
        b2=jnp.zeros((depth, 1, dim), jnp.float32),
    )


if __name__ == "__main__":
    B, N = 2, 8                 # batch, sequence length
    dim, heads, dim_head = 32, 4, 8
    mlp_dim, depth = 64, 2

    root = jax.random.PRNGKey(0)
    k_x, k_p = jax.random.split(root)
    x = 0.5 * jax.random.normal(k_x, (B, N, dim), jnp.float32)
    params = init_params(k_p, depth, dim, heads, dim_head, mlp_dim)

    out = transformer_forward(x, params, heads=heads, dim_head=dim_head)
    out = jax.block_until_ready(out)
    assert out.shape == (B, N, dim) and out.dtype == jnp.float32
    assert bool(jnp.isfinite(out).all())
    print("KERNEL_OK")
</pallas_src>

<mosaic_0001>
module attributes {stable_mosaic.version = 11 : i64} {
  func.func @_stack_kernel(%arg0: i32, %arg1: i32, %arg2: memref<1x8x32xf32, #tpu.memory_space<vmem>>, %arg3: memref<1x1x32xf32, #tpu.memory_space<vmem>>, %arg4: memref<1x1x32xf32, #tpu.memory_space<vmem>>, %arg5: memref<1x32x32xf32, #tpu.memory_space<vmem>>, %arg6: memref<1x32x32xf32, #tpu.memory_space<vmem>>, %arg7: memref<1x32x32xf32, #tpu.memory_space<vmem>>, %arg8: memref<1x32x32xf32, #tpu.memory_space<vmem>>, %arg9: memref<1x1x32xf32, #tpu.memory_space<vmem>>, %arg10: memref<1x1x32xf32, #tpu.memory_space<vmem>>, %arg11: memref<1x1x32xf32, #tpu.memory_space<vmem>>, %arg12: memref<1x32x64xf32, #tpu.memory_space<vmem>>, %arg13: memref<1x1x64xf32, #tpu.memory_space<vmem>>, %arg14: memref<1x64x32xf32, #tpu.memory_space<vmem>>, %arg15: memref<1x1x32xf32, #tpu.memory_space<vmem>>, %arg16: memref<1x8x32xf32, #tpu.memory_space<vmem>>) attributes {dimension_semantics = [#tpu.dimension_semantics<parallel>, #tpu.dimension_semantics<arbitrary>], iteration_bounds = array<i64: 2, 2>, scalar_prefetch = 0 : i64, scratch_operands = 0 : i64, tpu.core_type = #tpu.core_type<tc>, window_params = [{transform_indices = @transform_0, window_bounds = array<i64: 1, 8, 32>}, {transform_indices = @transform_1, window_bounds = array<i64: 1, 1, 32>}, {transform_indices = @transform_2, window_bounds = array<i64: 1, 1, 32>}, {transform_indices = @transform_3, window_bounds = array<i64: 1, 32, 32>}, {transform_indices = @transform_4, window_bounds = array<i64: 1, 32, 32>}, {transform_indices = @transform_5, window_bounds = array<i64: 1, 32, 32>}, {transform_indices = @transform_6, window_bounds = array<i64: 1, 32, 32>}, {transform_indices = @transform_7, window_bounds = array<i64: 1, 1, 32>}, {transform_indices = @transform_8, window_bounds = array<i64: 1, 1, 32>}, {transform_indices = @transform_9, window_bounds = array<i64: 1, 1, 32>}, {transform_indices = @transform_10, window_bounds = array<i64: 1, 32, 64>}, {transform_indices = @transform_11, window_bounds = array<i64: 1, 1, 64>}, {transform_indices = @transform_12, window_bounds = array<i64: 1, 64, 32>}, {transform_indices = @transform_13, window_bounds = array<i64: 1, 1, 32>}, {transform_indices = @transform_14, window_bounds = array<i64: 1, 8, 32>}]} {
    %c0_i32 = arith.constant 0 : i32
    %0 = arith.cmpi eq, %arg1, %c0_i32 : i32
    %1 = arith.extui %0 : i1 to i32
    %c0_i32_0 = arith.constant 0 : i32
    %2 = arith.cmpi ne, %1, %c0_i32_0 : i32
    scf.if %2 {
      %c0_191 = arith.constant 0 : index
      %c0_192 = arith.constant 0 : index
      %c0_193 = arith.constant 0 : index
      %438 = vector.load %arg2[%c0_191, %c0_192, %c0_193] : memref<1x8x32xf32, #tpu.memory_space<vmem>>, vector<1x8x32xf32>
      %439 = vector.shape_cast %438 : vector<1x8x32xf32> to vector<8x32xf32>
      %c0_194 = arith.constant 0 : index
      %c0_195 = arith.constant 0 : index
      %c0_196 = arith.constant 0 : index
      %440 = vector.load %arg16[%c0_194, %c0_195, %c0_196] : memref<1x8x32xf32, #tpu.memory_space<vmem>>, vector<1x8x32xf32>
      %441 = vector.shape_cast %440 : vector<1x8x32xf32> to vector<8x32xf32>
      %442 = vector.shape_cast %439 : vector<8x32xf32> to vector<1x8x32xf32>
      tpu.vector_store %arg16[%c0_194, %c0_195, %c0_196], %442 {strides = array<i32>} : memref<1x8x32xf32, #tpu.memory_space<vmem>>, vector<1x8x32xf32>,
    } else {
    }
    %c0 = arith.constant 0 : index
    %c0_1 = arith.constant 0 : index
    %c0_2 = arith.constant 0 : index
    %3 = vector.load %arg16[%c0, %c0_1, %c0_2] : memref<1x8x32xf32, #tpu.memory_space<vmem>>, vector<1x8x32xf32>
    %4 = vector.shape_cast %3 : vector<1x8x32xf32> to vector<8x32xf32>
    %c0_3 = arith.constant 0 : index
    %c0_4 = arith.constant 0 : index
    %c0_5 = arith.constant 0 : index
    %5 = vector.load %arg3[%c0_3, %c0_4, %c0_5] : memref<1x1x32xf32, #tpu.memory_space<vmem>>, vector<1x1x32xf32>
    %6 = vector.shape_cast %5 : vector<1x1x32xf32> to vector<1x32xf32>
    %c0_6 = arith.constant 0 : index
    %c0_7 = arith.constant 0 : index
    %c0_8 = arith.constant 0 : index
    %7 = vector.load %arg4[%c0_6, %c0_7, %c0_8] : memref<1x1x32xf32, #tpu.memory_space<vmem>>, vector<1x1x32xf32>
    %8 = vector.shape_cast %7 : vector<1x1x32xf32> to vector<1x32xf32>
    %cst = arith.constant dense<0.000000e+00> : vector<8xf32>
    %9 = vector.multi_reduction <add>, %4, %cst [1] : vector<8x32xf32> to vector<8xf32>
    %10 = vector.shape_cast %9 : vector<8xf32> to vector<8x1xf32>
    %cst_9 = arith.constant 3.200000e+01 : f32
    %11 = vector.broadcast %cst_9 : f32 to vector<8x1xf32>
    %12 = arith.divf %10, %11 : vector<8x1xf32>
    %13 = vector.broadcast %12 : vector<8x1xf32> to vector<8x32xf32>
    %14 = arith.subf %4, %13 : vector<8x32xf32>
    %15 = arith.mulf %14, %14 : vector<8x32xf32>
    %cst_10 = arith.constant dense<0.000000e+00> : vector<8xf32>
    %16 = vector.multi_reduction <add>, %15, %cst_10 [1] : vector<8x32xf32> to vector<8xf32>
    %17 = vector.shape_cast %16 : vector<8xf32> to vector<8x1xf32>
    %cst_11 = arith.constant 3.200000e+01 : f32
    %18 = vector.broadcast %cst_11 : f32 to vector<8x1xf32>
    %19 = arith.divf %17, %18 : vector<8x1xf32>
    %cst_12 = arith.constant 9.99999974E-6 : f32
    %20 = vector.broadcast %cst_12 : f32 to vector<8x1xf32>
    %21 = arith.addf %19, %20 : vector<8x1xf32>
    %22 = math.rsqrt %21 : vector<8x1xf32>
    %23 = vector.broadcast %22 : vector<8x1xf32> to vector<8x32xf32>
    %24 = arith.mulf %14, %23 : vector<8x32xf32>
    %25 = vector.broadcast %6 : vector<1x32xf32> to vector<8x32xf32>
    %26 = arith.mulf %24, %25 : vector<8x32xf32>
    %27 = vector.broadcast %8 : vector<1x32xf32> to vector<8x32xf32>
    %28 = arith.addf %26, %27 : vector<8x32xf32>
    %cst_13 = arith.constant 7.99975586 : f32
    %29 = vector.broadcast %cst_13 : f32 to vector<8x32xf32>
    %30 = arith.minimumf %28, %29 : vector<8x32xf32>
    %cst_14 = arith.constant -7.99975586 : f32
    %31 = vector.broadcast %cst_14 : f32 to vector<8x32xf32>
    %32 = arith.maximumf %30, %31 : vector<8x32xf32>
    %cst_15 = arith.constant 4.096000e+03 : f32
    %33 = vector.broadcast %cst_15 : f32 to vector<8x32xf32>
    %34 = arith.mulf %32, %33 : vector<8x32xf32>
    %35 = arith.fptosi %34 : vector<8x32xf32> to vector<8x32xi32>
    %36 = arith.sitofp %35 : vector<8x32xi32> to vector<8x32xf32>
    %cst_16 = arith.constant 2.44140625E-4 : f32
    %37 = vector.broadcast %cst_16 : f32 to vector<8x32xf32>
    %38 = arith.mulf %36, %37 : vector<8x32xf32>
    %c0_17 = arith.constant 0 : index
    %c0_18 = arith.constant 0 : index
    %c0_19 = arith.constant 0 : index
    %39 = vector.load %arg5[%c0_17, %c0_18, %c0_19] : memref<1x32x32xf32, #tpu.memory_space<vmem>>, vector<1x32x32xf32>
    %40 = vector.shape_cast %39 : vector<1x32x32xf32> to vector<32x32xf32>
    %cst_20 = arith.constant dense<0.000000e+00> : vector<8x32xf32>
    %41 = tpu.matmul %38, %40, %cst_20 {dimension_numbers = #tpu.dot_dimension_numbers<[1], [0], [0], [1], [0, 0, 1, 1], [], []>} : vector<8x32xf32>, vector<32x32xf32>, vector<8x32xf32> -> vector<8x32xf32>
    %cst_21 = arith.constant 7.99975586 : f32
    %42 = vector.broadcast %cst_21 : f32 to vector<8x32xf32>
    %43 = arith.minimumf %41, %42 : vector<8x32xf32>
    %cst_22 = arith.constant -7.99975586 : f32
    %44 = vector.broadcast %cst_22 : f32 to vector<8x32xf32>
    %45 = arith.maximumf %43, %44 : vector<8x32xf32>
    %cst_23 = arith.constant 4.096000e+03 : f32
    %46 = vector.broadcast %cst_23 : f32 to vector<8x32xf32>
    %47 = arith.mulf %45, %46 : vector<8x32xf32>
    %48 = arith.fptosi %47 : vector<8x32xf32> to vector<8x32xi32>
    %49 = arith.sitofp %48 : vector<8x32xi32> to vector<8x32xf32>
    %cst_24 = arith.constant 2.44140625E-4 : f32
    %50 = vector.broadcast %cst_24 : f32 to vector<8x32xf32>
    %51 = arith.mulf %49, %50 : vector<8x32xf32>
    %c0_25 = arith.constant 0 : index
    %c0_26 = arith.constant 0 : index
    %c0_27 = arith.constant 0 : index
    %52 = vector.load %arg6[%c0_25, %c0_26, %c0_27] : memref<1x32x32xf32, #tpu.memory_space<vmem>>, vector<1x32x32xf32>
    %53 = vector.shape_cast %52 : vector<1x32x32xf32> to vector<32x32xf32>
    %cst_28 = arith.constant dense<0.000000e+00> : vector<8x32xf32>
    %54 = tpu.matmul %38, %53, %cst_28 {dimension_numbers = #tpu.dot_dimension_numbers<[1], [0], [0], [1], [0, 0, 1, 1], [], []>} : vector<8x32xf32>, vector<32x32xf32>, vector<8x32xf32> -> vector<8x32xf32>
    %cst_29 = arith.constant 7.99975586 : f32
    %55 = vector.broadcast %cst_29 : f32 to vector<8x32xf32>
    %56 = arith.minimumf %54, %55 : vector<8x32xf32>
    %cst_30 = arith.constant -7.99975586 : f32
    %57 = vector.broadcast %cst_30 : f32 to vector<8x32xf32>
    %58 = arith.maximumf %56, %57 : vector<8x32xf32>
    %cst_31 = arith.constant 4.096000e+03 : f32
    %59 = vector.broadcast %cst_31 : f32 to vector<8x32xf32>
    %60 = arith.mulf %58, %59 : vector<8x32xf32>
    %61 = arith.fptosi %60 : vector<8x32xf32> to vector<8x32xi32>
    %62 = arith.sitofp %61 : vector<8x32xi32> to vector<8x32xf32>
    %cst_32 = arith.constant 2.44140625E-4 : f32
    %63 = vector.broadcast %cst_32 : f32 to vector<8x32xf32>
    %64 = arith.mulf %62, %63 : vector<8x32xf32>
    %c0_33 = arith.constant 0 : index
    %c0_34 = arith.constant 0 : index
    %c0_35 = arith.constant 0 : index
    %65 = vector.load %arg7[%c0_33, %c0_34, %c0_35] : memref<1x32x32xf32, #tpu.memory_space<vmem>>, vector<1x32x32xf32>
    %66 = vector.shape_cast %65 : vector<1x32x32xf32> to vector<32x32xf32>
    %cst_36 = arith.constant dense<0.000000e+00> : vector<8x32xf32>
    %67 = tpu.matmul %38, %66, %cst_36 {dimension_numbers = #tpu.dot_dimension_numbers<[1], [0], [0], [1], [0, 0, 1, 1], [], []>} : vector<8x32xf32>, vector<32x32xf32>, vector<8x32xf32> -> vector<8x32xf32>
    %cst_37 = arith.constant 7.99975586 : f32
    %68 = vector.broadcast %cst_37 : f32 to vector<8x32xf32>
    %69 = arith.minimumf %67, %68 : vector<8x32xf32>
    %cst_38 = arith.constant -7.99975586 : f32
    %70 = vector.broadcast %cst_38 : f32 to vector<8x32xf32>
    %71 = arith.maximumf %69, %70 : vector<8x32xf32>
    %cst_39 = arith.constant 4.096000e+03 : f32
    %72 = vector.broadcast %cst_39 : f32 to vector<8x32xf32>
    %73 = arith.mulf %71, %72 : vector<8x32xf32>
    %74 = arith.fptosi %73 : vector<8x32xf32> to vector<8x32xi32>
    %75 = arith.sitofp %74 : vector<8x32xi32> to vector<8x32xf32>
    %cst_40 = arith.constant 2.44140625E-4 : f32
    %76 = vector.broadcast %cst_40 : f32 to vector<8x32xf32>
    %77 = arith.mulf %75, %76 : vector<8x32xf32>
    %c0_41 = arith.constant 0 : index
    %c0_42 = arith.constant 0 : index
    %c0_43 = arith.constant 0 : index
    %78 = vector.load %arg8[%c0_41, %c0_42, %c0_43] : memref<1x32x32xf32, #tpu.memory_space<vmem>>, vector<1x32x32xf32>
    %79 = vector.shape_cast %78 : vector<1x32x32xf32> to vector<32x32xf32>
    %cst_44 = arith.constant 0.000000e+00 : f32
    %80 = vector.broadcast %cst_44 : f32 to vector<8x32xf32>
    %81 = vector.extract_strided_slice %51 {offsets = [0, 0], sizes = [8, 8], strides = [1, 1]} : vector<8x32xf32> to vector<8x8xf32>
    %82 = vector.extract_strided_slice %64 {offsets = [0, 0], sizes = [8, 8], strides = [1, 1]} : vector<8x32xf32> to vector<8x8xf32>
    %83 = vector.extract_strided_slice %77 {offsets = [0, 0], sizes = [8, 8], strides = [1, 1]} : vector<8x32xf32> to vector<8x8xf32>
    %cst_45 = arith.constant dense<0.000000e+00> : vector<8x8xf32>
    %84 = tpu.matmul %81, %82, %cst_45 {dimension_numbers = #tpu.dot_dimension_numbers<[1], [1], [0], [0], [0, 0, 1, 0], [], []>} : vector<8x8xf32>, vector<8x8xf32>, vector<8x8xf32> -> vector<8x8xf32>
    %cst_46 = arith.constant 0.353553385 : f32
    %85 = vector.broadcast %cst_46 : f32 to vector<8x8xf32>
    %86 = arith.mulf %84, %85 : vector<8x8xf32>
    %cst_47 = arith.constant 7.99975586 : f32
    %87 = vector.broadcast %cst_47 : f32 to vector<8x8xf32>
    %88 = arith.minimumf %86, %87 : vector<8x8xf32>
    %cst_48 = arith.constant -7.99975586 : f32
    %89 = vector.broadcast %cst_48 : f32 to vector<8x8xf32>
    %90 = arith.maximumf %88, %89 : vector<8x8xf32>
    %cst_49 = arith.constant 4.096000e+03 : f32
    %91 = vector.broadcast %cst_49 : f32 to vector<8x8xf32>
    %92 = arith.mulf %90, %91 : vector<8x8xf32>
    %93 = arith.fptosi %92 : vector<8x8xf32> to vector<8x8xi32>
    %94 = arith.sitofp %93 : vector<8x8xi32> to vector<8x8xf32>
    %cst_50 = arith.constant 2.44140625E-4 : f32
    %95 = vector.broadcast %cst_50 : f32 to vector<8x8xf32>
    %96 = arith.mulf %94, %95 : vector<8x8xf32>
    %cst_51 = arith.constant dense<0xFF800000> : vector<8xf32>
    %97 = vector.multi_reduction <maximumf>, %96, %cst_51 [1] : vector<8x8xf32> to vector<8xf32>
    %98 = vector.shape_cast %97 : vector<8xf32> to vector<8x1xf32>
    %99 = vector.broadcast %98 : vector<8x1xf32> to vector<8x8xf32>
    %100 = arith.subf %96, %99 : vector<8x8xf32>
    %101 = math.exp %100 : vector<8x8xf32>
    %cst_52 = arith.constant dense<0.000000e+00> : vector<8xf32>
    %102 = vector.multi_reduction <add>, %101, %cst_52 [1] : vector<8x8xf32> to vector<8xf32>
    %103 = vector.shape_cast %102 : vector<8xf32> to vector<8x1xf32>
    %104 = tpu.reciprocal %103 {approx = true} : vector<8x1xf32> -> vector<8x1xf32>
    %105 = vector.broadcast %104 : vector<8x1xf32> to vector<8x8xf32>
    %106 = arith.mulf %101, %105 : vector<8x8xf32>
    %cst_53 = arith.constant 7.99975586 : f32
    %107 = vector.broadcast %cst_53 : f32 to vector<8x8xf32>
    %108 = arith.minimumf %106, %107 : vector<8x8xf32>
    %cst_54 = arith.constant -7.99975586 : f32
    %109 = vector.broadcast %cst_54 : f32 to vector<8x8xf32>
    %110 = arith.maximumf %108, %109 : vector<8x8xf32>
    %cst_55 = arith.constant 4.096000e+03 : f32
    %111 = vector.broadcast %cst_55 : f32 to vector<8x8xf32>
    %112 = arith.mulf %110, %111 : vector<8x8xf32>
    %113 = arith.fptosi %112 : vector<8x8xf32> to vector<8x8xi32>
    %114 = arith.sitofp %113 : vector<8x8xi32> to vector<8x8xf32>
    %cst_56 = arith.constant 2.44140625E-4 : f32
    %115 = vector.broadcast %cst_56 : f32 to vector<8x8xf32>
    %116 = arith.mulf %114, %115 : vector<8x8xf32>
    %cst_57 = arith.constant dense<0.000000e+00> : vector<8x8xf32>
    %117 = tpu.matmul %116, %83, %cst_57 {dimension_numbers = #tpu.dot_dimension_numbers<[1], [0], [0], [1], [0, 0, 1, 1], [], []>} : vector<8x8xf32>, vector<8x8xf32>, vector<8x8xf32> -> vector<8x8xf32>
    %cst_58 = arith.constant 7.99975586 : f32
    %118 = vector.broadcast %cst_58 : f32 to vector<8x8xf32>
    %119 = arith.minimumf %117, %118 : vector<8x8xf32>
    %cst_59 = arith.constant -7.99975586 : f32
    %120 = vector.broadcast %cst_59 : f32 to vector<8x8xf32>
    %121 = arith.maximumf %119, %120 : vector<8x8xf32>
    %cst_60 = arith.constant 4.096000e+03 : f32
    %122 = vector.broadcast %cst_60 : f32 to vector<8x8xf32>
    %123 = arith.mulf %121, %122 : vector<8x8xf32>
    %124 = arith.fptosi %123 : vector<8x8xf32> to vector<8x8xi32>
    %125 = arith.sitofp %124 : vector<8x8xi32> to vector<8x8xf32>
    %cst_61 = arith.constant 2.44140625E-4 : f32
    %126 = vector.broadcast %cst_61 : f32 to vector<8x8xf32>
    %127 = arith.mulf %125, %126 : vector<8x8xf32>
    %128 = vector.extract_strided_slice %79 {offsets = [0, 0], sizes = [8, 32], strides = [1, 1]} : vector<32x32xf32> to vector<8x32xf32>
    %cst_62 = arith.constant dense<0.000000e+00> : vector<8x32xf32>
    %129 = tpu.matmul %127, %128, %cst_62 {dimension_numbers = #tpu.dot_dimension_numbers<[1], [0], [0], [1], [0, 0, 1, 1], [], []>} : vector<8x8xf32>, vector<8x32xf32>, vector<8x32xf32> -> vector<8x32xf32>
    %130 = arith.addf %80, %129 : vector<8x32xf32>
    %131 = vector.extract_strided_slice %51 {offsets = [0, 8], sizes = [8, 8], strides = [1, 1]} : vector<8x32xf32> to vector<8x8xf32>
    %132 = vector.extract_strided_slice %64 {offsets = [0, 8], sizes = [8, 8], strides = [1, 1]} : vector<8x32xf32> to vector<8x8xf32>
    %133 = vector.extract_strided_slice %77 {offsets = [0, 8], sizes = [8, 8], strides = [1, 1]} : vector<8x32xf32> to vector<8x8xf32>
    %cst_63 = arith.constant dense<0.000000e+00> : vector<8x8xf32>
    %134 = tpu.matmul %131, %132, %cst_63 {dimension_numbers = #tpu.dot_dimension_numbers<[1], [1], [0], [0], [0, 0, 1, 0], [], []>} : vector<8x8xf32>, vector<8x8xf32>, vector<8x8xf32> -> vector<8x8xf32>
    %cst_64 = arith.constant 0.353553385 : f32
    %135 = vector.broadcast %cst_64 : f32 to vector<8x8xf32>
    %136 = arith.mulf %134, %135 : vector<8x8xf32>
    %cst_65 = arith.constant 7.99975586 : f32
    %137 = vector.broadcast %cst_65 : f32 to vector<8x8xf32>
    %138 = arith.minimumf %136, %137 : vector<8x8xf32>
    %cst_66 = arith.constant -7.99975586 : f32
    %139 = vector.broadcast %cst_66 : f32 to vector<8x8xf32>
    %140 = arith.maximumf %138, %139 : vector<8x8xf32>
    %cst_67 = arith.constant 4.096000e+03 : f32
    %141 = vector.broadcast %cst_67 : f32 to vector<8x8xf32>
    %142 = arith.mulf %140, %141 : vector<8x8xf32>
    %143 = arith.fptosi %142 : vector<8x8xf32> to vector<8x8xi32>
    %144 = arith.sitofp %143 : vector<8x8xi32> to vector<8x8xf32>
    %cst_68 = arith.constant 2.44140625E-4 : f32
    %145 = vector.broadcast %cst_68 : f32 to vector<8x8xf32>
    %146 = arith.mulf %144, %145 : vector<8x8xf32>
    %cst_69 = arith.constant dense<0xFF800000> : vector<8xf32>
    %147 = vector.multi_reduction <maximumf>, %146, %cst_69 [1] : vector<8x8xf32> to vector<8xf32>
    %148 = vector.shape_cast %147 : vector<8xf32> to vector<8x1xf32>
    %149 = vector.broadcast %148 : vector<8x1xf32> to vector<8x8xf32>
    %150 = arith.subf %146, %149 : vector<8x8xf32>
    %151 = math.exp %150 : vector<8x8xf32>
    %cst_70 = arith.constant dense<0.000000e+00> : vector<8xf32>
    %152 = vector.multi_reduction <add>, %151, %cst_70 [1] : vector<8x8xf32> to vector<8xf32>
    %153 = vector.shape_cast %152 : vector<8xf32> to vector<8x1xf32>
    %154 = tpu.reciprocal %153 {approx = true} : vector<8x1xf32> -> vector<8x1xf32>
    %155 = vector.broadcast %154 : vector<8x1xf32> to vector<8x8xf32>
    %156 = arith.mulf %151, %155 : vector<8x8xf32>
    %cst_71 = arith.constant 7.99975586 : f32
    %157 = vector.broadcast %cst_71 : f32 to vector<8x8xf32>
    %158 = arith.minimumf %156, %157 : vector<8x8xf32>
    %cst_72 = arith.constant -7.99975586 : f32
    %159 = vector.broadcast %cst_72 : f32 to vector<8x8xf32>
    %160 = arith.maximumf %158, %159 : vector<8x8xf32>
    %cst_73 = arith.constant 4.096000e+03 : f32
    %161 = vector.broadcast %cst_73 : f32 to vector<8x8xf32>
    %162 = arith.mulf %160, %161 : vector<8x8xf32>
    %163 = arith.fptosi %162 : vector<8x8xf32> to vector<8x8xi32>
    %164 = arith.sitofp %163 : vector<8x8xi32> to vector<8x8xf32>
    %cst_74 = arith.constant 2.44140625E-4 : f32
    %165 = vector.broadcast %cst_74 : f32 to vector<8x8xf32>
    %166 = arith.mulf %164, %165 : vector<8x8xf32>
    %cst_75 = arith.constant dense<0.000000e+00> : vector<8x8xf32>
    %167 = tpu.matmul %166, %133, %cst_75 {dimension_numbers = #tpu.dot_dimension_numbers<[1], [0], [0], [1], [0, 0, 1, 1], [], []>} : vector<8x8xf32>, vector<8x8xf32>, vector<8x8xf32> -> vector<8x8xf32>
    %cst_76 = arith.constant 7.99975586 : f32
    %168 = vector.broadcast %cst_76 : f32 to vector<8x8xf32>
    %169 = arith.minimumf %167, %168 : vector<8x8xf32>
    %cst_77 = arith.constant -7.99975586 : f32
    %170 = vector.broadcast %cst_77 : f32 to vector<8x8xf32>
    %171 = arith.maximumf %169, %170 : vector<8x8xf32>
    %cst_78 = arith.constant 4.096000e+03 : f32
    %172 = vector.broadcast %cst_78 : f32 to vector<8x8xf32>
    %173 = arith.mulf %171, %172 : vector<8x8xf32>
    %174 = arith.fptosi %173 : vector<8x8xf32> to vector<8x8xi32>
    %175 = arith.sitofp %174 : vector<8x8xi32> to vector<8x8xf32>
    %cst_79 = arith.constant 2.44140625E-4 : f32
    %176 = vector.broadcast %cst_79 : f32 to vector<8x8xf32>
    %177 = arith.mulf %175, %176 : vector<8x8xf32>
    %178 = vector.extract_strided_slice %79 {offsets = [8, 0], sizes = [8, 32], strides = [1, 1]} : vector<32x32xf32> to vector<8x32xf32>
    %cst_80 = arith.constant dense<0.000000e+00> : vector<8x32xf32>
    %179 = tpu.matmul %177, %178, %cst_80 {dimension_numbers = #tpu.dot_dimension_numbers<[1], [0], [0], [1], [0, 0, 1, 1], [], []>} : vector<8x8xf32>, vector<8x32xf32>, vector<8x32xf32> -> vector<8x32xf32>
    %180 = arith.addf %130, %179 : vector<8x32xf32>
    %181 = vector.extract_strided_slice %51 {offsets = [0, 16], sizes = [8, 8], strides = [1, 1]} : vector<8x32xf32> to vector<8x8xf32>
    %182 = vector.extract_strided_slice %64 {offsets = [0, 16], sizes = [8, 8], strides = [1, 1]} : vector<8x32xf32> to vector<8x8xf32>
    %183 = vector.extract_strided_slice %77 {offsets = [0, 16], sizes = [8, 8], strides = [1, 1]} : vector<8x32xf32> to vector<8x8xf32>
    %cst_81 = arith.constant dense<0.000000e+00> : vector<8x8xf32>
    %184 = tpu.matmul %181, %182, %cst_81 {dimension_numbers = #tpu.dot_dimension_numbers<[1], [1], [0], [0], [0, 0, 1, 0], [], []>} : vector<8x8xf32>, vector<8x8xf32>, vector<8x8xf32> -> vector<8x8xf32>
    %cst_82 = arith.constant 0.353553385 : f32
    %185 = vector.broadcast %cst_82 : f32 to vector<8x8xf32>
    %186 = arith.mulf %184, %185 : vector<8x8xf32>
    %cst_83 = arith.constant 7.99975586 : f32
    %187 = vector.broadcast %cst_83 : f32 to vector<8x8xf32>
    %188 = arith.minimumf %186, %187 : vector<8x8xf32>
    %cst_84 = arith.constant -7.99975586 : f32
    %189 = vector.broadcast %cst_84 : f32 to vector<8x8xf32>
    %190 = arith.maximumf %188, %189 : vector<8x8xf32>
    %cst_85 = arith.constant 4.096000e+03 : f32
    %191 = vector.broadcast %cst_85 : f32 to vector<8x8xf32>
    %192 = arith.mulf %190, %191 : vector<8x8xf32>
    %193 = arith.fptosi %192 : vector<8x8xf32> to vector<8x8xi32>
    %194 = arith.sitofp %193 : vector<8x8xi32> to vector<8x8xf32>
    %cst_86 = arith.constant 2.44140625E-4 : f32
    %195 = vector.broadcast %cst_86 : f32 to vector<8x8xf32>
    %196 = arith.mulf %194, %195 : vector<8x8xf32>
    %cst_87 = arith.constant dense<0xFF800000> : vector<8xf32>
    %197 = vector.multi_reduction <maximumf>, %196, %cst_87 [1] : vector<8x8xf32> to vector<8xf32>
    %198 = vector.shape_cast %197 : vector<8xf32> to vector<8x1xf32>
    %199 = vector.broadcast %198 : vector<8x1xf32> to vector<8x8xf32>
    %200 = arith.subf %196, %199 : vector<8x8xf32>
    %201 = math.exp %200 : vector<8x8xf32>
    %cst_88 = arith.constant dense<0.000000e+00> : vector<8xf32>
    %202 = vector.multi_reduction <add>, %201, %cst_88 [1] : vector<8x8xf32> to vector<8xf32>
    %203 = vector.shape_cast %202 : vector<8xf32> to vector<8x1xf32>
    %204 = tpu.reciprocal %203 {approx = true} : vector<8x1xf32> -> vector<8x1xf32>
    %205 = vector.broadcast %204 : vector<8x1xf32> to vector<8x8xf32>
    %206 = arith.mulf %201, %205 : vector<8x8xf32>
    %cst_89 = arith.constant 7.99975586 : f32
    %207 = vector.broadcast %cst_89 : f32 to vector<8x8xf32>
    %208 = arith.minimumf %206, %207 : vector<8x8xf32>
    %cst_90 = arith.constant -7.99975586 : f32
    %209 = vector.broadcast %cst_90 : f32 to vector<8x8xf32>
    %210 = arith.maximumf %208, %209 : vector<8x8xf32>
    %cst_91 = arith.constant 4.096000e+03 : f32
    %211 = vector.broadcast %cst_91 : f32 to vector<8x8xf32>
    %212 = arith.mulf %210, %211 : vector<8x8xf32>
    %213 = arith.fptosi %212 : vector<8x8xf32> to vector<8x8xi32>
    %214 = arith.sitofp %213 : vector<8x8xi32> to vector<8x8xf32>
    %cst_92 = arith.constant 2.44140625E-4 : f32
    %215 = vector.broadcast %cst_92 : f32 to vector<8x8xf32>
    %216 = arith.mulf %214, %215 : vector<8x8xf32>
    %cst_93 = arith.constant dense<0.000000e+00> : vector<8x8xf32>
    %217 = tpu.matmul %216, %183, %cst_93 {dimension_numbers = #tpu.dot_dimension_numbers<[1], [0], [0], [1], [0, 0, 1, 1], [], []>} : vector<8x8xf32>, vector<8x8xf32>, vector<8x8xf32> -> vector<8x8xf32>
    %cst_94 = arith.constant 7.99975586 : f32
    %218 = vector.broadcast %cst_94 : f32 to vector<8x8xf32>
    %219 = arith.minimumf %217, %218 : vector<8x8xf32>
    %cst_95 = arith.constant -7.99975586 : f32
    %220 = vector.broadcast %cst_95 : f32 to vector<8x8xf32>
    %221 = arith.maximumf %219, %220 : vector<8x8xf32>
    %cst_96 = arith.constant 4.096000e+03 : f32
    %222 = vector.broadcast %cst_96 : f32 to vector<8x8xf32>
    %223 = arith.mulf %221, %222 : vector<8x8xf32>
    %224 = arith.fptosi %223 : vector<8x8xf32> to vector<8x8xi32>
    %225 = arith.sitofp %224 : vector<8x8xi32> to vector<8x8xf32>
    %cst_97 = arith.constant 2.44140625E-4 : f32
    %226 = vector.broadcast %cst_97 : f32 to vector<8x8xf32>
    %227 = arith.mulf %225, %226 : vector<8x8xf32>
    %228 = vector.extract_strided_slice %79 {offsets = [16, 0], sizes = [8, 32], strides = [1, 1]} : vector<32x32xf32> to vector<8x32xf32>
    %cst_98 = arith.constant dense<0.000000e+00> : vector<8x32xf32>
    %229 = tpu.matmul %227, %228, %cst_98 {dimension_numbers = #tpu.dot_dimension_numbers<[1], [0], [0], [1], [0, 0, 1, 1], [], []>} : vector<8x8xf32>, vector<8x32xf32>, vector<8x32xf32> -> vector<8x32xf32>
    %230 = arith.addf %180, %229 : vector<8x32xf32>
    %231 = vector.extract_strided_slice %51 {offsets = [0, 24], sizes = [8, 8], strides = [1, 1]} : vector<8x32xf32> to vector<8x8xf32>
    %232 = vector.extract_strided_slice %64 {offsets = [0, 24], sizes = [8, 8], strides = [1, 1]} : vector<8x32xf32> to vector<8x8xf32>
    %233 = vector.extract_strided_slice %77 {offsets = [0, 24], sizes = [8, 8], strides = [1, 1]} : vector<8x32xf32> to vector<8x8xf32>
    %cst_99 = arith.constant dense<0.000000e+00> : vector<8x8xf32>
    %234 = tpu.matmul %231, %232, %cst_99 {dimension_numbers = #tpu.dot_dimension_numbers<[1], [1], [0], [0], [0, 0, 1, 0], [], []>} : vector<8x8xf32>, vector<8x8xf32>, vector<8x8xf32> -> vector<8x8xf32>
    %cst_100 = arith.constant 0.353553385 : f32
    %235 = vector.broadcast %cst_100 : f32 to vector<8x8xf32>
    %236 = arith.mulf %234, %235 : vector<8x8xf32>
    %cst_101 = arith.constant 7.99975586 : f32
    %237 = vector.broadcast %cst_101 : f32 to vector<8x8xf32>
    %238 = arith.minimumf %236, %237 : vector<8x8xf32>
    %cst_102 = arith.constant -7.99975586 : f32
    %239 = vector.broadcast %cst_102 : f32 to vector<8x8xf32>
    %240 = arith.maximumf %238, %239 : vector<8x8xf32>
    %cst_103 = arith.constant 4.096000e+03 : f32
    %241 = vector.broadcast %cst_103 : f32 to vector<8x8xf32>
    %242 = arith.mulf %240, %241 : vector<8x8xf32>
    %243 = arith.fptosi %242 : vector<8x8xf32> to vector<8x8xi32>
    %244 = arith.sitofp %243 : vector<8x8xi32> to vector<8x8xf32>
    %cst_104 = arith.constant 2.44140625E-4 : f32
    %245 = vector.broadcast %cst_104 : f32 to vector<8x8xf32>
    %246 = arith.mulf %244, %245 : vector<8x8xf32>
    %cst_105 = arith.constant dense<0xFF800000> : vector<8xf32>
    %247 = vector.multi_reduction <maximumf>, %246, %cst_105 [1] : vector<8x8xf32> to vector<8xf32>
    %248 = vector.shape_cast %247 : vector<8xf32> to vector<8x1xf32>
    %249 = vector.broadcast %248 : vector<8x1xf32> to vector<8x8xf32>
    %250 = arith.subf %246, %249 : vector<8x8xf32>
    %251 = math.exp %250 : vector<8x8xf32>
    %cst_106 = arith.constant dense<0.000000e+00> : vector<8xf32>
    %252 = vector.multi_reduction <add>, %251, %cst_106 [1] : vector<8x8xf32> to vector<8xf32>
    %253 = vector.shape_cast %252 : vector<8xf32> to vector<8x1xf32>
    %254 = tpu.reciprocal %253 {approx = true} : vector<8x1xf32> -> vector<8x1xf32>
    %255 = vector.broadcast %254 : vector<8x1xf32> to vector<8x8xf32>
    %256 = arith.mulf %251, %255 : vector<8x8xf32>
    %cst_107 = arith.constant 7.99975586 : f32
    %257 = vector.broadcast %cst_107 : f32 to vector<8x8xf32>
    %258 = arith.minimumf %256, %257 : vector<8x8xf32>
    %cst_108 = arith.constant -7.99975586 : f32
    %259 = vector.broadcast %cst_108 : f32 to vector<8x8xf32>
    %260 = arith.maximumf %258, %259 : vector<8x8xf32>
    %cst_109 = arith.constant 4.096000e+03 : f32
    %261 = vector.broadcast %cst_109 : f32 to vector<8x8xf32>
    %262 = arith.mulf %260, %261 : vector<8x8xf32>
    %263 = arith.fptosi %262 : vector<8x8xf32> to vector<8x8xi32>
    %264 = arith.sitofp %263 : vector<8x8xi32> to vector<8x8xf32>
    %cst_110 = arith.constant 2.44140625E-4 : f32
    %265 = vector.broadcast %cst_110 : f32 to vector<8x8xf32>
    %266 = arith.mulf %264, %265 : vector<8x8xf32>
    %cst_111 = arith.constant dense<0.000000e+00> : vector<8x8xf32>
    %267 = tpu.matmul %266, %233, %cst_111 {dimension_numbers = #tpu.dot_dimension_numbers<[1], [0], [0], [1], [0, 0, 1, 1], [], []>} : vector<8x8xf32>, vector<8x8xf32>, vector<8x8xf32> -> vector<8x8xf32>
    %cst_112 = arith.constant 7.99975586 : f32
    %268 = vector.broadcast %cst_112 : f32 to vector<8x8xf32>
    %269 = arith.minimumf %267, %268 : vector<8x8xf32>
    %cst_113 = arith.constant -7.99975586 : f32
    %270 = vector.broadcast %cst_113 : f32 to vector<8x8xf32>
    %271 = arith.maximumf %269, %270 : vector<8x8xf32>
    %cst_114 = arith.constant 4.096000e+03 : f32
    %272 = vector.broadcast %cst_114 : f32 to vector<8x8xf32>
    %273 = arith.mulf %271, %272 : vector<8x8xf32>
    %274 = arith.fptosi %273 : vector<8x8xf32> to vector<8x8xi32>
    %275 = arith.sitofp %274 : vector<8x8xi32> to vector<8x8xf32>
    %cst_115 = arith.constant 2.44140625E-4 : f32
    %276 = vector.broadcast %cst_115 : f32 to vector<8x8xf32>
    %277 = arith.mulf %275, %276 : vector<8x8xf32>
    %278 = vector.extract_strided_slice %79 {offsets = [24, 0], sizes = [8, 32], strides = [1, 1]} : vector<32x32xf32> to vector<8x32xf32>
    %cst_116 = arith.constant dense<0.000000e+00> : vector<8x32xf32>
    %279 = tpu.matmul %277, %278, %cst_116 {dimension_numbers = #tpu.dot_dimension_numbers<[1], [0], [0], [1], [0, 0, 1, 1], [], []>} : vector<8x8xf32>, vector<8x32xf32>, vector<8x32xf32> -> vector<8x32xf32>
    %280 = arith.addf %230, %279 : vector<8x32xf32>
    %c0_117 = arith.constant 0 : index
    %c0_118 = arith.constant 0 : index
    %c0_119 = arith.constant 0 : index
    %281 = vector.load %arg9[%c0_117, %c0_118, %c0_119] : memref<1x1x32xf32, #tpu.memory_space<vmem>>, vector<1x1x32xf32>
    %282 = vector.shape_cast %281 : vector<1x1x32xf32> to vector<1x32xf32>
    %283 = vector.broadcast %282 : vector<1x32xf32> to vector<8x32xf32>
    %284 = arith.addf %280, %283 : vector<8x32xf32>
    %cst_120 = arith.constant 7.99975586 : f32
    %285 = vector.broadcast %cst_120 : f32 to vector<8x32xf32>
    %286 = arith.minimumf %284, %285 : vector<8x32xf32>
    %cst_121 = arith.constant -7.99975586 : f32
    %287 = vector.broadcast %cst_121 : f32 to vector<8x32xf32>
    %288 = arith.maximumf %286, %287 : vector<8x32xf32>
    %cst_122 = arith.constant 4.096000e+03 : f32
    %289 = vector.broadcast %cst_122 : f32 to vector<8x32xf32>
    %290 = arith.mulf %288, %289 : vector<8x32xf32>
    %291 = arith.fptosi %290 : vector<8x32xf32> to vector<8x32xi32>
    %292 = arith.sitofp %291 : vector<8x32xi32> to vector<8x32xf32>
    %cst_123 = arith.constant 2.44140625E-4 : f32
    %293 = vector.broadcast %cst_123 : f32 to vector<8x32xf32>
    %294 = arith.mulf %292, %293 : vector<8x32xf32>
    %295 = arith.addf %294, %4 : vector<8x32xf32>
    %cst_124 = arith.constant 7.99975586 : f32
    %296 = vector.broadcast %cst_124 : f32 to vector<8x32xf32>
    %297 = arith.minimumf %295, %296 : vector<8x32xf32>
    %cst_125 = arith.constant -7.99975586 : f32
    %298 = vector.broadcast %cst_125 : f32 to vector<8x32xf32>
    %299 = arith.maximumf %297, %298 : vector<8x32xf32>
    %cst_126 = arith.constant 4.096000e+03 : f32
    %300 = vector.broadcast %cst_126 : f32 to vector<8x32xf32>
    %301 = arith.mulf %299, %300 : vector<8x32xf32>
    %302 = arith.fptosi %301 : vector<8x32xf32> to vector<8x32xi32>
    %303 = arith.sitofp %302 : vector<8x32xi32> to vector<8x32xf32>
    %cst_127 = arith.constant 2.44140625E-4 : f32
    %304 = vector.broadcast %cst_127 : f32 to vector<8x32xf32>
    %305 = arith.mulf %303, %304 : vector<8x32xf32>
    %c0_128 = arith.constant 0 : index
    %c0_129 = arith.constant 0 : index
    %c0_130 = arith.constant 0 : index
    %306 = vector.load %arg10[%c0_128, %c0_129, %c0_130] : memref<1x1x32xf32, #tpu.memory_space<vmem>>, vector<1x1x32xf32>
    %307 = vector.shape_cast %306 : vector<1x1x32xf32> to vector<1x32xf32>
    %c0_131 = arith.constant 0 : index
    %c0_132 = arith.constant 0 : index
    %c0_133 = arith.constant 0 : index
    %308 = vector.load %arg11[%c0_131, %c0_132, %c0_133] : memref<1x1x32xf32, #tpu.memory_space<vmem>>, vector<1x1x32xf32>
    %309 = vector.shape_cast %308 : vector<1x1x32xf32> to vector<1x32xf32>
    %cst_134 = arith.constant dense<0.000000e+00> : vector<8xf32>
    %310 = vector.multi_reduction <add>, %305, %cst_134 [1] : vector<8x32xf32> to vector<8xf32>
    %311 = vector.shape_cast %310 : vector<8xf32> to vector<8x1xf32>
    %cst_135 = arith.constant 3.200000e+01 : f32
    %312 = vector.broadcast %cst_135 : f32 to vector<8x1xf32>
    %313 = arith.divf %311, %312 : vector<8x1xf32>
    %314 = vector.broadcast %313 : vector<8x1xf32> to vector<8x32xf32>
    %315 = arith.subf %305, %314 : vector<8x32xf32>
    %316 = arith.mulf %315, %315 : vector<8x32xf32>
    %cst_136 = arith.constant dense<0.000000e+00> : vector<8xf32>
    %317 = vector.multi_reduction <add>, %316, %cst_136 [1] : vector<8x32xf32> to vector<8xf32>
    %318 = vector.shape_cast %317 : vector<8xf32> to vector<8x1xf32>
    %cst_137 = arith.constant 3.200000e+01 : f32
    %319 = vector.broadcast %cst_137 : f32 to vector<8x1xf32>
    %320 = arith.divf %318, %319 : vector<8x1xf32>
    %cst_138 = arith.constant 9.99999974E-6 : f32
    %321 = vector.broadcast %cst_138 : f32 to vector<8x1xf32>
    %322 = arith.addf %320, %321 : vector<8x1xf32>
    %323 = math.rsqrt %322 : vector<8x1xf32>
    %324 = vector.broadcast %323 : vector<8x1xf32> to vector<8x32xf32>
    %325 = arith.mulf %315, %324 : vector<8x32xf32>
    %326 = vector.broadcast %307 : vector<1x32xf32> to vector<8x32xf32>
    %327 = arith.mulf %325, %326 : vector<8x32xf32>
    %328 = vector.broadcast %309 : vector<1x32xf32> to vector<8x32xf32>
    %329 = arith.addf %327, %328 : vector<8x32xf32>
    %cst_139 = arith.constant 7.99975586 : f32
    %330 = vector.broadcast %cst_139 : f32 to vector<8x32xf32>
    %331 = arith.minimumf %329, %330 : vector<8x32xf32>
    %cst_140 = arith.constant -7.99975586 : f32
    %332 = vector.broadcast %cst_140 : f32 to vector<8x32xf32>
    %333 = arith.maximumf %331, %332 : vector<8x32xf32>
    %cst_141 = arith.constant 4.096000e+03 : f32
    %334 = vector.broadcast %cst_141 : f32 to vector<8x32xf32>
    %335 = arith.mulf %333, %334 : vector<8x32xf32>
    %336 = arith.fptosi %335 : vector<8x32xf32> to vector<8x32xi32>
    %337 = arith.sitofp %336 : vector<8x32xi32> to vector<8x32xf32>
    %cst_142 = arith.constant 2.44140625E-4 : f32
    %338 = vector.broadcast %cst_142 : f32 to vector<8x32xf32>
    %339 = arith.mulf %337, %338 : vector<8x32xf32>
    %c0_143 = arith.constant 0 : index
    %c0_144 = arith.constant 0 : index
    %c0_145 = arith.constant 0 : index
    %340 = vector.load %arg12[%c0_143, %c0_144, %c0_145] : memref<1x32x64xf32, #tpu.memory_space<vmem>>, vector<1x32x64xf32>
    %341 = vector.shape_cast %340 : vector<1x32x64xf32> to vector<32x64xf32>
    %cst_146 = arith.constant dense<0.000000e+00> : vector<8x64xf32>
    %342 = tpu.matmul %339, %341, %cst_146 {dimension_numbers = #tpu.dot_dimension_numbers<[1], [0], [0], [1], [0, 0, 1, 1], [], []>} : vector<8x32xf32>, vector<32x64xf32>, vector<8x64xf32> -> vector<8x64xf32>
    %c0_147 = arith.constant 0 : index
    %c0_148 = arith.constant 0 : index
    %c0_149 = arith.constant 0 : index
    %343 = vector.load %arg13[%c0_147, %c0_148, %c0_149] : memref<1x1x64xf32, #tpu.memory_space<vmem>>, vector<1x1x64xf32>
    %344 = vector.shape_cast %343 : vector<1x1x64xf32> to vector<1x64xf32>
    %345 = vector.broadcast %344 : vector<1x64xf32> to vector<8x64xf32>
    %346 = arith.addf %342, %345 : vector<8x64xf32>
    %cst_150 = arith.constant 7.99975586 : f32
    %347 = vector.broadcast %cst_150 : f32 to vector<8x64xf32>
    %348 = arith.minimumf %346, %347 : vector<8x64xf32>
    %cst_151 = arith.constant -7.99975586 : f32
    %349 = vector.broadcast %cst_151 : f32 to vector<8x64xf32>
    %350 = arith.maximumf %348, %349 : vector<8x64xf32>
    %cst_152 = arith.constant 4.096000e+03 : f32
    %351 = vector.broadcast %cst_152 : f32 to vector<8x64xf32>
    %352 = arith.mulf %350, %351 : vector<8x64xf32>
    %353 = arith.fptosi %352 : vector<8x64xf32> to vector<8x64xi32>
    %354 = arith.sitofp %353 : vector<8x64xi32> to vector<8x64xf32>
    %cst_153 = arith.constant 2.44140625E-4 : f32
    %355 = vector.broadcast %cst_153 : f32 to vector<8x64xf32>
    %356 = arith.mulf %354, %355 : vector<8x64xf32>
    %cst_154 = arith.constant 5.000000e-01 : f32
    %357 = vector.broadcast %cst_154 : f32 to vector<8x64xf32>
    %358 = arith.mulf %357, %356 : vector<8x64xf32>
    %cst_155 = arith.constant 0.707106769 : f32
    %359 = vector.broadcast %cst_155 : f32 to vector<8x64xf32>
    %360 = arith.mulf %356, %359 : vector<8x64xf32>
    %cst_156 = arith.constant 0.000000e+00 : f32
    %361 = vector.broadcast %cst_156 : f32 to vector<8x64xf32>
    %362 = arith.cmpf oge, %360, %361 : vector<8x64xf32>
    %cst_157 = arith.constant 1.000000e+00 : f32
    %cst_158 = arith.constant -1.000000e+00 : f32
    %363 = vector.broadcast %cst_157 : f32 to vector<8x64xf32>
    %364 = vector.broadcast %cst_158 : f32 to vector<8x64xf32>
    %365 = arith.select %362, %363, %364 : vector<8x64xi1>, vector<8x64xf32>
    %366 = math.absf %360 : vector<8x64xf32>
    %cst_159 = arith.constant 0.327591091 : f32
    %367 = vector.broadcast %cst_159 : f32 to vector<8x64xf32>
    %368 = arith.mulf %367, %366 : vector<8x64xf32>
    %cst_160 = arith.constant 1.000000e+00 : f32
    %369 = vector.broadcast %cst_160 : f32 to vector<8x64xf32>
    %370 = arith.addf %369, %368 : vector<8x64xf32>
    %371 = tpu.reciprocal %370 {approx = true} : vector<8x64xf32> -> vector<8x64xf32>
    %cst_161 = arith.constant 1.06140542 : f32
    %372 = vector.broadcast %cst_161 : f32 to vector<8x64xf32>
    %373 = arith.mulf %372, %371 : vector<8x64xf32>
    %cst_162 = arith.constant -1.45315206 : f32
    %374 = vector.broadcast %cst_162 : f32 to vector<8x64xf32>
    %375 = arith.addf %373, %374 : vector<8x64xf32>
    %376 = arith.mulf %375, %371 : vector<8x64xf32>
    %cst_163 = arith.constant 1.42141378 : f32
    %377 = vector.broadcast %cst_163 : f32 to vector<8x64xf32>
    %378 = arith.addf %376, %377 : vector<8x64xf32>
    %379 = arith.mulf %378, %371 : vector<8x64xf32>
    %cst_164 = arith.constant -0.284496725 : f32
    %380 = vector.broadcast %cst_164 : f32 to vector<8x64xf32>
    %381 = arith.addf %379, %380 : vector<8x64xf32>
    %382 = arith.mulf %381, %371 : vector<8x64xf32>
    %cst_165 = arith.constant 0.254829586 : f32
    %383 = vector.broadcast %cst_165 : f32 to vector<8x64xf32>
    %384 = arith.addf %382, %383 : vector<8x64xf32>
    %385 = arith.mulf %384, %371 : vector<8x64xf32>
    %cst_166 = arith.constant 0.000000e+00 : f32
    %386 = vector.broadcast %cst_166 : f32 to vector<8x64xf32>
    %387 = arith.subf %386, %366 : vector<8x64xf32>
    %388 = arith.mulf %387, %366 : vector<8x64xf32>
    %389 = math.exp %388 : vector<8x64xf32>
    %390 = arith.mulf %385, %389 : vector<8x64xf32>
    %cst_167 = arith.constant 1.000000e+00 : f32
    %391 = vector.broadcast %cst_167 : f32 to vector<8x64xf32>
    %392 = arith.subf %391, %390 : vector<8x64xf32>
    %393 = arith.mulf %365, %392 : vector<8x64xf32>
    %cst_168 = arith.constant 1.000000e+00 : f32
    %394 = vector.broadcast %cst_168 : f32 to vector<8x64xf32>
    %395 = arith.addf %394, %393 : vector<8x64xf32>
    %396 = arith.mulf %358, %395 : vector<8x64xf32>
    %cst_169 = arith.constant 7.99975586 : f32
    %397 = vector.broadcast %cst_169 : f32 to vector<8x64xf32>
    %398 = arith.minimumf %396, %397 : vector<8x64xf32>
    %cst_170 = arith.constant -7.99975586 : f32
    %399 = vector.broadcast %cst_170 : f32 to vector<8x64xf32>
    %400 = arith.maximumf %398, %399 : vector<8x64xf32>
    %cst_171 = arith.constant 4.096000e+03 : f32
    %401 = vector.broadcast %cst_171 : f32 to vector<8x64xf32>
    %402 = arith.mulf %400, %401 : vector<8x64xf32>
    %403 = arith.fptosi %402 : vector<8x64xf32> to vector<8x64xi32>
    %404 = arith.sitofp %403 : vector<8x64xi32> to vector<8x64xf32>
    %cst_172 = arith.constant 2.44140625E-4 : f32
    %405 = vector.broadcast %cst_172 : f32 to vector<8x64xf32>
    %406 = arith.mulf %404, %405 : vector<8x64xf32>
    %c0_173 = arith.constant 0 : index
    %c0_174 = arith.constant 0 : index
    %c0_175 = arith.constant 0 : index
    %407 = vector.load %arg14[%c0_173, %c0_174, %c0_175] : memref<1x64x32xf32, #tpu.memory_space<vmem>>, vector<1x64x32xf32>
    %408 = vector.shape_cast %407 : vector<1x64x32xf32> to vector<64x32xf32>
    %cst_176 = arith.constant dense<0.000000e+00> : vector<8x32xf32>
    %409 = tpu.matmul %406, %408, %cst_176 {dimension_numbers = #tpu.dot_dimension_numbers<[1], [0], [0], [1], [0, 0, 1, 1], [], []>} : vector<8x64xf32>, vector<64x32xf32>, vector<8x32xf32> -> vector<8x32xf32>
    %c0_177 = arith.constant 0 : index
    %c0_178 = arith.constant 0 : index
    %c0_179 = arith.constant 0 : index
    %410 = vector.load %arg15[%c0_177, %c0_178, %c0_179] : memref<1x1x32xf32, #tpu.memory_space<vmem>>, vector<1x1x32xf32>
    %411 = vector.shape_cast %410 : vector<1x1x32xf32> to vector<1x32xf32>
    %412 = vector.broadcast %411 : vector<1x32xf32> to vector<8x32xf32>
    %413 = arith.addf %409, %412 : vector<8x32xf32>
    %cst_180 = arith.constant 7.99975586 : f32
    %414 = vector.broadcast %cst_180 : f32 to vector<8x32xf32>
    %415 = arith.minimumf %413, %414 : vector<8x32xf32>
    %cst_181 = arith.constant -7.99975586 : f32
    %416 = vector.broadcast %cst_181 : f32 to vector<8x32xf32>
    %417 = arith.maximumf %415, %416 : vector<8x32xf32>
    %cst_182 = arith.constant 4.096000e+03 : f32
    %418 = vector.broadcast %cst_182 : f32 to vector<8x32xf32>
    %419 = arith.mulf %417, %418 : vector<8x32xf32>
    %420 = arith.fptosi %419 : vector<8x32xf32> to vector<8x32xi32>
    %421 = arith.sitofp %420 : vector<8x32xi32> to vector<8x32xf32>
    %cst_183 = arith.constant 2.44140625E-4 : f32
    %422 = vector.broadcast %cst_183 : f32 to vector<8x32xf32>
    %423 = arith.mulf %421, %422 : vector<8x32xf32>
    %424 = arith.addf %423, %305 : vector<8x32xf32>
    %cst_184 = arith.constant 7.99975586 : f32
    %425 = vector.broadcast %cst_184 : f32 to vector<8x32xf32>
    %426 = arith.minimumf %424, %425 : vector<8x32xf32>
    %cst_185 = arith.constant -7.99975586 : f32
    %427 = vector.broadcast %cst_185 : f32 to vector<8x32xf32>
    %428 = arith.maximumf %426, %427 : vector<8x32xf32>
    %cst_186 = arith.constant 4.096000e+03 : f32
    %429 = vector.broadcast %cst_186 : f32 to vector<8x32xf32>
    %430 = arith.mulf %428, %429 : vector<8x32xf32>
    %431 = arith.fptosi %430 : vector<8x32xf32> to vector<8x32xi32>
    %432 = arith.sitofp %431 : vector<8x32xi32> to vector<8x32xf32>
    %cst_187 = arith.constant 2.44140625E-4 : f32
    %433 = vector.broadcast %cst_187 : f32 to vector<8x32xf32>
    %434 = arith.mulf %432, %433 : vector<8x32xf32>
    %c0_188 = arith.constant 0 : index
    %c0_189 = arith.constant 0 : index
    %c0_190 = arith.constant 0 : index
    %435 = vector.load %arg16[%c0_188, %c0_189, %c0_190] : memref<1x8x32xf32, #tpu.memory_space<vmem>>, vector<1x8x32xf32>
    %436 = vector.shape_cast %435 : vector<1x8x32xf32> to vector<8x32xf32>
    %437 = vector.shape_cast %434 : vector<8x32xf32> to vector<1x8x32xf32>
    tpu.vector_store %arg16[%c0_188, %c0_189, %c0_190], %437 {strides = array<i32>} : memref<1x8x32xf32, #tpu.memory_space<vmem>>, vector<1x8x32xf32>,
    return
  }
  func.func @transform_0(%arg0: i32, %arg1: i32) -> (i32, i32, i32) {
    %c0_i32 = arith.constant 0 : i32
    %c0_i32_0 = arith.constant 0 : i32
    %c0_i32_1 = arith.constant 0 : i32
    return %arg0, %c0_i32, %c0_i32_0 : i32, i32, i32
  }
  func.func @transform_1(%arg0: i32, %arg1: i32) -> (i32, i32, i32) {
    %c0_i32 = arith.constant 0 : i32
    %c0_i32_0 = arith.constant 0 : i32
    %c0_i32_1 = arith.constant 0 : i32
    return %arg1, %c0_i32, %c0_i32_0 : i32, i32, i32
  }
  func.func @transform_2(%arg0: i32, %arg1: i32) -> (i32, i32, i32) {
    %c0_i32 = arith.constant 0 : i32
    %c0_i32_0 = arith.constant 0 : i32
    %c0_i32_1 = arith.constant 0 : i32
    return %arg1, %c0_i32, %c0_i32_0 : i32, i32, i32
  }
  func.func @transform_3(%arg0: i32, %arg1: i32) -> (i32, i32, i32) {
    %c0_i32 = arith.constant 0 : i32
    %c0_i32_0 = arith.constant 0 : i32
    %c0_i32_1 = arith.constant 0 : i32
    return %arg1, %c0_i32, %c0_i32_0 : i32, i32, i32
  }
  func.func @transform_4(%arg0: i32, %arg1: i32) -> (i32, i32, i32) {
    %c0_i32 = arith.constant 0 : i32
    %c0_i32_0 = arith.constant 0 : i32
    %c0_i32_1 = arith.constant 0 : i32
    return %arg1, %c0_i32, %c0_i32_0 : i32, i32, i32
  }
  func.func @transform_5(%arg0: i32, %arg1: i32) -> (i32, i32, i32) {
    %c0_i32 = arith.constant 0 : i32
    %c0_i32_0 = arith.constant 0 : i32
    %c0_i32_1 = arith.constant 0 : i32
    return %arg1, %c0_i32, %c0_i32_0 : i32, i32, i32
  }
  func.func @transform_6(%arg0: i32, %arg1: i32) -> (i32, i32, i32) {
    %c0_i32 = arith.constant 0 : i32
    %c0_i32_0 = arith.constant 0 : i32
    %c0_i32_1 = arith.constant 0 : i32
    return %arg1, %c0_i32, %c0_i32_0 : i32, i32, i32
  }
  func.func @transform_7(%arg0: i32, %arg1: i32) -> (i32, i32, i32) {
    %c0_i32 = arith.constant 0 : i32
    %c0_i32_0 = arith.constant 0 : i32
    %c0_i32_1 = arith.constant 0 : i32
    return %arg1, %c0_i32, %c0_i32_0 : i32, i32, i32
  }
  func.func @transform_8(%arg0: i32, %arg1: i32) -> (i32, i32, i32) {
    %c0_i32 = arith.constant 0 : i32
    %c0_i32_0 = arith.constant 0 : i32
    %c0_i32_1 = arith.constant 0 : i32
    return %arg1, %c0_i32, %c0_i32_0 : i32, i32, i32
  }
  func.func @transform_9(%arg0: i32, %arg1: i32) -> (i32, i32, i32) {
    %c0_i32 = arith.constant 0 : i32
    %c0_i32_0 = arith.constant 0 : i32
    %c0_i32_1 = arith.constant 0 : i32
    return %arg1, %c0_i32, %c0_i32_0 : i32, i32, i32
  }
  func.func @transform_10(%arg0: i32, %arg1: i32) -> (i32, i32, i32) {
    %c0_i32 = arith.constant 0 : i32
    %c0_i32_0 = arith.constant 0 : i32
    %c0_i32_1 = arith.constant 0 : i32
    return %arg1, %c0_i32, %c0_i32_0 : i32, i32, i32
  }
  func.func @transform_11(%arg0: i32, %arg1: i32) -> (i32, i32, i32) {
    %c0_i32 = arith.constant 0 : i32
    %c0_i32_0 = arith.constant 0 : i32
    %c0_i32_1 = arith.constant 0 : i32
    return %arg1, %c0_i32, %c0_i32_0 : i32, i32, i32
  }
  func.func @transform_12(%arg0: i32, %arg1: i32) -> (i32, i32, i32) {
    %c0_i32 = arith.constant 0 : i32
    %c0_i32_0 = arith.constant 0 : i32
    %c0_i32_1 = arith.constant 0 : i32
    return %arg1, %c0_i32, %c0_i32_0 : i32, i32, i32
  }
  func.func @transform_13(%arg0: i32, %arg1: i32) -> (i32, i32, i32) {
    %c0_i32 = arith.constant 0 : i32
    %c0_i32_0 = arith.constant 0 : i32
    %c0_i32_1 = arith.constant 0 : i32
    return %arg1, %c0_i32, %c0_i32_0 : i32, i32, i32
  }
  func.func @transform_14(%arg0: i32, %arg1: i32) -> (i32, i32, i32) {
    %c0_i32 = arith.constant 0 : i32
    %c0_i32_0 = arith.constant 0 : i32
    %c0_i32_1 = arith.constant 0 : i32
    return %arg0, %c0_i32, %c0_i32_0 : i32, i32, i32
  }
}

</mosaic_0001>

<llo_original>
// kernel: tpu_custom_call.1
$region0: #{tpu_custom_call.1}
  #allocation0 [shape = 'u32[]', space=smem, size = 0x4, offset = 0x4, fixed_abs, tag = 'smem constant byte address 0x4 - core index']
  #allocation1 [shape = 'u32[144,128]{1,0:T(1,128)}', space=vmem, size = 0x12000, scoped, tag = 'internal scratch']
  %s0 = inlined_call_operand.hbm [shape: f32[2,8,32], index: 0, kind: input, shape index: {}]
  %s1 = inlined_call_operand.vmem [shape: f32[2,1,32], index: 1, kind: input, shape index: {}]
  %s2 = inlined_call_operand.vmem [shape: f32[2,1,32], index: 2, kind: input, shape index: {}]
  %s3 = inlined_call_operand.vmem [shape: f32[2,32,32], index: 3, kind: input, shape index: {}]
  %s4 = inlined_call_operand.vmem [shape: f32[2,32,32], index: 4, kind: input, shape index: {}]
  %s5 = inlined_call_operand.vmem [shape: f32[2,32,32], index: 5, kind: input, shape index: {}]
  %s6 = inlined_call_operand.hbm [shape: f32[2,32,32], index: 6, kind: input, shape index: {}]
  %s7 = inlined_call_operand.vmem [shape: f32[2,1,32], index: 7, kind: input, shape index: {}]
  %s8 = inlined_call_operand.vmem [shape: f32[2,1,32], index: 8, kind: input, shape index: {}]
  %s9 = inlined_call_operand.vmem [shape: f32[2,1,32], index: 9, kind: input, shape index: {}]
  %s10 = inlined_call_operand.hbm [shape: f32[2,32,64], index: 10, kind: input, shape index: {}]
  %s11 = inlined_call_operand.vmem [shape: f32[2,1,64], index: 11, kind: input, shape index: {}]
  %s12 = inlined_call_operand.vmem [shape: f32[2,64,32], index: 12, kind: input, shape index: {}]
  %s13 = inlined_call_operand.vmem [shape: f32[2,1,32], index: 13, kind: input, shape index: {}]
  %s14 = inlined_call_operand.hbm [shape: f32[2,8,32], index: 14, kind: output, shape index: {}]
  %s15 = sld [smem:[#allocation0]]
  $region105: #{tpu_custom_call.1} parent=0
    _
  %s17 = ssub.s32 1, %s15
  %s18 = scalar_select 0, %s17, %s15
  $region1: #{tpu_custom_call.1} parent=0
    #allocation2 [shape = 'u8[8192]{0}', space=vmem, size = 0x2000, scoped, tag = 'input window, operand 0']
    #allocation3 [shape = 's32[2]{0}', space=sflag, size = 0x8, scoped, tag = 'scoped memory for tpu_custom_call.1']
    #allocation4 [shape = 's32[2]{0}', space=sflag, size = 0x8, scoped, tag = 'scoped memory for tpu_custom_call.1']
    #allocation5 [shape = 'u8[32768]{0}', space=vmem, size = 0x8000, scoped, tag = 'input window, operand 6']
    #allocation6 [shape = 's32[2]{0}', space=sflag, size = 0x8, scoped, tag = 'scoped memory for tpu_custom_call.1']
    #allocation7 [shape = 'u8[32768]{0}', space=vmem, size = 0x8000, scoped, tag = 'input window, operand 10']
    #allocation8 [shape = 'u8[8192]{0}', space=vmem, size = 0x2000, scoped, tag = 'output window, operand 0']
    %19 = vsyncpa [#allocation3], 0
    %s20 = scalar_lea.sflag [#allocation3], 1
    %21 = vsyncpa %s20, 0
    %22 = vsyncpa [#allocation6], 0
    %s23 = scalar_lea.sflag [#allocation6], 1
    %24 = vsyncpa %s23, 0
    %25 = vsyncpa [#allocation4], 0
    %s26 = scalar_lea.sflag [#allocation4], 1
    %27 = vsyncpa %s26, 0
    loop: start=0, step=1, limit=6
    $region2: #{tpu_custom_call.1} parent=1 // loop_pre_header
      _
    $region3: #{tpu_custom_call.1} parent=1 // loop_header
      %s29 = sphi 0, %s33
      %p30 = scmp.ge.s32.totalorder %s29, 6
      %s36 = sphi 0, %s48
      %s37 = sphi 0, %s44
      %s38 = sphi 0, %s36
      %s39 = sphi 0, %s37
      %s40 = sphi 0, %s38
      %s41 = sphi 0, %s39
      %s51 = sphi 0, %s53
      %s54 = sphi 0, %s51
      %s55 = sphi 0, %s54
      %s71 = sphi 0, %s55
      %s77 = sphi 0, %s79
      %s80 = sphi 0, %s77
      %s81 = sphi 0, %s80
      %s97 = sphi 0, %s81
      %s103 = sphi 0, %s105
      %s106 = sphi 0, %s103
      %s107 = sphi 0, %s106
      %s123 = sphi 0, %s107
      %s129 = sphi 0, %s131
      %s132 = sphi 0, %s129
      %s133 = sphi 0, %s132
      %s149 = sphi 0, %s133
      %s155 = sphi 0, %s157
      %s158 = sphi 0, %s155
      %s159 = sphi 0, %s158
      %s175 = sphi 0, %s159
      %s181 = sphi 0, %s183
      %s184 = sphi 0, %s181
      %s185 = sphi 0, %s184
      %s201 = sphi 0, %s185
      %s207 = sphi 0, %s209
      %s210 = sphi 0, %s207
      %s211 = sphi 0, %s210
      %s227 = sphi 0, %s211
      %s233 = sphi 0, %s235
      %s236 = sphi 0, %s233
      %s237 = sphi 0, %s236
      %s253 = sphi 0, %s237
      %s259 = sphi 0, %s261
      %s262 = sphi 0, %s259
      %s263 = sphi 0, %s262
      %s279 = sphi 0, %s263
      %s285 = sphi 0, %s287
      %s288 = sphi 0, %s285
      %s289 = sphi 0, %s288
      %s305 = sphi 0, %s289
      %s311 = sphi 0, %s313
      %s314 = sphi 0, %s311
      %s315 = sphi 0, %s314
      %s331 = sphi 0, %s315
      %s337 = sphi 0, %s339
      %s340 = sphi 0, %s337
      %s341 = sphi 0, %s340
      %s357 = sphi 0, %s341
      %s363 = sphi 0, %s365
      %s366 = sphi 0, %s363
      %s367 = sphi 0, %s366
      %s383 = sphi 0, %s367
      %s389 = sphi 0, %s391
      %s392 = sphi 0, %s389
      %s393 = sphi 0, %s392
      %s409 = sphi 0, %s393
      %s415 = sphi 0, %s417
      %s418 = sphi 0, %s415
      %s419 = sphi 0, %s418
      %s435 = sphi 0, %s419
    $region4: #{tpu_custom_call.1} parent=1 // loop_header_branch
      %32 = sbr.rel (%p30) target = $region8
    $region5: #{tpu_custom_call.1} parent=1 // loop_body
      %s34 = ssub.s32 %s29, 1
      %s35 = ssub.s32 %s29, 2
      %s42 = sadd.s32 1, %s37
      %p43 = scmp.ge.s32.totalorder %s42, 2
      %s44 = scalar_select %p43, 0, %s42
      %s45 = sadd.s32 1, %s36
      %s46 = scalar_select %p43, %s45, %s36
      %p47 = scmp.ge.s32.totalorder %s46, 2
      %s48 = scalar_select %p47, 0, %s46
      %s49 = ssub.s32 %s36, %s48
      %p50 = scmp.eq.s32.totalorder %s49, 0
      %s52 = sadd.s32 %s51, 1
      %s53 = scalar_select %p50, %s51, %s52
      %p56 = pneg %p50
      %p57 = scmp.eq.s32.totalorder %s29, 3
      %p58 = por %p56, %p57
      %p59 = scmp.ne.s32.totalorder %s51, %s54
      %p60 = scmp.eq.s32.totalorder %s29, 0
      %p61 = por %p59, %p60
      %p62 = scmp.ne.s32.totalorder %s51, %s54
      %p63 = scmp.eq.s32.totalorder %s34, 3
      %p64 = por %p62, %p63
      %p65 = scmp.ne.s32.totalorder %s54, %s55
      %p66 = scmp.eq.s32.totalorder %s34, 0
      %p67 = por %p65, %p66
      %p68 = scmp.ne.s32.totalorder %s54, %s55
      %p69 = scmp.eq.s32.totalorder %s35, 3
      %p70 = por %p68, %p69
      %p72 = scmp.ne.s32.totalorder %s55, %s71
      %p73 = scmp.eq.s32.totalorder %s35, 0
      %p74 = por %p72, %p73
      %s75 = ssub.s32 %s37, %s44
      %p76 = scmp.eq.s32.totalorder %s75, 0
      %s78 = sadd.s32 %s77, 1
      %s79 = scalar_select %p76, %s77, %s78
      %p82 = pneg %p76
      %p83 = scmp.eq.s32.totalorder %s29, 3
      %p84 = por %p82, %p83
      %p85 = scmp.ne.s32.totalorder %s77, %s80
      %p86 = scmp.eq.s32.totalorder %s29, 0
      %p87 = por %p85, %p86
      %p88 = scmp.ne.s32.totalorder %s77, %s80
      %p89 = scmp.eq.s32.totalorder %s34, 3
      %p90 = por %p88, %p89
      %p91 = scmp.ne.s32.totalorder %s80, %s81
      %p92 = scmp.eq.s32.totalorder %s34, 0
      %p93 = por %p91, %p92
      %p94 = scmp.ne.s32.totalorder %s80, %s81
      %p95 = scmp.eq.s32.totalorder %s35, 3
      %p96 = por %p94, %p95
      %p98 = scmp.ne.s32.totalorder %s81, %s97
      %p99 = scmp.eq.s32.totalorder %s35, 0
      %p100 = por %p98, %p99
      %s101 = ssub.s32 %s37, %s44
      %p102 = scmp.eq.s32.totalorder %s101, 0
      %s104 = sadd.s32 %s103, 1
      %s105 = scalar_select %p102, %s103, %s104
      %p108 = pneg %p102
      %p109 = scmp.eq.s32.totalorder %s29, 3
      %p110 = por %p108, %p109
      %p111 = scmp.ne.s32.totalorder %s103, %s106
      %p112 = scmp.eq.s32.totalorder %s29, 0
      %p113 = por %p111, %p112
      %p114 = scmp.ne.s32.totalorder %s103, %s106
      %p115 = scmp.eq.s32.totalorder %s34, 3
      %p116 = por %p114, %p115
      %p117 = scmp.ne.s32.totalorder %s106, %s107
      %p118 = scmp.eq.s32.totalorder %s34, 0
      %p119 = por %p117, %p118
      %p120 = scmp.ne.s32.totalorder %s106, %s107
      %p121 = scmp.eq.s32.totalorder %s35, 3
      %p122 = por %p120, %p121
      %p124 = scmp.ne.s32.totalorder %s107, %s123
      %p125 = scmp.eq.s32.totalorder %s35, 0
      %p126 = por %p124, %p125
      %s127 = ssub.s32 %s37, %s44
      %p128 = scmp.eq.s32.totalorder %s127, 0
      %s130 = sadd.s32 %s129, 1
      %s131 = scalar_select %p128, %s129, %s130
      %p134 = pneg %p128
      %p135 = scmp.eq.s32.totalorder %s29, 3
      %p136 = por %p134, %p135
      %p137 = scmp.ne.s32.totalorder %s129, %s132
      %p138 = scmp.eq.s32.totalorder %s29, 0
      %p139 = por %p137, %p138
      %p140 = scmp.ne.s32.totalorder %s129, %s132
      %p141 = scmp.eq.s32.totalorder %s34, 3
      %p142 = por %p140, %p141
      %p143 = scmp.ne.s32.totalorder %s132, %s133
      %p144 = scmp.eq.s32.totalorder %s34, 0
      %p145 = por %p143, %p144
      %p146 = scmp.ne.s32.totalorder %s132, %s133
      %p147 = scmp.eq.s32.totalorder %s35, 3
      %p148 = por %p146, %p147
      %p150 = scmp.ne.s32.totalorder %s133, %s149
      %p151 = scmp.eq.s32.totalorder %s35, 0
      %p152 = por %p150, %p151
      %s153 = ssub.s32 %s37, %s44
      %p154 = scmp.eq.s32.totalorder %s153, 0
      %s156 = sadd.s32 %s155, 1
      %s157 = scalar_select %p154, %s155, %s156
      %p160 = pneg %p154
      %p161 = scmp.eq.s32.totalorder %s29, 3
      %p162 = por %p160, %p161
      %p163 = scmp.ne.s32.totalorder %s155, %s158
      %p164 = scmp.eq.s32.totalorder %s29, 0
      %p165 = por %p163, %p164
      %p166 = scmp.ne.s32.totalorder %s155, %s158
      %p167 = scmp.eq.s32.totalorder %s34, 3
      %p168 = por %p166, %p167
      %p169 = scmp.ne.s32.totalorder %s158, %s159
      %p170 = scmp.eq.s32.totalorder %s34, 0
      %p171 = por %p169, %p170
      %p172 = scmp.ne.s32.totalorder %s158, %s159
      %p173 = scmp.eq.s32.totalorder %s35, 3
      %p174 = por %p172, %p173
      %p176 = scmp.ne.s32.totalorder %s159, %s175
      %p177 = scmp.eq.s32.totalorder %s35, 0
      %p178 = por %p176, %p177
      %s179 = ssub.s32 %s37, %s44
      %p180 = scmp.eq.s32.totalorder %s179, 0
      %s182 = sadd.s32 %s181, 1
      %s183 = scalar_select %p180, %s181, %s182
      %p186 = pneg %p180
      %p187 = scmp.eq.s32.totalorder %s29, 3
      %p188 = por %p186, %p187
      %p189 = scmp.ne.s32.totalorder %s181, %s184
      %p190 = scmp.eq.s32.totalorder %s29, 0
      %p191 = por %p189, %p190
      %p192 = scmp.ne.s32.totalorder %s181, %s184
      %p193 = scmp.eq.s32.totalorder %s34, 3
      %p194 = por %p192, %p193
      %p195 = scmp.ne.s32.totalorder %s184, %s185
      %p196 = scmp.eq.s32.totalorder %s34, 0
      %p197 = por %p195, %p196
      %p198 = scmp.ne.s32.totalorder %s184, %s185
      %p199 = scmp.eq.s32.totalorder %s35, 3
      %p200 = por %p198, %p199
      %p202 = scmp.ne.s32.totalorder %s185, %s201
      %p203 = scmp.eq.s32.totalorder %s35, 0
      %p204 = por %p202, %p203
      %s205 = ssub.s32 %s37, %s44
      %p206 = scmp.eq.s32.totalorder %s205, 0
      %s208 = sadd.s32 %s207, 1
      %s209 = scalar_select %p206, %s207, %s208
      %p212 = pneg %p206
      %p213 = scmp.eq.s32.totalorder %s29, 3
      %p214 = por %p212, %p213
      %p215 = scmp.ne.s32.totalorder %s207, %s210
      %p216 = scmp.eq.s32.totalorder %s29, 0
      %p217 = por %p215, %p216
      %p218 = scmp.ne.s32.totalorder %s207, %s210
      %p219 = scmp.eq.s32.totalorder %s34, 3
      %p220 = por %p218, %p219
      %p221 = scmp.ne.s32.totalorder %s210, %s211
      %p222 = scmp.eq.s32.totalorder %s34, 0
      %p223 = por %p221, %p222
      %p224 = scmp.ne.s32.totalorder %s210, %s211
      %p225 = scmp.eq.s32.totalorder %s35, 3
      %p226 = por %p224, %p225
      %p228 = scmp.ne.s32.totalorder %s211, %s227
      %p229 = scmp.eq.s32.totalorder %s35, 0
      %p230 = por %p228, %p229
      %s231 = ssub.s32 %s37, %s44
      %p232 = scmp.eq.s32.totalorder %s231, 0
      %s234 = sadd.s32 %s233, 1
      %s235 = scalar_select %p232, %s233, %s234
      %p238 = pneg %p232
      %p239 = scmp.eq.s32.totalorder %s29, 3
      %p240 = por %p238, %p239
      %p241 = scmp.ne.s32.totalorder %s233, %s236
      %p242 = scmp.eq.s32.totalorder %s29, 0
      %p243 = por %p241, %p242
      %p244 = scmp.ne.s32.totalorder %s233, %s236
      %p245 = scmp.eq.s32.totalorder %s34, 3
      %p246 = por %p244, %p245
      %p247 = scmp.ne.s32.totalorder %s236, %s237
      %p248 = scmp.eq.s32.totalorder %s34, 0
      %p249 = por %p247, %p248
      %p250 = scmp.ne.s32.totalorder %s236, %s237
      %p251 = scmp.eq.s32.totalorder %s35, 3
      %p252 = por %p250, %p251
      %p254 = scmp.ne.s32.totalorder %s237, %s253
      %p255 = scmp.eq.s32.totalorder %s35, 0
      %p256 = por %p254, %p255
      %s257 = ssub.s32 %s37, %s44
      %p258 = scmp.eq.s32.totalorder %s257, 0
      %s260 = sadd.s32 %s259, 1
      %s261 = scalar_select %p258, %s259, %s260
      %p264 = pneg %p258
      %p265 = scmp.eq.s32.totalorder %s29, 3
      %p266 = por %p264, %p265
      %p267 = scmp.ne.s32.totalorder %s259, %s262
      %p268 = scmp.eq.s32.totalorder %s29, 0
      %p269 = por %p267, %p268
      %p270 = scmp.ne.s32.totalorder %s259, %s262
      %p271 = scmp.eq.s32.totalorder %s34, 3
      %p272 = por %p270, %p271
      %p273 = scmp.ne.s32.totalorder %s262, %s263
      %p274 = scmp.eq.s32.totalorder %s34, 0
      %p275 = por %p273, %p274
      %p276 = scmp.ne.s32.totalorder %s262, %s263
      %p277 = scmp.eq.s32.totalorder %s35, 3
      %p278 = por %p276, %p277
      %p280 = scmp.ne.s32.totalorder %s263, %s279
      %p281 = scmp.eq.s32.totalorder %s35, 0
      %p282 = por %p280, %p281
      %s283 = ssub.s32 %s37, %s44
      %p284 = scmp.eq.s32.totalorder %s283, 0
      %s286 = sadd.s32 %s285, 1
      %s287 = scalar_select %p284, %s285, %s286
      %p290 = pneg %p284
      %p291 = scmp.eq.s32.totalorder %s29, 3
      %p292 = por %p290, %p291
      %p293 = scmp.ne.s32.totalorder %s285, %s288
      %p294 = scmp.eq.s32.totalorder %s29, 0
      %p295 = por %p293, %p294
      %p296 = scmp.ne.s32.totalorder %s285, %s288
      %p297 = scmp.eq.s32.totalorder %s34, 3
      %p298 = por %p296, %p297
      %p299 = scmp.ne.s32.totalorder %s288, %s289
      %p300 = scmp.eq.s32.totalorder %s34, 0
      %p301 = por %p299, %p300
      %p302 = scmp.ne.s32.totalorder %s288, %s289
      %p303 = scmp.eq.s32.totalorder %s35, 3
      %p304 = por %p302, %p303
      %p306 = scmp.ne.s32.totalorder %s289, %s305
      %p307 = scmp.eq.s32.totalorder %s35, 0
      %p308 = por %p306, %p307
      %s309 = ssub.s32 %s37, %s44
      %p310 = scmp.eq.s32.totalorder %s309, 0
      %s312 = sadd.s32 %s311, 1
      %s313 = scalar_select %p310, %s311, %s312
      %p316 = pneg %p310
      %p317 = scmp.eq.s32.totalorder %s29, 3
      %p318 = por %p316, %p317
      %p319 = scmp.ne.s32.totalorder %s311, %s314
      %p320 = scmp.eq.s32.totalorder %s29, 0
      %p321 = por %p319, %p320
      %p322 = scmp.ne.s32.totalorder %s311, %s314
      %p323 = scmp.eq.s32.totalorder %s34, 3
      %p324 = por %p322, %p323
      %p325 = scmp.ne.s32.totalorder %s314, %s315
      %p326 = scmp.eq.s32.totalorder %s34, 0
      %p327 = por %p325, %p326
      %p328 = scmp.ne.s32.totalorder %s314, %s315
      %p329 = scmp.eq.s32.totalorder %s35, 3
      %p330 = por %p328, %p329
      %p332 = scmp.ne.s32.totalorder %s315, %s331
      %p333 = scmp.eq.s32.totalorder %s35, 0
      %p334 = por %p332, %p333
      %s335 = ssub.s32 %s37, %s44
      %p336 = scmp.eq.s32.totalorder %s335, 0
      %s338 = sadd.s32 %s337, 1
      %s339 = scalar_select %p336, %s337, %s338
      %p342 = pneg %p336
      %p343 = scmp.eq.s32.totalorder %s29, 3
      %p344 = por %p342, %p343
      %p345 = scmp.ne.s32.totalorder %s337, %s340
      %p346 = scmp.eq.s32.totalorder %s29, 0
      %p347 = por %p345, %p346
      %p348 = scmp.ne.s32.totalorder %s337, %s340
      %p349 = scmp.eq.s32.totalorder %s34, 3
      %p350 = por %p348, %p349
      %p351 = scmp.ne.s32.totalorder %s340, %s341
      %p352 = scmp.eq.s32.totalorder %s34, 0
      %p353 = por %p351, %p352
      %p354 = scmp.ne.s32.totalorder %s340, %s341
      %p355 = scmp.eq.s32.totalorder %s35, 3
      %p356 = por %p354, %p355
      %p358 = scmp.ne.s32.totalorder %s341, %s357
      %p359 = scmp.eq.s32.totalorder %s35, 0
      %p360 = por %p358, %p359
      %s361 = ssub.s32 %s37, %s44
      %p362 = scmp.eq.s32.totalorder %s361, 0
      %s364 = sadd.s32 %s363, 1
      %s365 = scalar_select %p362, %s363, %s364
      %p368 = pneg %p362
      %p369 = scmp.eq.s32.totalorder %s29, 3
      %p370 = por %p368, %p369
      %p371 = scmp.ne.s32.totalorder %s363, %s366
      %p372 = scmp.eq.s32.totalorder %s29, 0
      %p373 = por %p371, %p372
      %p374 = scmp.ne.s32.totalorder %s363, %s366
      %p375 = scmp.eq.s32.totalorder %s34, 3
      %p376 = por %p374, %p375
      %p377 = scmp.ne.s32.totalorder %s366, %s367
      %p378 = scmp.eq.s32.totalorder %s34, 0
      %p379 = por %p377, %p378
      %p380 = scmp.ne.s32.totalorder %s366, %s367
      %p381 = scmp.eq.s32.totalorder %s35, 3
      %p382 = por %p380, %p381
      %p384 = scmp.ne.s32.totalorder %s367, %s383
      %p385 = scmp.eq.s32.totalorder %s35, 0
      %p386 = por %p384, %p385
      %s387 = ssub.s32 %s37, %s44
      %p388 = scmp.eq.s32.totalorder %s387, 0
      %s390 = sadd.s32 %s389, 1
      %s391 = scalar_select %p388, %s389, %s390
      %p394 = pneg %p388
      %p395 = scmp.eq.s32.totalorder %s29, 3
      %p396 = por %p394, %p395
      %p397 = scmp.ne.s32.totalorder %s389, %s392
      %p398 = scmp.eq.s32.totalorder %s29, 0
      %p399 = por %p397, %p398
      %p400 = scmp.ne.s32.totalorder %s389, %s392
      %p401 = scmp.eq.s32.totalorder %s34, 3
      %p402 = por %p400, %p401
      %p403 = scmp.ne.s32.totalorder %s392, %s393
      %p404 = scmp.eq.s32.totalorder %s34, 0
      %p405 = por %p403, %p404
      %p406 = scmp.ne.s32.totalorder %s392, %s393
      %p407 = scmp.eq.s32.totalorder %s35, 3
      %p408 = por %p406, %p407
      %p410 = scmp.ne.s32.totalorder %s393, %s409
      %p411 = scmp.eq.s32.totalorder %s35, 0
      %p412 = por %p410, %p411
      %s413 = ssub.s32 %s36, %s48
      %p414 = scmp.eq.s32.totalorder %s413, 0
      %s416 = sadd.s32 %s415, 1
      %s417 = scalar_select %p414, %s415, %s416
      %p420 = pneg %p414
      %p421 = scmp.eq.s32.totalorder %s29, 3
      %p422 = por %p420, %p421
      %p423 = scmp.ne.s32.totalorder %s415, %s418
      %p424 = scmp.eq.s32.totalorder %s29, 0
      %p425 = por %p423, %p424
      %p426 = scmp.ne.s32.totalorder %s415, %s418
      %p427 = scmp.eq.s32.totalorder %s34, 3
      %p428 = por %p426, %p427
      %p429 = scmp.ne.s32.totalorder %s418, %s419
      %p430 = scmp.eq.s32.totalorder %s34, 0
      %p431 = por %p429, %p430
      %p432 = scmp.ne.s32.totalorder %s418, %s419
      %p433 = scmp.eq.s32.totalorder %s35, 3
      %p434 = por %p432, %p433
      %p436 = scmp.ne.s32.totalorder %s419, %s435
      %p437 = scmp.eq.s32.totalorder %s35, 0
      %p438 = por %p436, %p437
      %p439 = scmp.le.s32.totalorder 1, %s29
      %p440 = scmp.lt.s32.totalorder %s29, 5
      %p441 = pnand %p439, %p440
      %p442 = pneg %p441
      // Predicated region
      $region9: #{tpu_custom_call.1} parent=5 // pred_check
        _
      $region10: #{tpu_custom_call.1} parent=5 // pred_check_branch
        %444 = sbr.rel (%p441) target = $region12
      $region11: #{tpu_custom_call.1} parent=5 // pred_region
        %s445 = ssub.s32 %s29, 1
      $region12: #{tpu_custom_call.1} parent=5 // pred_fallthru
        _
      %p446 = scmp.lt.s32.totalorder %s29, 4
      // Predicated region
      $region13: #{tpu_custom_call.1} parent=5 // pred_check
        %p447 = pneg %p446
      $region14: #{tpu_custom_call.1} parent=5 // pred_check_branch
        %449 = sbr.rel (%p447) target = $region16
      $region15: #{tpu_custom_call.1} parent=5 // pred_region
        // Predicated region
        $region17: #{tpu_custom_call.1} parent=15 // pred_check
          %p450 = pneg %p61
        $region18: #{tpu_custom_call.1} parent=15 // pred_check_branch
          %452 = sbr.rel (%p450) target = $region20
        $region19: #{tpu_custom_call.1} parent=15 // pred_region
          %s453 = sand.u32 %s51, 1
          %s454 = scalar_lea.sflag [#allocation3], %s453
          %s455 = sand.u32 %s51, 1
          %s456 = smul.addr %s455, 8
          %s457 = scalar_lea.vmem [#allocation2], %s456
          %s459 = ssub.s32 128, 128
          %460 = vsyncadd %s454, %s459
          %s461 = smul.addr %s36, 128
          %s462 = scalar_lea.hbm %s0, %s461
          %s464 = sshll.u32 %s457, 4
          %s465 = int_to_ptr.vmem [resolvable:$true] %s464
          %467 = dma.hbm_to_vmem [thread:$0]  %s462, 128, %s465, %s454
        $region20: #{tpu_custom_call.1} parent=15 // pred_fallthru
          _
        // Predicated region
        $region21: #{tpu_custom_call.1} parent=15 // pred_check
          %p468 = pneg %p87
        $region22: #{tpu_custom_call.1} parent=15 // pred_check_branch
          %470 = sbr.rel (%p468) target = $region24
        $region23: #{tpu_custom_call.1} parent=15 // pred_region
          %p471 = scmp.lt.s32.totalorder %s37, 1
          %s472 = scalar_select %p471, %s37, 1
          %s473 = scalar_lea.vmem %s1, %s472
        $region24: #{tpu_custom_call.1} parent=15 // pred_fallthru
          _
        // Predicated region
        $region25: #{tpu_custom_call.1} parent=15 // pred_check
          %p474 = pneg %p113
        $region26: #{tpu_custom_call.1} parent=15 // pred_check_branch
          %476 = sbr.rel (%p474) target = $region28
        $region27: #{tpu_custom_call.1} parent=15 // pred_region
          %p477 = scmp.lt.s32.totalorder %s37, 1
          %s478 = scalar_select %p477, %s37, 1
          %s479 = scalar_lea.vmem %s2, %s478
        $region28: #{tpu_custom_call.1} parent=15 // pred_fallthru
          _
        // Predicated region
        $region29: #{tpu_custom_call.1} parent=15 // pred_check
          %p480 = pneg %p139
        $region30: #{tpu_custom_call.1} parent=15 // pred_check_branch
          %482 = sbr.rel (%p480) target = $region32
        $region31: #{tpu_custom_call.1} parent=15 // pred_region
          %p483 = scmp.lt.s32.totalorder %s37, 1
          %s484 = scalar_select %p483, %s37, 1
          %s485 = smul.addr %s484, 4
          %s486 = smul.addr %s485, 8
          %s487 = scalar_lea.vmem %s3, %s486
        $region32: #{tpu_custom_call.1} parent=15 // pred_fallthru
          _
        // Predicated region
        $region33: #{tpu_custom_call.1} parent=15 // pred_check
          %p488 = pneg %p165
        $region34: #{tpu_custom_call.1} parent=15 // pred_check_branch
          %490 = sbr.rel (%p488) target = $region36
        $region35: #{tpu_custom_call.1} parent=15 // pred_region
          %p491 = scmp.lt.s32.totalorder %s37, 1
          %s492 = scalar_select %p491, %s37, 1
          %s493 = smul.addr %s492, 4
          %s494 = smul.addr %s493, 8
          %s495 = scalar_lea.vmem %s4, %s494
        $region36: #{tpu_custom_call.1} parent=15 // pred_fallthru
          _
        // Predicated region
        $region37: #{tpu_custom_call.1} parent=15 // pred_check
          %p496 = pneg %p191
        $region38: #{tpu_custom_call.1} parent=15 // pred_check_branch
          %498 = sbr.rel (%p496) target = $region40
        $region39: #{tpu_custom_call.1} parent=15 // pred_region
          %p499 = scmp.lt.s32.totalorder %s37, 1
          %s500 = scalar_select %p499, %s37, 1
          %s501 = smul.addr %s500, 4
          %s502 = smul.addr %s501, 8
          %s503 = scalar_lea.vmem %s5, %s502
        $region40: #{tpu_custom_call.1} parent=15 // pred_fallthru
          _
        // Predicated region
        $region41: #{tpu_custom_call.1} parent=15 // pred_check
          %p504 = pneg %p217
        $region42: #{tpu_custom_call.1} parent=15 // pred_check_branch
          %506 = sbr.rel (%p504) target = $region44
        $region43: #{tpu_custom_call.1} parent=15 // pred_region
          %s507 = sand.u32 %s29, 1
          %s508 = scalar_lea.sflag [#allocation6], %s507
          %s509 = sand.u32 %s207, 1
          %s510 = smul.addr %s509, 32
          %s511 = scalar_lea.vmem [#allocation5], %s510
          %s513 = ssub.s32 512, 512
          %514 = vsyncadd %s508, %s513
          %s515 = smul.addr %s37, 4
          %s516 = smul.addr %s515, 128
          %s517 = scalar_lea.hbm %s6, %s516
          %s518 = sshll.u32 %s511, 4
          %s519 = int_to_ptr.vmem [resolvable:$true] %s518
          %524 = dma.hbm_to_vmem [thread:$0]  %s517, 512, %s519, %s508, 128, 128, 8
        $region44: #{tpu_custom_call.1} parent=15 // pred_fallthru
          _
        // Predicated region
        $region45: #{tpu_custom_call.1} parent=15 // pred_check
          %p525 = pneg %p243
        $region46: #{tpu_custom_call.1} parent=15 // pred_check_branch
          %527 = sbr.rel (%p525) target = $region48
        $region47: #{tpu_custom_call.1} parent=15 // pred_region
          %p528 = scmp.lt.s32.totalorder %s37, 1
          %s529 = scalar_select %p528, %s37, 1
          %s530 = scalar_lea.vmem %s7, %s529
        $region48: #{tpu_custom_call.1} parent=15 // pred_fallthru
          _
        // Predicated region
        $region49: #{tpu_custom_call.1} parent=15 // pred_check
          %p531 = pneg %p269
        $region50: #{tpu_custom_call.1} parent=15 // pred_check_branch
          %533 = sbr.rel (%p531) target = $region52
        $region51: #{tpu_custom_call.1} parent=15 // pred_region
          %p534 = scmp.lt.s32.totalorder %s37, 1
          %s535 = scalar_select %p534, %s37, 1
          %s536 = scalar_lea.vmem %s8, %s535
        $region52: #{tpu_custom_call.1} parent=15 // pred_fallthru
          _
        // Predicated region
        $region53: #{tpu_custom_call.1} parent=15 // pred_check
          %p537 = pneg %p295
        $region54: #{tpu_custom_call.1} parent=15 // pred_check_branch
          %539 = sbr.rel (%p537) target = $region56
        $region55: #{tpu_custom_call.1} parent=15 // pred_region
          %p540 = scmp.lt.s32.totalorder %s37, 1
          %s541 = scalar_select %p540, %s37, 1
          %s542 = scalar_lea.vmem %s9, %s541
        $region56: #{tpu_custom_call.1} parent=15 // pred_fallthru
          _
        // Predicated region
        $region57: #{tpu_custom_call.1} parent=15 // pred_check
          %p543 = pneg %p321
        $region58: #{tpu_custom_call.1} parent=15 // pred_check_branch
          %545 = sbr.rel (%p543) target = $region60
        $region59: #{tpu_custom_call.1} parent=15 // pred_region
          %s546 = sand.u32 %s29, 1
          %s547 = scalar_lea.sflag [#allocation6], %s546
          %s548 = sand.u32 %s311, 1
          %s549 = smul.addr %s548, 32
          %s550 = scalar_lea.vmem [#allocation7], %s549
          %s552 = ssub.s32 512, 512
          %553 = vsyncadd %s547, %s552
          %s554 = smul.addr %s37, 4
          %s555 = smul.addr %s554, 128
          %s556 = scalar_lea.hbm %s10, %s555
          %s557 = sshll.u32 %s550, 4
          %s558 = int_to_ptr.vmem [resolvable:$true] %s557
          %563 = dma.hbm_to_vmem [thread:$0]  %s556, 512, %s558, %s547, 128, 128, 8
        $region60: #{tpu_custom_call.1} parent=15 // pred_fallthru
          _
        // Predicated region
        $region61: #{tpu_custom_call.1} parent=15 // pred_check
          %p564 = pneg %p347
        $region62: #{tpu_custom_call.1} parent=15 // pred_check_branch
          %566 = sbr.rel (%p564) target = $region64
        $region63: #{tpu_custom_call.1} parent=15 // pred_region
          %p567 = scmp.lt.s32.totalorder %s37, 1
          %s568 = scalar_select %p567, %s37, 1
          %s569 = scalar_lea.vmem %s11, %s568
        $region64: #{tpu_custom_call.1} parent=15 // pred_fallthru
          _
        // Predicated region
        $region65: #{tpu_custom_call.1} parent=15 // pred_check
          %p570 = pneg %p373
        $region66: #{tpu_custom_call.1} parent=15 // pred_check_branch
          %572 = sbr.rel (%p570) target = $region68
        $region67: #{tpu_custom_call.1} parent=15 // pred_region
          %p573 = scmp.lt.s32.totalorder %s37, 1
          %s574 = scalar_select %p573, %s37, 1
          %s575 = smul.addr %s574, 8
          %s576 = smul.addr %s575, 8
          %s577 = scalar_lea.vmem %s12, %s576
        $region68: #{tpu_custom_call.1} parent=15 // pred_fallthru
          _
        // Predicated region
        $region69: #{tpu_custom_call.1} parent=15 // pred_check
          %p578 = pneg %p399
        $region70: #{tpu_custom_call.1} parent=15 // pred_check_branch
          %580 = sbr.rel (%p578) target = $region72
        $region71: #{tpu_custom_call.1} parent=15 // pred_region
          %p581 = scmp.lt.s32.totalorder %s37, 1
          %s582 = scalar_select %p581, %s37, 1
          %s583 = scalar_lea.vmem %s13, %s582
        $region72: #{tpu_custom_call.1} parent=15 // pred_fallthru
          _
      $region16: #{tpu_custom_call.1} parent=5 // pred_fallthru
        _
      %p584 = scmp.le.s32.totalorder 1, %s29
      %p585 = scmp.lt.s32.totalorder %s29, 5
      %p586 = pnand %p584, %p585
      %p587 = pneg %p586
      // Predicated region
      $region73: #{tpu_custom_call.1} parent=5 // pred_check
        _
      $region74: #{tpu_custom_call.1} parent=5 // pred_check_branch
        %589 = sbr.rel (%p586) target = $region76
      $region75: #{tpu_custom_call.1} parent=5 // pred_region
        %s590 = ssub.s32 %s29, 1
        %s591 = sand.u32 %s54, 1
        %s592 = scalar_lea.sflag [#allocation3], %s591
        %s593 = sand.u32 %s54, 1
        %s594 = smul.addr %s593, 8
        %s595 = scalar_lea.vmem [#allocation2], %s594
        // Predicated region
        $region77: #{tpu_custom_call.1} parent=75 // pred_check
          %p596 = pneg %p67
        $region78: #{tpu_custom_call.1} parent=75 // pred_check_branch
          %598 = sbr.rel (%p596) target = $region80
        $region79: #{tpu_custom_call.1} parent=75 // pred_region
          %599 = dma.done %s592, 128
        $region80: #{tpu_custom_call.1} parent=75 // pred_fallthru
          _
        %s600 = sand.u32 %s34, 1
        %s601 = scalar_lea.sflag [#allocation6], %s600
        %s602 = sand.u32 %s210, 1
        %s603 = smul.addr %s602, 32
        %s604 = scalar_lea.vmem [#allocation5], %s603
        // Predicated region
        $region81: #{tpu_custom_call.1} parent=75 // pred_check
          %p605 = pneg %p223
        $region82: #{tpu_custom_call.1} parent=75 // pred_check_branch
          %607 = sbr.rel (%p605) target = $region84
        $region83: #{tpu_custom_call.1} parent=75 // pred_region
          %608 = dma.done %s601, 512
        $region84: #{tpu_custom_call.1} parent=75 // pred_fallthru
          _
        %s609 = sand.u32 %s34, 1
        %s610 = scalar_lea.sflag [#allocation6], %s609
        %s611 = sand.u32 %s314, 1
        %s612 = smul.addr %s611, 32
        %s613 = scalar_lea.vmem [#allocation7], %s612
        // Predicated region
        $region85: #{tpu_custom_call.1} parent=75 // pred_check
          %p614 = pneg %p327
        $region86: #{tpu_custom_call.1} parent=75 // pred_check_branch
          %616 = sbr.rel (%p614) target = $region88
        $region87: #{tpu_custom_call.1} parent=75 // pred_region
          %617 = dma.done %s610, 512
        $region88: #{tpu_custom_call.1} parent=75 // pred_fallthru
          _
        %s618 = sand.u32 %s54, 1
        %s619 = scalar_lea.sflag [#allocation3], %s618
        %s620 = sand.u32 %s54, 1
        %s621 = smul.addr %s620, 8
        %s622 = scalar_lea.vmem [#allocation2], %s621
        %p623 = pneg %p67
        %p624 = pneg %p64
        %p625 = scmp.lt.s32.totalorder %s39, 1
        %s626 = scalar_select %p625, %s39, 1
        %s627 = scalar_lea.vmem %s1, %s626
        %p628 = pneg %p93
        %p629 = pneg %p90
        %p630 = scmp.lt.s32.totalorder %s39, 1
        %s631 = scalar_select %p630, %s39, 1
        %s632 = scalar_lea.vmem %s2, %s631
        %p633 = pneg %p119
        %p634 = pneg %p116
        %p635 = scmp.lt.s32.totalorder %s39, 1
        %s636 = scalar_select %p635, %s39, 1
        %s637 = smul.addr %s636, 4
        %s638 = smul.addr %s637, 8
        %s639 = scalar_lea.vmem %s3, %s638
        %p640 = pneg %p145
        %p641 = pneg %p142
        %p642 = scmp.lt.s32.totalorder %s39, 1
        %s643 = scalar_select %p642, %s39, 1
        %s644 = smul.addr %s643, 4
        %s645 = smul.addr %s644, 8
        %s646 = scalar_lea.vmem %s4, %s645
        %p647 = pneg %p171
        %p648 = pneg %p168
        %p649 = scmp.lt.s32.totalorder %s39, 1
        %s650 = scalar_select %p649, %s39, 1
        %s651 = smul.addr %s650, 4
        %s652 = smul.addr %s651, 8
        %s653 = scalar_lea.vmem %s5, %s652
        %p654 = pneg %p197
        %p655 = pneg %p194
        %s656 = sand.u32 %s34, 1
        %s657 = scalar_lea.sflag [#allocation6], %s656
        %s658 = sand.u32 %s210, 1
        %s659 = smul.addr %s658, 32
        %s660 = scalar_lea.vmem [#allocation5], %s659
        %p661 = pneg %p223
        %p662 = pneg %p220
        %p663 = scmp.lt.s32.totalorder %s39, 1
        %s664 = scalar_select %p663, %s39, 1
        %s665 = scalar_lea.vmem %s7, %s664
        %p666 = pneg %p249
        %p667 = pneg %p246
        %p668 = scmp.lt.s32.totalorder %s39, 1
        %s669 = scalar_select %p668, %s39, 1
        %s670 = scalar_lea.vmem %s8, %s669
        %p671 = pneg %p275
        %p672 = pneg %p272
        %p673 = scmp.lt.s32.totalorder %s39, 1
        %s674 = scalar_select %p673, %s39, 1
        %s675 = scalar_lea.vmem %s9, %s674
        %p676 = pneg %p301
        %p677 = pneg %p298
        %s678 = sand.u32 %s34, 1
        %s679 = scalar_lea.sflag [#allocation6], %s678
        %s680 = sand.u32 %s314, 1
        %s681 = smul.addr %s680, 32
        %s682 = scalar_lea.vmem [#allocation7], %s681
        %p683 = pneg %p327
        %p684 = pneg %p324
        %p685 = scmp.lt.s32.totalorder %s39, 1
        %s686 = scalar_select %p685, %s39, 1
        %s687 = scalar_lea.vmem %s11, %s686
        %p688 = pneg %p353
        %p689 = pneg %p350
        %p690 = scmp.lt.s32.totalorder %s39, 1
        %s691 = scalar_select %p690, %s39, 1
        %s692 = smul.addr %s691, 8
        %s693 = smul.addr %s692, 8
        %s694 = scalar_lea.vmem %s12, %s693
        %p695 = pneg %p379
        %p696 = pneg %p376
        %p697 = scmp.lt.s32.totalorder %s39, 1
        %s698 = scalar_select %p697, %s39, 1
        %s699 = scalar_lea.vmem %s13, %s698
        %p700 = pneg %p405
        %p701 = pneg %p402
        %p702 = pneg %p431
        %p703 = pneg %p428
        %s704 = sand.u32 %s418, 1
        %s705 = scalar_lea.sflag [#allocation4], %s704
        %s706 = sand.u32 %s418, 1
        %s707 = smul.addr %s706, 8
        %s708 = scalar_lea.vmem [#allocation8], %s707
        %p709 = scmp.lt.s32.totalorder %s39, 1
        %s710 = scalar_select %p709, %s39, 1
        %s711 = scalar_lea.vmem %s1, %s710
        %p712 = scmp.lt.s32.totalorder %s39, 1
        %s713 = scalar_select %p712, %s39, 1
        %s714 = scalar_lea.vmem %s2, %s713
        %p715 = scmp.lt.s32.totalorder %s39, 1
        %s716 = scalar_select %p715, %s39, 1
        %s717 = smul.addr %s716, 4
        %s718 = smul.addr %s717, 8
        %s719 = scalar_lea.vmem %s3, %s718
        %p720 = scmp.lt.s32.totalorder %s39, 1
        %s721 = scalar_select %p720, %s39, 1
        %s722 = smul.addr %s721, 4
        %s723 = smul.addr %s722, 8
        %s724 = scalar_lea.vmem %s4, %s723
        %p725 = scmp.lt.s32.totalorder %s39, 1
        %s726 = scalar_select %p725, %s39, 1
        %s727 = smul.addr %s726, 4
        %s728 = smul.addr %s727, 8
        %s729 = scalar_lea.vmem %s5, %s728
        %p730 = scmp.lt.s32.totalorder %s39, 1
        %s731 = scalar_select %p730, %s39, 1
        %s732 = scalar_lea.vmem %s7, %s731
        %p733 = scmp.lt.s32.totalorder %s39, 1
        %s734 = scalar_select %p733, %s39, 1
        %s735 = scalar_lea.vmem %s8, %s734
        %p736 = scmp.lt.s32.totalorder %s39, 1
        %s737 = scalar_select %p736, %s39, 1
        %s738 = scalar_lea.vmem %s9, %s737
        %p739 = scmp.lt.s32.totalorder %s39, 1
        %s740 = scalar_select %p739, %s39, 1
        %s741 = scalar_lea.vmem %s11, %s740
        %p742 = scmp.lt.s32.totalorder %s39, 1
        %s743 = scalar_select %p742, %s39, 1
        %s744 = smul.addr %s743, 8
        %s745 = smul.addr %s744, 8
        %s746 = scalar_lea.vmem %s12, %s745
        %p747 = scmp.lt.s32.totalorder %s39, 1
        %s748 = scalar_select %p747, %s39, 1
        %s749 = scalar_lea.vmem %s13, %s748
        %p750 = scmp.eq.s32.totalorder %s39, 0
        // Predicated region
        $region89: #{tpu_custom_call.1} parent=75 // pred_check
          %p751 = pneg %p750
        $region90: #{tpu_custom_call.1} parent=75 // pred_check_branch
          %753 = sbr.rel (%p751) target = $region92
        $region91: #{tpu_custom_call.1} parent=75 // pred_region
          %v754 = vld [vmem:[%s595] sm:$0xff]
          %vm755 = vcmask 261120
          %756 = vst.msk [vmem:[%s708] sm:$0xff] %vm755, %v754
        $region92: #{tpu_custom_call.1} parent=75 // pred_fallthru
          _
        %v757 = vld [vmem:[%s708] sm:$0xff]
        %v758 = vld [vmem:[%s711] sm:$0x1]
        %v759 = vld [vmem:[%s714] sm:$0x1]
        %vm760 = vcmask 261120
        %v761 = vsel %vm760, %v757, 0.0
        %762 = vadd.xlane.f32.xlu0 %v761
        %v763 = vpop.xlane.xlu0 %762
        %v764 = vrcp.pop 32.0
        %v765 = vmul.f32 %v763, %v764
        %v766 = vsub.f32 %v757, %v765
        %v767 = vmul.f32 %v766, %v766
        %v768 = vsel %vm760, %v767, 0.0
        %769 = vadd.xlane.f32.xlu0 %v768
        %v770 = vpop.xlane.xlu0 %769
        %v771 = vmul.f32 %v770, %v764
        %v772 = vadd.f32 %v771, 1e-05
        %v773 = vrsqrt.pop %v772
        %v774 = vmul.f32 %v766, %v773
        %v776 = vlaneseq
        %v777 = vshrl.u32 %v776, 7
        %v778 = vsub.s32 0, %v777
        %v779 = vrot.slane %v758, %v778
        %v781 = vmul.f32 %v774, %v779
        %v783 = vlaneseq
        %v784 = vshrl.u32 %v783, 7
        %v785 = vsub.s32 0, %v784
        %v786 = vrot.slane %v759, %v785
        %v788 = vadd.f32 %v781, %v786
        %v789 = vmin.f32 %v788, 7.999756
        %v790 = vmax.f32 %v789, -7.999756
        %v791 = vmul.f32 %v790, 4096.0
        %v792 = vcvt.f32.s32.to.zero.pseudo %v791
        %v793 = vcvt.s32.f32 %v792
        %v794 = vmul.f32 %v793, 0.00024414063
        %v795 = vld [vmem:[%s719] sm:$0xff]
        %v796 = vld [vmem:[%s719 + $0x8] sm:$0xff]
        %v797 = vld [vmem:[%s719 + $0x10] sm:$0xff]
        %v798 = vld [vmem:[%s719 + $0x18] sm:$0xff]
        %v800 = vsel %vm760, %v794, 0
        %802 = vmatprep.subr.mxu0 0.0
        %803 = vmatpush1.msra.mxu0 %v795
        %804 = vmatprep.subr.mxu0 0.0
        %805 = vmatpush1.msra.mxu0 %v796
        %806 = vmatprep.subr.mxu0 0.0
        %807 = vmatpush1.msra.mxu0 %v797
        %808 = vmatprep.subr.mxu0 0.0
        %809 = vmatpush1.msra.mxu0 %v798
        %810 = vmatprep.subr.mxu0 0.0
        %811 = vmatpush1.msra.mxu0 0.0
        %812 = vmatprep.subr.mxu0 0.0
        %813 = vmatpush1.msra.mxu0 0.0
        %814 = vmatprep.subr.mxu0 0.0
        %815 = vmatpush1.msra.mxu0 0.0
        %816 = vmatprep.subr.mxu0 0.0
        %817 = vmatpush1.msra.mxu0 0.0
        %818 = vmatprep.subr.mxu0 0.0
        %819 = vmatpush1.msra.mxu0 0.0
        %820 = vmatprep.subr.mxu0 0.0
        %821 = vmatpush1.msra.mxu0 0.0
        %822 = vmatprep.subr.mxu0 0.0
        %823 = vmatpush1.msra.mxu0 0.0
        %824 = vmatprep.subr.mxu0 0.0
        %825 = vmatpush1.msra.mxu0 0.0
        %826 = vmatprep.subr.mxu0 0.0
        %827 = vmatpush1.msra.mxu0 0.0
        %828 = vmatprep.subr.mxu0 0.0
        %829 = vmatpush1.msra.mxu0 0.0
        %830 = vmatprep.subr.mxu0 0.0
        %831 = vmatpush1.msra.mxu0 0.0
        %832 = vmatprep.subr.mxu0 0.0
        %833 = vmatpush1.msra.mxu0 0.0
        %834 = vmatprep.subr.mxu0 0.0
        %835 = vmatpush1.msra.mxu0 0.0
        %836 = vmatprep.subr.mxu0 0.0
        %837 = vmatpush1.msra.mxu0 0.0
        %838 = vmatprep.subr.mxu0 0.0
        %839 = vmatpush1.msra.mxu0 0.0
        %840 = vmatprep.subr.mxu0 0.0
        %841 = vmatpush1.msra.mxu0 0.0
        %842 = vmatprep.subr.mxu0 0.0
        %843 = vmatpush1.msra.mxu0 0.0
        %844 = vmatprep.subr.mxu0 0.0
        %845 = vmatpush1.msra.mxu0 0.0
        %846 = vmatprep.subr.mxu0 0.0
        %847 = vmatpush1.msra.mxu0 0.0
        %848 = vmatprep.subr.mxu0 0.0
        %849 = vmatpush1.msra.mxu0 0.0
        %850 = vmatprep.subr.mxu0 0.0
        %851 = vmatpush1.msra.mxu0 0.0
        %852 = vmatprep.subr.mxu0 0.0
        %853 = vmatpush1.msra.mxu0 0.0
        %854 = vmatprep.subr.mxu0 0.0
        %855 = vmatpush1.msra.mxu0 0.0
        %856 = vmatprep.subr.mxu0 0.0
        %857 = vmatpush1.msra.mxu0 0.0
        %858 = vmatprep.subr.mxu0 0.0
        %859 = vmatpush1.msra.mxu0 0.0
        %860 = vmatprep.subr.mxu0 0.0
        %861 = vmatpush1.msra.mxu0 0.0
        %862 = vmatprep.subr.mxu0 0.0
        %863 = vmatpush1.msra.mxu0 0.0
        %864 = vmatprep.subr.mxu0 0.0
        %865 = vmatpush1.msra.mxu0 0.0
        %866 = vmatprep.mubr.f32.mxu0 0.0
        %867 = vmatmul.mubr.f32.gmra.mrb[0].mxu0 %v800
        %v868 = vpop.f32.mrb[0].mxu0
        %v869 = vadd.f32 0.0, %v868
        %v870 = vpop.f32.mrb[0].mxu0
        %871 = vdwg.mxu0
        %v872 = vmin.f32 %v869, 7.999756
        %v873 = vmax.f32 %v872, -7.999756
        %v874 = vmul.f32 %v873, 4096.0
        %v875 = vcvt.f32.s32.to.zero.pseudo %v874
        %v876 = vcvt.s32.f32 %v875
        %v877 = vmul.f32 %v876, 0.00024414063
        %v878 = vld [vmem:[%s724] sm:$0xff]
        %v879 = vld [vmem:[%s724 + $0x8] sm:$0xff]
        %v880 = vld [vmem:[%s724 + $0x10] sm:$0xff]
        %v881 = vld [vmem:[%s724 + $0x18] sm:$0xff]
        %882 = vmatprep.subr.mxu0 0.0
        %883 = vmatpush1.msra.mxu0 %v878
        %884 = vmatprep.subr.mxu0 0.0
        %885 = vmatpush1.msra.mxu0 %v879
        %886 = vmatprep.subr.mxu0 0.0
        %887 = vmatpush1.msra.mxu0 %v880
        %888 = vmatprep.subr.mxu0 0.0
        %889 = vmatpush1.msra.mxu0 %v881
        %890 = vmatprep.subr.mxu0 0.0
        %891 = vmatpush1.msra.mxu0 0.0
        %892 = vmatprep.subr.mxu0 0.0
        %893 = vmatpush1.msra.mxu0 0.0
        %894 = vmatprep.subr.mxu0 0.0
        %895 = vmatpush1.msra.mxu0 0.0
        %896 = vmatprep.subr.mxu0 0.0
        %897 = vmatpush1.msra.mxu0 0.0
        %898 = vmatprep.subr.mxu0 0.0
        %899 = vmatpush1.msra.mxu0 0.0
        %900 = vmatprep.subr.mxu0 0.0
        %901 = vmatpush1.msra.mxu0 0.0
        %902 = vmatprep.subr.mxu0 0.0
        %903 = vmatpush1.msra.mxu0 0.0
        %904 = vmatprep.subr.mxu0 0.0
        %905 = vmatpush1.msra.mxu0 0.0
        %906 = vmatprep.subr.mxu0 0.0
        %907 = vmatpush1.msra.mxu0 0.0
        %908 = vmatprep.subr.mxu0 0.0
        %909 = vmatpush1.msra.mxu0 0.0
        %910 = vmatprep.subr.mxu0 0.0
        %911 = vmatpush1.msra.mxu0 0.0
        %912 = vmatprep.subr.mxu0 0.0
        %913 = vmatpush1.msra.mxu0 0.0
        %914 = vmatprep.subr.mxu0 0.0
        %915 = vmatpush1.msra.mxu0 0.0
        %916 = vmatprep.subr.mxu0 0.0
        %917 = vmatpush1.msra.mxu0 0.0
        %918 = vmatprep.subr.mxu0 0.0
        %919 = vmatpush1.msra.mxu0 0.0
        %920 = vmatprep.subr.mxu0 0.0
        %921 = vmatpush1.msra.mxu0 0.0
        %922 = vmatprep.subr.mxu0 0.0
        %923 = vmatpush1.msra.mxu0 0.0
        %924 = vmatprep.subr.mxu0 0.0
        %925 = vmatpush1.msra.mxu0 0.0
        %926 = vmatprep.subr.mxu0 0.0
        %927 = vmatpush1.msra.mxu0 0.0
        %928 = vmatprep.subr.mxu0 0.0
        %929 = vmatpush1.msra.mxu0 0.0
        %930 = vmatprep.subr.mxu0 0.0
        %931 = vmatpush1.msra.mxu0 0.0
        %932 = vmatprep.subr.mxu0 0.0
        %933 = vmatpush1.msra.mxu0 0.0
        %934 = vmatprep.subr.mxu0 0.0
        %935 = vmatpush1.msra.mxu0 0.0
        %936 = vmatprep.subr.mxu0 0.0
        %937 = vmatpush1.msra.mxu0 0.0
        %938 = vmatprep.subr.mxu0 0.0
        %939 = vmatpush1.msra.mxu0 0.0
        %940 = vmatprep.subr.mxu0 0.0
        %941 = vmatpush1.msra.mxu0 0.0
        %942 = vmatprep.subr.mxu0 0.0
        %943 = vmatpush1.msra.mxu0 0.0
        %944 = vmatprep.subr.mxu0 0.0
        %945 = vmatpush1.msra.mxu0 0.0
        %946 = vmatprep.mubr.f32.mxu0 0.0
        %947 = vmatmul.mubr.f32.gmra.mrb[0].mxu0 %v800
        %v948 = vpop.f32.mrb[0].mxu0
        %v949 = vadd.f32 0.0, %v948
        %v950 = vpop.f32.mrb[0].mxu0
        %951 = vdwg.mxu0
        %v952 = vmin.f32 %v949, 7.999756
        %v953 = vmax.f32 %v952, -7.999756
        %v954 = vmul.f32 %v953, 4096.0
        %v955 = vcvt.f32.s32.to.zero.pseudo %v954
        %v956 = vcvt.s32.f32 %v955
        %v957 = vmul.f32 %v956, 0.00024414063
        %v958 = vld [vmem:[%s729] sm:$0xff]
        %v959 = vld [vmem:[%s729 + $0x8] sm:$0xff]
        %v960 = vld [vmem:[%s729 + $0x10] sm:$0xff]
        %v961 = vld [vmem:[%s729 + $0x18] sm:$0xff]
        %962 = vmatprep.subr.mxu0 0.0
        %963 = vmatpush1.msra.mxu0 %v958
        %964 = vmatprep.subr.mxu0 0.0
        %965 = vmatpush1.msra.mxu0 %v959
        %966 = vmatprep.subr.mxu0 0.0
        %967 = vmatpush1.msra.mxu0 %v960
        %968 = vmatprep.subr.mxu0 0.0
        %969 = vmatpush1.msra.mxu0 %v961
        %970 = vmatprep.subr.mxu0 0.0
        %971 = vmatpush1.msra.mxu0 0.0
        %972 = vmatprep.subr.mxu0 0.0
        %973 = vmatpush1.msra.mxu0 0.0
        %974 = vmatprep.subr.mxu0 0.0
        %975 = vmatpush1.msra.mxu0 0.0
        %976 = vmatprep.subr.mxu0 0.0
        %977 = vmatpush1.msra.mxu0 0.0
        %978 = vmatprep.subr.mxu0 0.0
        %979 = vmatpush1.msra.mxu0 0.0
        %980 = vmatprep.subr.mxu0 0.0
        %981 = vmatpush1.msra.mxu0 0.0
        %982 = vmatprep.subr.mxu0 0.0
        %983 = vmatpush1.msra.mxu0 0.0
        %984 = vmatprep.subr.mxu0 0.0
        %985 = vmatpush1.msra.mxu0 0.0
        %986 = vmatprep.subr.mxu0 0.0
        %987 = vmatpush1.msra.mxu0 0.0
        %988 = vmatprep.subr.mxu0 0.0
        %989 = vmatpush1.msra.mxu0 0.0
        %990 = vmatprep.subr.mxu0 0.0
        %991 = vmatpush1.msra.mxu0 0.0
        %992 = vmatprep.subr.mxu0 0.0
        %993 = vmatpush1.msra.mxu0 0.0
        %994 = vmatprep.subr.mxu0 0.0
        %995 = vmatpush1.msra.mxu0 0.0
        %996 = vmatprep.subr.mxu0 0.0
        %997 = vmatpush1.msra.mxu0 0.0
        %998 = vmatprep.subr.mxu0 0.0
        %999 = vmatpush1.msra.mxu0 0.0
        %1000 = vmatprep.subr.mxu0 0.0
        %1001 = vmatpush1.msra.mxu0 0.0
        %1002 = vmatprep.subr.mxu0 0.0
        %1003 = vmatpush1.msra.mxu0 0.0
        %1004 = vmatprep.subr.mxu0 0.0
        %1005 = vmatpush1.msra.mxu0 0.0
        %1006 = vmatprep.subr.mxu0 0.0
        %1007 = vmatpush1.msra.mxu0 0.0
        %1008 = vmatprep.subr.mxu0 0.0
        %1009 = vmatpush1.msra.mxu0 0.0
        %1010 = vmatprep.subr.mxu0 0.0
        %1011 = vmatpush1.msra.mxu0 0.0
        %1012 = vmatprep.subr.mxu0 0.0
        %1013 = vmatpush1.msra.mxu0 0.0
        %1014 = vmatprep.subr.mxu0 0.0
        %1015 = vmatpush1.msra.mxu0 0.0
        %1016 = vmatprep.subr.mxu0 0.0
        %1017 = vmatpush1.msra.mxu0 0.0
        %1018 = vmatprep.subr.mxu0 0.0
        %1019 = vmatpush1.msra.mxu0 0.0
        %1020 = vmatprep.subr.mxu0 0.0
        %1021 = vmatpush1.msra.mxu0 0.0
        %1022 = vmatprep.subr.mxu0 0.0
        %1023 = vmatpush1.msra.mxu0 0.0
        %1024 = vmatprep.subr.mxu0 0.0
        %1025 = vmatpush1.msra.mxu0 0.0
        %1026 = vmatprep.mubr.f32.mxu0 0.0
        %1027 = vmatmul.mubr.f32.gmra.mrb[0].mxu0 %v800
        %v1028 = vpop.f32.mrb[0].mxu0
        %v1029 = vadd.f32 0.0, %v1028
        %v1030 = vpop.f32.mrb[0].mxu0
        %1031 = vdwg.mxu0
        %v1032 = vmin.f32 %v1029, 7.999756
        %v1033 = vmax.f32 %v1032, -7.999756
        %v1034 = vmul.f32 %v1033, 4096.0
        %v1035 = vcvt.f32.s32.to.zero.pseudo %v1034
        %v1036 = vcvt.s32.f32 %v1035
        %v1037 = vmul.f32 %v1036, 0.00024414063
        %v1038 = vld [vmem:[%s604] sm:$0xff]
        %v1039 = vld [vmem:[%s604 + $0x8] sm:$0xff]
        %v1040 = vld [vmem:[%s604 + $0x10] sm:$0xff]
        %v1041 = vld [vmem:[%s604 + $0x18] sm:$0xff]
        %vm1042 = vcmask 64512
        %v1044 = vsel %vm1042, %v877, 0
        %v1047 = vsel %vm1042, %v957, 0
        %1049 = vmatprep.subr.mxu0 0.0
        %1050 = vmatpush1.xpose.msra.mxu0 %v1047
        %1051 = vmatprep.subr.mxu0 0.0
        %1052 = vmatpush1.xpose.msra.mxu0 0.0
        %1053 = vmatprep.subr.mxu0 0.0
        %1054 = vmatpush1.xpose.msra.mxu0 0.0
        %1055 = vmatprep.subr.mxu0 0.0
        %1056 = vmatpush1.xpose.msra.mxu0 0.0
        %1057 = vmatprep.subr.mxu0 0.0
        %1058 = vmatpush1.xpose.msra.mxu0 0.0
        %1059 = vmatprep.subr.mxu0 0.0
        %1060 = vmatpush1.xpose.msra.mxu0 0.0
        %1061 = vmatprep.subr.mxu0 0.0
        %1062 = vmatpush1.xpose.msra.mxu0 0.0
        %1063 = vmatprep.subr.mxu0 0.0
        %1064 = vmatpush1.xpose.msra.mxu0 0.0
        %1065 = vmatprep.subr.mxu0 0.0
        %1066 = vmatpush1.xpose.msra.mxu0 0.0
        %1067 = vmatprep.subr.mxu0 0.0
        %1068 = vmatpush1.xpose.msra.mxu0 0.0
        %1069 = vmatprep.subr.mxu0 0.0
        %1070 = vmatpush1.xpose.msra.mxu0 0.0
        %1071 = vmatprep.subr.mxu0 0.0
        %1072 = vmatpush1.xpose.msra.mxu0 0.0
        %1073 = vmatprep.subr.mxu0 0.0
        %1074 = vmatpush1.xpose.msra.mxu0 0.0
        %1075 = vmatprep.subr.mxu0 0.0
        %1076 = vmatpush1.xpose.msra.mxu0 0.0
        %1077 = vmatprep.subr.mxu0 0.0
        %1078 = vmatpush1.xpose.msra.mxu0 0.0
        %1079 = vmatprep.subr.mxu0 0.0
        %1080 = vmatpush1.xpose.msra.mxu0 0.0
        %1081 = vmatprep.subr.mxu0 0.0
        %1082 = vmatpush1.xpose.msra.mxu0 0.0
        %1083 = vmatprep.subr.mxu0 0.0
        %1084 = vmatpush1.xpose.msra.mxu0 0.0
        %1085 = vmatprep.subr.mxu0 0.0
        %1086 = vmatpush1.xpose.msra.mxu0 0.0
        %1087 = vmatprep.subr.mxu0 0.0
        %1088 = vmatpush1.xpose.msra.mxu0 0.0
        %1089 = vmatprep.subr.mxu0 0.0
        %1090 = vmatpush1.xpose.msra.mxu0 0.0
        %1091 = vmatprep.subr.mxu0 0.0
        %1092 = vmatpush1.xpose.msra.mxu0 0.0
        %1093 = vmatprep.subr.mxu0 0.0
        %1094 = vmatpush1.xpose.msra.mxu0 0.0
        %1095 = vmatprep.subr.mxu0 0.0
        %1096 = vmatpush1.xpose.msra.mxu0 0.0
        %1097 = vmatprep.subr.mxu0 0.0
        %1098 = vmatpush1.xpose.msra.mxu0 0.0
        %1099 = vmatprep.subr.mxu0 0.0
        %1100 = vmatpush1.xpose.msra.mxu0 0.0
        %1101 = vmatprep.subr.mxu0 0.0
        %1102 = vmatpush1.xpose.msra.mxu0 0.0
        %1103 = vmatprep.subr.mxu0 0.0
        %1104 = vmatpush1.xpose.msra.mxu0 0.0
        %1105 = vmatprep.subr.mxu0 0.0
        %1106 = vmatpush1.xpose.msra.mxu0 0.0
        %1107 = vmatprep.subr.mxu0 0.0
        %1108 = vmatpush1.xpose.msra.mxu0 0.0
        %1109 = vmatprep.subr.mxu0 0.0
        %1110 = vmatpush1.xpose.msra.mxu0 0.0
        %1111 = vmatprep.subr.mxu0 0.0
        %1112 = vmatpush1.xpose.msra.mxu0 0.0
        %1113 = vmatprep.mubr.f32.mxu0 0.0
        %1114 = vmatmul.mubr.f32.gmra.mrb[0].mxu0 %v1044
        %v1115 = vpop.f32.mrb[0].mxu0
        %v1116 = vadd.f32 0.0, %v1115
        %v1117 = vpop.f32.mrb[0].mxu0
        %1118 = vdwg.mxu0
        %v1119 = vmul.f32 %v1116, 0.35355338
        %v1120 = vmin.f32 %v1119, 7.999756
        %v1121 = vmax.f32 %v1120, -7.999756
        %v1122 = vmul.f32 %v1121, 4096.0
        %v1123 = vcvt.f32.s32.to.zero.pseudo %v1122
        %v1124 = vcvt.s32.f32 %v1123
        %v1125 = vmul.f32 %v1124, 0.00024414063
        %v1126 = vsel %vm1042, %v1125, -inf
        %1127 = vmax.xlane.f32.xlu0 %v1126
        %v1128 = vpop.xlane.xlu0 %1127
        %v1129 = vsub.f32 %v1125, %v1128
        %v1130 = vmul.f32 %v1129, 1.442695
        %v1131 = vpow.pop %v1130
        %v1132 = vsel %vm1042, %v1131, 0.0
        %1133 = vadd.xlane.f32.xlu0 %v1132
        %v1134 = vpop.xlane.xlu0 %1133
        %v1135 = vrcp.pop %v1134
        %v1136 = vmul.f32 %v1131, %v1135
        %v1137 = vmin.f32 %v1136, 7.999756
        %v1138 = vmax.f32 %v1137, -7.999756
        %v1139 = vmul.f32 %v1138, 4096.0
        %v1140 = vcvt.f32.s32.to.zero.pseudo %v1139
        %v1141 = vcvt.s32.f32 %v1140
        %v1142 = vmul.f32 %v1141, 0.00024414063
        %v1144 = vsel %vm1042, %v1142, 0
        %1146 = vmatprep.subr.mxu0 0.0
        %1147 = vmatpush1.msra.mxu0 %v1037
        %1148 = vmatprep.subr.mxu0 0.0
        %1149 = vmatpush1.msra.mxu0 0.0
        %1150 = vmatprep.subr.mxu0 0.0
        %1151 = vmatpush1.msra.mxu0 0.0
        %1152 = vmatprep.subr.mxu0 0.0
        %1153 = vmatpush1.msra.mxu0 0.0
        %1154 = vmatprep.subr.mxu0 0.0
        %1155 = vmatpush1.msra.mxu0 0.0
        %1156 = vmatprep.subr.mxu0 0.0
        %1157 = vmatpush1.msra.mxu0 0.0
        %1158 = vmatprep.subr.mxu0 0.0
        %1159 = vmatpush1.msra.mxu0 0.0
        %1160 = vmatprep.subr.mxu0 0.0
        %1161 = vmatpush1.msra.mxu0 0.0
        %1162 = vmatprep.subr.mxu0 0.0
        %1163 = vmatpush1.msra.mxu0 0.0
        %1164 = vmatprep.subr.mxu0 0.0
        %1165 = vmatpush1.msra.mxu0 0.0
        %1166 = vmatprep.subr.mxu0 0.0
        %1167 = vmatpush1.msra.mxu0 0.0
        %1168 = vmatprep.subr.mxu0 0.0
        %1169 = vmatpush1.msra.mxu0 0.0
        %1170 = vmatprep.subr.mxu0 0.0
        %1171 = vmatpush1.msra.mxu0 0.0
        %1172 = vmatprep.subr.mxu0 0.0
        %1173 = vmatpush1.msra.mxu0 0.0
        %1174 = vmatprep.subr.mxu0 0.0
        %1175 = vmatpush1.msra.mxu0 0.0
        %1176 = vmatprep.subr.mxu0 0.0
        %1177 = vmatpush1.msra.mxu0 0.0
        %1178 = vmatprep.subr.mxu0 0.0
        %1179 = vmatpush1.msra.mxu0 0.0
        %1180 = vmatprep.subr.mxu0 0.0
        %1181 = vmatpush1.msra.mxu0 0.0
        %1182 = vmatprep.subr.mxu0 0.0
        %1183 = vmatpush1.msra.mxu0 0.0
        %1184 = vmatprep.subr.mxu0 0.0
        %1185 = vmatpush1.msra.mxu0 0.0
        %1186 = vmatprep.subr.mxu0 0.0
        %1187 = vmatpush1.msra.mxu0 0.0
        %1188 = vmatprep.subr.mxu0 0.0
        %1189 = vmatpush1.msra.mxu0 0.0
        %1190 = vmatprep.subr.mxu0 0.0
        %1191 = vmatpush1.msra.mxu0 0.0
        %1192 = vmatprep.subr.mxu0 0.0
        %1193 = vmatpush1.msra.mxu0 0.0
        %1194 = vmatprep.subr.mxu0 0.0
        %1195 = vmatpush1.msra.mxu0 0.0
        %1196 = vmatprep.subr.mxu0 0.0
        %1197 = vmatpush1.msra.mxu0 0.0
        %1198 = vmatprep.subr.mxu0 0.0
        %1199 = vmatpush1.msra.mxu0 0.0
        %1200 = vmatprep.subr.mxu0 0.0
        %1201 = vmatpush1.msra.mxu0 0.0
        %1202 = vmatprep.subr.mxu0 0.0
        %1203 = vmatpush1.msra.mxu0 0.0
        %1204 = vmatprep.subr.mxu0 0.0
        %1205 = vmatpush1.msra.mxu0 0.0
        %1206 = vmatprep.subr.mxu0 0.0
        %1207 = vmatpush1.msra.mxu0 0.0
        %1208 = vmatprep.subr.mxu0 0.0
        %1209 = vmatpush1.msra.mxu0 0.0
        %1210 = vmatprep.mubr.f32.mxu0 0.0
        %1211 = vmatmul.mubr.f32.gmra.mrb[0].mxu0 %v1144
        %v1212 = vpop.f32.mrb[0].mxu0
        %v1213 = vadd.f32 0.0, %v1212
        %v1214 = vpop.f32.mrb[0].mxu0
        %1215 = vdwg.mxu0
        %v1216 = vmin.f32 %v1213, 7.999756
        %v1217 = vmax.f32 %v1216, -7.999756
        %v1218 = vmul.f32 %v1217, 4096.0
        %v1219 = vcvt.f32.s32.to.zero.pseudo %v1218
        %v1220 = vcvt.s32.f32 %v1219
        %v1221 = vmul.f32 %v1220, 0.00024414063
        %1222 = vrot.lane.b32.xlu0 %v877, 120
        %v1223 = vpop.permute.xlu0 %1222
        %1224 = vrot.lane.b32.xlu0 %v957, 120
        %v1225 = vpop.permute.xlu0 %1224
        %v1226 = vsel %vm1042, %v1223, 0
        %v1228 = vsel %vm1042, %v1225, 0
        %1230 = vmatprep.subr.mxu0 0.0
        %1231 = vmatpush1.xpose.msra.mxu0 %v1228
        %1232 = vmatprep.subr.mxu0 0.0
        %1233 = vmatpush1.xpose.msra.mxu0 0.0
        %1234 = vmatprep.subr.mxu0 0.0
        %1235 = vmatpush1.xpose.msra.mxu0 0.0
        %1236 = vmatprep.subr.mxu0 0.0
        %1237 = vmatpush1.xpose.msra.mxu0 0.0
        %1238 = vmatprep.subr.mxu0 0.0
        %1239 = vmatpush1.xpose.msra.mxu0 0.0
        %1240 = vmatprep.subr.mxu0 0.0
        %1241 = vmatpush1.xpose.msra.mxu0 0.0
        %1242 = vmatprep.subr.mxu0 0.0
        %1243 = vmatpush1.xpose.msra.mxu0 0.0
        %1244 = vmatprep.subr.mxu0 0.0
        %1245 = vmatpush1.xpose.msra.mxu0 0.0
        %1246 = vmatprep.subr.mxu0 0.0
        %1247 = vmatpush1.xpose.msra.mxu0 0.0
        %1248 = vmatprep.subr.mxu0 0.0
        %1249 = vmatpush1.xpose.msra.mxu0 0.0
        %1250 = vmatprep.subr.mxu0 0.0
        %1251 = vmatpush1.xpose.msra.mxu0 0.0
        %1252 = vmatprep.subr.mxu0 0.0
        %1253 = vmatpush1.xpose.msra.mxu0 0.0
        %1254 = vmatprep.subr.mxu0 0.0
        %1255 = vmatpush1.xpose.msra.mxu0 0.0
        %1256 = vmatprep.subr.mxu0 0.0
        %1257 = vmatpush1.xpose.msra.mxu0 0.0
        %1258 = vmatprep.subr.mxu0 0.0
        %1259 = vmatpush1.xpose.msra.mxu0 0.0
        %1260 = vmatprep.subr.mxu0 0.0
        %1261 = vmatpush1.xpose.msra.mxu0 0.0
        %1262 = vmatprep.subr.mxu0 0.0
        %1263 = vmatpush1.xpose.msra.mxu0 0.0
        %1264 = vmatprep.subr.mxu0 0.0
        %1265 = vmatpush1.xpose.msra.mxu0 0.0
        %1266 = vmatprep.subr.mxu0 0.0
        %1267 = vmatpush1.xpose.msra.mxu0 0.0
        %1268 = vmatprep.subr.mxu0 0.0
        %1269 = vmatpush1.xpose.msra.mxu0 0.0
        %1270 = vmatprep.subr.mxu0 0.0
        %1271 = vmatpush1.xpose.msra.mxu0 0.0
        %1272 = vmatprep.subr.mxu0 0.0
        %1273 = vmatpush1.xpose.msra.mxu0 0.0
        %1274 = vmatprep.subr.mxu0 0.0
        %1275 = vmatpush1.xpose.msra.mxu0 0.0
        %1276 = vmatprep.subr.mxu0 0.0
        %1277 = vmatpush1.xpose.msra.mxu0 0.0
        %1278 = vmatprep.subr.mxu0 0.0
        %1279 = vmatpush1.xpose.msra.mxu0 0.0
        %1280 = vmatprep.subr.mxu0 0.0
        %1281 = vmatpush1.xpose.msra.mxu0 0.0
        %1282 = vmatprep.subr.mxu0 0.0
        %1283 = vmatpush1.xpose.msra.mxu0 0.0
        %1284 = vmatprep.subr.mxu0 0.0
        %1285 = vmatpush1.xpose.msra.mxu0 0.0
        %1286 = vmatprep.subr.mxu0 0.0
        %1287 = vmatpush1.xpose.msra.mxu0 0.0
        %1288 = vmatprep.subr.mxu0 0.0
        %1289 = vmatpush1.xpose.msra.mxu0 0.0
        %1290 = vmatprep.subr.mxu0 0.0
        %1291 = vmatpush1.xpose.msra.mxu0 0.0
        %1292 = vmatprep.subr.mxu0 0.0
        %1293 = vmatpush1.xpose.msra.mxu0 0.0
        %1294 = vmatprep.mubr.f32.mxu0 0.0
        %1295 = vmatmul.mubr.f32.gmra.mrb[0].mxu0 %v1226
        %v1296 = vpop.f32.mrb[0].mxu0
        %v1297 = vadd.f32 0.0, %v1296
        %v1298 = vpop.f32.mrb[0].mxu0
        %1299 = vdwg.mxu0
        %v1300 = vmul.f32 %v1297, 0.35355338
        %v1301 = vmin.f32 %v1300, 7.999756
        %v1302 = vmax.f32 %v1301, -7.999756
        %v1303 = vmul.f32 %v1302, 4096.0
        %v1304 = vcvt.f32.s32.to.zero.pseudo %v1303
        %v1305 = vcvt.s32.f32 %v1304
        %v1306 = vmul.f32 %v1305, 0.00024414063
        %v1307 = vsel %vm1042, %v1306, -inf
        %1308 = vmax.xlane.f32.xlu0 %v1307
        %v1309 = vpop.xlane.xlu0 %1308
        %v1310 = vsub.f32 %v1306, %v1309
        %v1311 = vmul.f32 %v1310, 1.442695
        %v1312 = vpow.pop %v1311
        %v1313 = vsel %vm1042, %v1312, 0.0
        %1314 = vadd.xlane.f32.xlu0 %v1313
        %v1315 = vpop.xlane.xlu0 %1314
        %v1316 = vrcp.pop %v1315
        %v1317 = vmul.f32 %v1312, %v1316
        %v1318 = vmin.f32 %v1317, 7.999756
        %v1319 = vmax.f32 %v1318, -7.999756
        %v1320 = vmul.f32 %v1319, 4096.0
        %v1321 = vcvt.f32.s32.to.zero.pseudo %v1320
        %v1322 = vcvt.s32.f32 %v1321
        %v1323 = vmul.f32 %v1322, 0.00024414063
        %1325 = vrot.lane.b32.xlu0 %v1037, 120
        %v1326 = vpop.permute.xlu0 %1325
        %v1329 = vsel %vm1042, %v1323, 0
        %1331 = vmatprep.subr.mxu0 0.0
        %1332 = vmatpush1.msra.mxu0 %v1326
        %1333 = vmatprep.subr.mxu0 0.0
        %1334 = vmatpush1.msra.mxu0 0.0
        %1335 = vmatprep.subr.mxu0 0.0
        %1336 = vmatpush1.msra.mxu0 0.0
        %1337 = vmatprep.subr.mxu0 0.0
        %1338 = vmatpush1.msra.mxu0 0.0
        %1339 = vmatprep.subr.mxu0 0.0
        %1340 = vmatpush1.msra.mxu0 0.0
        %1341 = vmatprep.subr.mxu0 0.0
        %1342 = vmatpush1.msra.mxu0 0.0
        %1343 = vmatprep.subr.mxu0 0.0
        %1344 = vmatpush1.msra.mxu0 0.0
        %1345 = vmatprep.subr.mxu0 0.0
        %1346 = vmatpush1.msra.mxu0 0.0
        %1347 = vmatprep.subr.mxu0 0.0
        %1348 = vmatpush1.msra.mxu0 0.0
        %1349 = vmatprep.subr.mxu0 0.0
        %1350 = vmatpush1.msra.mxu0 0.0
        %1351 = vmatprep.subr.mxu0 0.0
        %1352 = vmatpush1.msra.mxu0 0.0
        %1353 = vmatprep.subr.mxu0 0.0
        %1354 = vmatpush1.msra.mxu0 0.0
        %1355 = vmatprep.subr.mxu0 0.0
        %1356 = vmatpush1.msra.mxu0 0.0
        %1357 = vmatprep.subr.mxu0 0.0
        %1358 = vmatpush1.msra.mxu0 0.0
        %1359 = vmatprep.subr.mxu0 0.0
        %1360 = vmatpush1.msra.mxu0 0.0
        %1361 = vmatprep.subr.mxu0 0.0
        %1362 = vmatpush1.msra.mxu0 0.0
        %1363 = vmatprep.subr.mxu0 0.0
        %1364 = vmatpush1.msra.mxu0 0.0
        %1365 = vmatprep.subr.mxu0 0.0
        %1366 = vmatpush1.msra.mxu0 0.0
        %1367 = vmatprep.subr.mxu0 0.0
        %1368 = vmatpush1.msra.mxu0 0.0
        %1369 = vmatprep.subr.mxu0 0.0
        %1370 = vmatpush1.msra.mxu0 0.0
        %1371 = vmatprep.subr.mxu0 0.0
        %1372 = vmatpush1.msra.mxu0 0.0
        %1373 = vmatprep.subr.mxu0 0.0
        %1374 = vmatpush1.msra.mxu0 0.0
        %1375 = vmatprep.subr.mxu0 0.0
        %1376 = vmatpush1.msra.mxu0 0.0
        %1377 = vmatprep.subr.mxu0 0.0
        %1378 = vmatpush1.msra.mxu0 0.0
        %1379 = vmatprep.subr.mxu0 0.0
        %1380 = vmatpush1.msra.mxu0 0.0
        %1381 = vmatprep.subr.mxu0 0.0
        %1382 = vmatpush1.msra.mxu0 0.0
        %1383 = vmatprep.subr.mxu0 0.0
        %1384 = vmatpush1.msra.mxu0 0.0
        %1385 = vmatprep.subr.mxu0 0.0
        %1386 = vmatpush1.msra.mxu0 0.0
        %1387 = vmatprep.subr.mxu0 0.0
        %1388 = vmatpush1.msra.mxu0 0.0
        %1389 = vmatprep.subr.mxu0 0.0
        %1390 = vmatpush1.msra.mxu0 0.0
        %1391 = vmatprep.subr.mxu0 0.0
        %1392 = vmatpush1.msra.mxu0 0.0
        %1393 = vmatprep.subr.mxu0 0.0
        %1394 = vmatpush1.msra.mxu0 0.0
        %1395 = vmatprep.mubr.f32.mxu0 0.0
        %1396 = vmatmul.mubr.f32.gmra.mrb[0].mxu0 %v1329
        %v1397 = vpop.f32.mrb[0].mxu0
        %v1398 = vadd.f32 0.0, %v1397
        %v1399 = vpop.f32.mrb[0].mxu0
        %1400 = vdwg.mxu0
        %v1401 = vmin.f32 %v1398, 7.999756
        %v1402 = vmax.f32 %v1401, -7.999756
        %v1403 = vmul.f32 %v1402, 4096.0
        %v1404 = vcvt.f32.s32.to.zero.pseudo %v1403
        %v1405 = vcvt.s32.f32 %v1404
        %v1406 = vmul.f32 %v1405, 0.00024414063
        %v1408 = vsel %vm1042, %v1406, 0
        %1410 = vmatprep.subr.mxu0 0.0
        %1411 = vmatpush1.msra.mxu0 %v1039
        %1412 = vmatprep.subr.mxu0 0.0
        %1413 = vmatpush1.msra.mxu0 0.0
        %1414 = vmatprep.subr.mxu0 0.0
        %1415 = vmatpush1.msra.mxu0 0.0
        %1416 = vmatprep.subr.mxu0 0.0
        %1417 = vmatpush1.msra.mxu0 0.0
        %1418 = vmatprep.subr.mxu0 0.0
        %1419 = vmatpush1.msra.mxu0 0.0
        %1420 = vmatprep.subr.mxu0 0.0
        %1421 = vmatpush1.msra.mxu0 0.0
        %1422 = vmatprep.subr.mxu0 0.0
        %1423 = vmatpush1.msra.mxu0 0.0
        %1424 = vmatprep.subr.mxu0 0.0
        %1425 = vmatpush1.msra.mxu0 0.0
        %1426 = vmatprep.subr.mxu0 0.0
        %1427 = vmatpush1.msra.mxu0 0.0
        %1428 = vmatprep.subr.mxu0 0.0
        %1429 = vmatpush1.msra.mxu0 0.0
        %1430 = vmatprep.subr.mxu0 0.0
        %1431 = vmatpush1.msra.mxu0 0.0
        %1432 = vmatprep.subr.mxu0 0.0
        %1433 = vmatpush1.msra.mxu0 0.0
        %1434 = vmatprep.subr.mxu0 0.0
        %1435 = vmatpush1.msra.mxu0 0.0
        %1436 = vmatprep.subr.mxu0 0.0
        %1437 = vmatpush1.msra.mxu0 0.0
        %1438 = vmatprep.subr.mxu0 0.0
        %1439 = vmatpush1.msra.mxu0 0.0
        %1440 = vmatprep.subr.mxu0 0.0
        %1441 = vmatpush1.msra.mxu0 0.0
        %1442 = vmatprep.subr.mxu0 0.0
        %1443 = vmatpush1.msra.mxu0 0.0
        %1444 = vmatprep.subr.mxu0 0.0
        %1445 = vmatpush1.msra.mxu0 0.0
        %1446 = vmatprep.subr.mxu0 0.0
        %1447 = vmatpush1.msra.mxu0 0.0
        %1448 = vmatprep.subr.mxu0 0.0
        %1449 = vmatpush1.msra.mxu0 0.0
        %1450 = vmatprep.subr.mxu0 0.0
        %1451 = vmatpush1.msra.mxu0 0.0
        %1452 = vmatprep.subr.mxu0 0.0
        %1453 = vmatpush1.msra.mxu0 0.0
        %1454 = vmatprep.subr.mxu0 0.0
        %1455 = vmatpush1.msra.mxu0 0.0
        %1456 = vmatprep.subr.mxu0 0.0
        %1457 = vmatpush1.msra.mxu0 0.0
        %1458 = vmatprep.subr.mxu0 0.0
        %1459 = vmatpush1.msra.mxu0 0.0
        %1460 = vmatprep.subr.mxu0 0.0
        %1461 = vmatpush1.msra.mxu0 0.0
        %1462 = vmatprep.subr.mxu0 0.0
        %1463 = vmatpush1.msra.mxu0 0.0
        %1464 = vmatprep.subr.mxu0 0.0
        %1465 = vmatpush1.msra.mxu0 0.0
        %1466 = vmatprep.subr.mxu0 0.0
        %1467 = vmatpush1.msra.mxu0 0.0
        %1468 = vmatprep.subr.mxu0 0.0
        %1469 = vmatpush1.msra.mxu0 0.0
        %1470 = vmatprep.subr.mxu0 0.0
        %1471 = vmatpush1.msra.mxu0 0.0
        %1472 = vmatprep.subr.mxu0 0.0
        %1473 = vmatpush1.msra.mxu0 0.0
        %1474 = vmatprep.mubr.f32.mxu0 0.0
        %1475 = vmatmul.mubr.f32.gmra.mrb[0].mxu0 %v1408
        %v1476 = vpop.f32.mrb[0].mxu0
        %v1477 = vadd.f32 0.0, %v1476
        %v1478 = vpop.f32.mrb[0].mxu0
        %1479 = vdwg.mxu0
        %v1481 = vsel %vm1042, %v1221, 0
        %1483 = vmatprep.subr.mxu0 0.0
        %1484 = vmatpush1.msra.mxu0 %v1038
        %1485 = vmatprep.subr.mxu0 0.0
        %1486 = vmatpush1.msra.mxu0 0.0
        %1487 = vmatprep.subr.mxu0 0.0
        %1488 = vmatpush1.msra.mxu0 0.0
        %1489 = vmatprep.subr.mxu0 0.0
        %1490 = vmatpush1.msra.mxu0 0.0
        %1491 = vmatprep.subr.mxu0 0.0
        %1492 = vmatpush1.msra.mxu0 0.0
        %1493 = vmatprep.subr.mxu0 0.0
        %1494 = vmatpush1.msra.mxu0 0.0
        %1495 = vmatprep.subr.mxu0 0.0
        %1496 = vmatpush1.msra.mxu0 0.0
        %1497 = vmatprep.subr.mxu0 0.0
        %1498 = vmatpush1.msra.mxu0 0.0
        %1499 = vmatprep.subr.mxu0 0.0
        %1500 = vmatpush1.msra.mxu0 0.0
        %1501 = vmatprep.subr.mxu0 0.0
        %1502 = vmatpush1.msra.mxu0 0.0
        %1503 = vmatprep.subr.mxu0 0.0
        %1504 = vmatpush1.msra.mxu0 0.0
        %1505 = vmatprep.subr.mxu0 0.0
        %1506 = vmatpush1.msra.mxu0 0.0
        %1507 = vmatprep.subr.mxu0 0.0
        %1508 = vmatpush1.msra.mxu0 0.0
        %1509 = vmatprep.subr.mxu0 0.0
        %1510 = vmatpush1.msra.mxu0 0.0
        %1511 = vmatprep.subr.mxu0 0.0
        %1512 = vmatpush1.msra.mxu0 0.0
        %1513 = vmatprep.subr.mxu0 0.0
        %1514 = vmatpush1.msra.mxu0 0.0
        %1515 = vmatprep.subr.mxu0 0.0
        %1516 = vmatpush1.msra.mxu0 0.0
        %1517 = vmatprep.subr.mxu0 0.0
        %1518 = vmatpush1.msra.mxu0 0.0
        %1519 = vmatprep.subr.mxu0 0.0
        %1520 = vmatpush1.msra.mxu0 0.0
        %1521 = vmatprep.subr.mxu0 0.0
        %1522 = vmatpush1.msra.mxu0 0.0
        %1523 = vmatprep.subr.mxu0 0.0
        %1524 = vmatpush1.msra.mxu0 0.0
        %1525 = vmatprep.subr.mxu0 0.0
        %1526 = vmatpush1.msra.mxu0 0.0
        %1527 = vmatprep.subr.mxu0 0.0
        %1528 = vmatpush1.msra.mxu0 0.0
        %1529 = vmatprep.subr.mxu0 0.0
        %1530 = vmatpush1.msra.mxu0 0.0
        %1531 = vmatprep.subr.mxu0 0.0
        %1532 = vmatpush1.msra.mxu0 0.0
        %1533 = vmatprep.subr.mxu0 0.0
        %1534 = vmatpush1.msra.mxu0 0.0
        %1535 = vmatprep.subr.mxu0 0.0
        %1536 = vmatpush1.msra.mxu0 0.0
        %1537 = vmatprep.subr.mxu0 0.0
        %1538 = vmatpush1.msra.mxu0 0.0
        %1539 = vmatprep.subr.mxu0 0.0
        %1540 = vmatpush1.msra.mxu0 0.0
        %1541 = vmatprep.subr.mxu0 0.0
        %1542 = vmatpush1.msra.mxu0 0.0
        %1543 = vmatprep.subr.mxu0 0.0
        %1544 = vmatpush1.msra.mxu0 0.0
        %1545 = vmatprep.subr.mxu0 0.0
        %1546 = vmatpush1.msra.mxu0 0.0
        %1547 = vmatprep.mubr.f32.mxu0 0.0
        %1548 = vmatmul.mubr.f32.gmra.mrb[0].mxu0 %v1481
        %v1549 = vpop.f32.mrb[0].mxu0
        %v1550 = vadd.f32 %v1477, %v1549
        %v1551 = vpop.f32.mrb[0].mxu0
        %1552 = vdwg.mxu0
        %1553 = vrot.lane.b32.xlu0 %v877, 112
        %v1554 = vpop.permute.xlu0 %1553
        %1555 = vrot.lane.b32.xlu0 %v957, 112
        %v1556 = vpop.permute.xlu0 %1555
        %v1557 = vsel %vm1042, %v1554, 0
        %v1559 = vsel %vm1042, %v1556, 0
        %1561 = vmatprep.subr.mxu0 0.0
        %1562 = vmatpush1.xpose.msra.mxu0 %v1559
        %1563 = vmatprep.subr.mxu0 0.0
        %1564 = vmatpush1.xpose.msra.mxu0 0.0
        %1565 = vmatprep.subr.mxu0 0.0
        %1566 = vmatpush1.xpose.msra.mxu0 0.0
        %1567 = vmatprep.subr.mxu0 0.0
        %1568 = vmatpush1.xpose.msra.mxu0 0.0
        %1569 = vmatprep.subr.mxu0 0.0
        %1570 = vmatpush1.xpose.msra.mxu0 0.0
        %1571 = vmatprep.subr.mxu0 0.0
        %1572 = vmatpush1.xpose.msra.mxu0 0.0
        %1573 = vmatprep.subr.mxu0 0.0
        %1574 = vmatpush1.xpose.msra.mxu0 0.0
        %1575 = vmatprep.subr.mxu0 0.0
        %1576 = vmatpush1.xpose.msra.mxu0 0.0
        %1577 = vmatprep.subr.mxu0 0.0
        %1578 = vmatpush1.xpose.msra.mxu0 0.0
        %1579 = vmatprep.subr.mxu0 0.0
        %1580 = vmatpush1.xpose.msra.mxu0 0.0
        %1581 = vmatprep.subr.mxu0 0.0
        %1582 = vmatpush1.xpose.msra.mxu0 0.0
        %1583 = vmatprep.subr.mxu0 0.0
        %1584 = vmatpush1.xpose.msra.mxu0 0.0
        %1585 = vmatprep.subr.mxu0 0.0
        %1586 = vmatpush1.xpose.msra.mxu0 0.0
        %1587 = vmatprep.subr.mxu0 0.0
        %1588 = vmatpush1.xpose.msra.mxu0 0.0
        %1589 = vmatprep.subr.mxu0 0.0
        %1590 = vmatpush1.xpose.msra.mxu0 0.0
        %1591 = vmatprep.subr.mxu0 0.0
        %1592 = vmatpush1.xpose.msra.mxu0 0.0
        %1593 = vmatprep.subr.mxu0 0.0
        %1594 = vmatpush1.xpose.msra.mxu0 0.0
        %1595 = vmatprep.subr.mxu0 0.0
        %1596 = vmatpush1.xpose.msra.mxu0 0.0
        %1597 = vmatprep.subr.mxu0 0.0
        %1598 = vmatpush1.xpose.msra.mxu0 0.0
        %1599 = vmatprep.subr.mxu0 0.0
        %1600 = vmatpush1.xpose.msra.mxu0 0.0
        %1601 = vmatprep.subr.mxu0 0.0
        %1602 = vmatpush1.xpose.msra.mxu0 0.0
        %1603 = vmatprep.subr.mxu0 0.0
        %1604 = vmatpush1.xpose.msra.mxu0 0.0
        %1605 = vmatprep.subr.mxu0 0.0
        %1606 = vmatpush1.xpose.msra.mxu0 0.0
        %1607 = vmatprep.subr.mxu0 0.0
        %1608 = vmatpush1.xpose.msra.mxu0 0.0
        %1609 = vmatprep.subr.mxu0 0.0
        %1610 = vmatpush1.xpose.msra.mxu0 0.0
        %1611 = vmatprep.subr.mxu0 0.0
        %1612 = vmatpush1.xpose.msra.mxu0 0.0
        %1613 = vmatprep.subr.mxu0 0.0
        %1614 = vmatpush1.xpose.msra.mxu0 0.0
        %1615 = vmatprep.subr.mxu0 0.0
        %1616 = vmatpush1.xpose.msra.mxu0 0.0
        %1617 = vmatprep.subr.mxu0 0.0
        %1618 = vmatpush1.xpose.msra.mxu0 0.0
        %1619 = vmatprep.subr.mxu0 0.0
        %1620 = vmatpush1.xpose.msra.mxu0 0.0
        %1621 = vmatprep.subr.mxu0 0.0
        %1622 = vmatpush1.xpose.msra.mxu0 0.0
        %1623 = vmatprep.subr.mxu0 0.0
        %1624 = vmatpush1.xpose.msra.mxu0 0.0
        %1625 = vmatprep.mubr.f32.mxu0 0.0
        %1626 = vmatmul.mubr.f32.gmra.mrb[0].mxu0 %v1557
        %v1627 = vpop.f32.mrb[0].mxu0
        %v1628 = vadd.f32 0.0, %v1627
        %v1629 = vpop.f32.mrb[0].mxu0
        %1630 = vdwg.mxu0
        %v1631 = vmul.f32 %v1628, 0.35355338
        %v1632 = vmin.f32 %v1631, 7.999756
        %v1633 = vmax.f32 %v1632, -7.999756
        %v1634 = vmul.f32 %v1633, 4096.0
        %v1635 = vcvt.f32.s32.to.zero.pseudo %v1634
        %v1636 = vcvt.s32.f32 %v1635
        %v1637 = vmul.f32 %v1636, 0.00024414063
        %v1638 = vsel %vm1042, %v1637, -inf
        %1639 = vmax.xlane.f32.xlu0 %v1638
        %v1640 = vpop.xlane.xlu0 %1639
        %v1641 = vsub.f32 %v1637, %v1640
        %v1642 = vmul.f32 %v1641, 1.442695
        %v1643 = vpow.pop %v1642
        %v1644 = vsel %vm1042, %v1643, 0.0
        %1645 = vadd.xlane.f32.xlu0 %v1644
        %v1646 = vpop.xlane.xlu0 %1645
        %v1647 = vrcp.pop %v1646
        %v1648 = vmul.f32 %v1643, %v1647
        %v1649 = vmin.f32 %v1648, 7.999756
        %v1650 = vmax.f32 %v1649, -7.999756
        %v1651 = vmul.f32 %v1650, 4096.0
        %v1652 = vcvt.f32.s32.to.zero.pseudo %v1651
        %v1653 = vcvt.s32.f32 %v1652
        %v1654 = vmul.f32 %v1653, 0.00024414063
        %1655 = vrot.lane.b32.xlu0 %v1037, 112
        %v1656 = vpop.permute.xlu0 %1655
        %v1659 = vsel %vm1042, %v1654, 0
        %1661 = vmatprep.subr.mxu0 0.0
        %1662 = vmatpush1.msra.mxu0 %v1656
        %1663 = vmatprep.subr.mxu0 0.0
        %1664 = vmatpush1.msra.mxu0 0.0
        %1665 = vmatprep.subr.mxu0 0.0
        %1666 = vmatpush1.msra.mxu0 0.0
        %1667 = vmatprep.subr.mxu0 0.0
        %1668 = vmatpush1.msra.mxu0 0.0
        %1669 = vmatprep.subr.mxu0 0.0
        %1670 = vmatpush1.msra.mxu0 0.0
        %1671 = vmatprep.subr.mxu0 0.0
        %1672 = vmatpush1.msra.mxu0 0.0
        %1673 = vmatprep.subr.mxu0 0.0
        %1674 = vmatpush1.msra.mxu0 0.0
        %1675 = vmatprep.subr.mxu0 0.0
        %1676 = vmatpush1.msra.mxu0 0.0
        %1677 = vmatprep.subr.mxu0 0.0
        %1678 = vmatpush1.msra.mxu0 0.0
        %1679 = vmatprep.subr.mxu0 0.0
        %1680 = vmatpush1.msra.mxu0 0.0
        %1681 = vmatprep.subr.mxu0 0.0
        %1682 = vmatpush1.msra.mxu0 0.0
        %1683 = vmatprep.subr.mxu0 0.0
        %1684 = vmatpush1.msra.mxu0 0.0
        %1685 = vmatprep.subr.mxu0 0.0
        %1686 = vmatpush1.msra.mxu0 0.0
        %1687 = vmatprep.subr.mxu0 0.0
        %1688 = vmatpush1.msra.mxu0 0.0
        %1689 = vmatprep.subr.mxu0 0.0
        %1690 = vmatpush1.msra.mxu0 0.0
        %1691 = vmatprep.subr.mxu0 0.0
        %1692 = vmatpush1.msra.mxu0 0.0
        %1693 = vmatprep.subr.mxu0 0.0
        %1694 = vmatpush1.msra.mxu0 0.0
        %1695 = vmatprep.subr.mxu0 0.0
        %1696 = vmatpush1.msra.mxu0 0.0
        %1697 = vmatprep.subr.mxu0 0.0
        %1698 = vmatpush1.msra.mxu0 0.0
        %1699 = vmatprep.subr.mxu0 0.0
        %1700 = vmatpush1.msra.mxu0 0.0
        %1701 = vmatprep.subr.mxu0 0.0
        %1702 = vmatpush1.msra.mxu0 0.0
        %1703 = vmatprep.subr.mxu0 0.0
        %1704 = vmatpush1.msra.mxu0 0.0
        %1705 = vmatprep.subr.mxu0 0.0
        %1706 = vmatpush1.msra.mxu0 0.0
        %1707 = vmatprep.subr.mxu0 0.0
        %1708 = vmatpush1.msra.mxu0 0.0
        %1709 = vmatprep.subr.mxu0 0.0
        %1710 = vmatpush1.msra.mxu0 0.0
        %1711 = vmatprep.subr.mxu0 0.0
        %1712 = vmatpush1.msra.mxu0 0.0
        %1713 = vmatprep.subr.mxu0 0.0
        %1714 = vmatpush1.msra.mxu0 0.0
        %1715 = vmatprep.subr.mxu0 0.0
        %1716 = vmatpush1.msra.mxu0 0.0
        %1717 = vmatprep.subr.mxu0 0.0
        %1718 = vmatpush1.msra.mxu0 0.0
        %1719 = vmatprep.subr.mxu0 0.0
        %1720 = vmatpush1.msra.mxu0 0.0
        %1721 = vmatprep.subr.mxu0 0.0
        %1722 = vmatpush1.msra.mxu0 0.0
        %1723 = vmatprep.subr.mxu0 0.0
        %1724 = vmatpush1.msra.mxu0 0.0
        %1725 = vmatprep.mubr.f32.mxu0 0.0
        %1726 = vmatmul.mubr.f32.gmra.mrb[0].mxu0 %v1659
        %v1727 = vpop.f32.mrb[0].mxu0
        %v1728 = vadd.f32 0.0, %v1727
        %v1729 = vpop.f32.mrb[0].mxu0
        %1730 = vdwg.mxu0
        %v1731 = vmin.f32 %v1728, 7.999756
        %v1732 = vmax.f32 %v1731, -7.999756
        %v1733 = vmul.f32 %v1732, 4096.0
        %v1734 = vcvt.f32.s32.to.zero.pseudo %v1733
        %v1735 = vcvt.s32.f32 %v1734
        %v1736 = vmul.f32 %v1735, 0.00024414063
        %v1738 = vsel %vm1042, %v1736, 0
        %1740 = vmatprep.subr.mxu0 0.0
        %1741 = vmatpush1.msra.mxu0 %v1040
        %1742 = vmatprep.subr.mxu0 0.0
        %1743 = vmatpush1.msra.mxu0 0.0
        %1744 = vmatprep.subr.mxu0 0.0
        %1745 = vmatpush1.msra.mxu0 0.0
        %1746 = vmatprep.subr.mxu0 0.0
        %1747 = vmatpush1.msra.mxu0 0.0
        %1748 = vmatprep.subr.mxu0 0.0
        %1749 = vmatpush1.msra.mxu0 0.0
        %1750 = vmatprep.subr.mxu0 0.0
        %1751 = vmatpush1.msra.mxu0 0.0
        %1752 = vmatprep.subr.mxu0 0.0
        %1753 = vmatpush1.msra.mxu0 0.0
        %1754 = vmatprep.subr.mxu0 0.0
        %1755 = vmatpush1.msra.mxu0 0.0
        %1756 = vmatprep.subr.mxu0 0.0
        %1757 = vmatpush1.msra.mxu0 0.0
        %1758 = vmatprep.subr.mxu0 0.0
        %1759 = vmatpush1.msra.mxu0 0.0
        %1760 = vmatprep.subr.mxu0 0.0
        %1761 = vmatpush1.msra.mxu0 0.0
        %1762 = vmatprep.subr.mxu0 0.0
        %1763 = vmatpush1.msra.mxu0 0.0
        %1764 = vmatprep.subr.mxu0 0.0
        %1765 = vmatpush1.msra.mxu0 0.0
        %1766 = vmatprep.subr.mxu0 0.0
        %1767 = vmatpush1.msra.mxu0 0.0
        %1768 = vmatprep.subr.mxu0 0.0
        %1769 = vmatpush1.msra.mxu0 0.0
        %1770 = vmatprep.subr.mxu0 0.0
        %1771 = vmatpush1.msra.mxu0 0.0
        %1772 = vmatprep.subr.mxu0 0.0
        %1773 = vmatpush1.msra.mxu0 0.0
        %1774 = vmatprep.subr.mxu0 0.0
        %1775 = vmatpush1.msra.mxu0 0.0
        %1776 = vmatprep.subr.mxu0 0.0
        %1777 = vmatpush1.msra.mxu0 0.0
        %1778 = vmatprep.subr.mxu0 0.0
        %1779 = vmatpush1.msra.mxu0 0.0
        %1780 = vmatprep.subr.mxu0 0.0
        %1781 = vmatpush1.msra.mxu0 0.0
        %1782 = vmatprep.subr.mxu0 0.0
        %1783 = vmatpush1.msra.mxu0 0.0
        %1784 = vmatprep.subr.mxu0 0.0
        %1785 = vmatpush1.msra.mxu0 0.0
        %1786 = vmatprep.subr.mxu0 0.0
        %1787 = vmatpush1.msra.mxu0 0.0
        %1788 = vmatprep.subr.mxu0 0.0
        %1789 = vmatpush1.msra.mxu0 0.0
        %1790 = vmatprep.subr.mxu0 0.0
        %1791 = vmatpush1.msra.mxu0 0.0
        %1792 = vmatprep.subr.mxu0 0.0
        %1793 = vmatpush1.msra.mxu0 0.0
        %1794 = vmatprep.subr.mxu0 0.0
        %1795 = vmatpush1.msra.mxu0 0.0
        %1796 = vmatprep.subr.mxu0 0.0
        %1797 = vmatpush1.msra.mxu0 0.0
        %1798 = vmatprep.subr.mxu0 0.0
        %1799 = vmatpush1.msra.mxu0 0.0
        %1800 = vmatprep.subr.mxu0 0.0
        %1801 = vmatpush1.msra.mxu0 0.0
        %1802 = vmatprep.subr.mxu0 0.0
        %1803 = vmatpush1.msra.mxu0 0.0
        %1804 = vmatprep.mubr.f32.mxu0 0.0
        %1805 = vmatmul.mubr.f32.gmra.mrb[0].mxu0 %v1738
        %v1806 = vpop.f32.mrb[0].mxu0
        %v1807 = vadd.f32 0.0, %v1806
        %v1808 = vpop.f32.mrb[0].mxu0
        %1809 = vdwg.mxu0
        %v1810 = vadd.f32 %v1550, %v1807
        %1811 = vrot.lane.b32.xlu0 %v877, 104
        %v1812 = vpop.permute.xlu0 %1811
        %1813 = vrot.lane.b32.xlu0 %v957, 104
        %v1814 = vpop.permute.xlu0 %1813
        %v1815 = vsel %vm1042, %v1812, 0
        %v1817 = vsel %vm1042, %v1814, 0
        %1819 = vmatprep.subr.mxu0 0.0
        %1820 = vmatpush1.xpose.msra.mxu0 %v1817
        %1821 = vmatprep.subr.mxu0 0.0
        %1822 = vmatpush1.xpose.msra.mxu0 0.0
        %1823 = vmatprep.subr.mxu0 0.0
        %1824 = vmatpush1.xpose.msra.mxu0 0.0
        %1825 = vmatprep.subr.mxu0 0.0
        %1826 = vmatpush1.xpose.msra.mxu0 0.0
        %1827 = vmatprep.subr.mxu0 0.0
        %1828 = vmatpush1.xpose.msra.mxu0 0.0
        %1829 = vmatprep.subr.mxu0 0.0
        %1830 = vmatpush1.xpose.msra.mxu0 0.0
        %1831 = vmatprep.subr.mxu0 0.0
        %1832 = vmatpush1.xpose.msra.mxu0 0.0
        %1833 = vmatprep.subr.mxu0 0.0
        %1834 = vmatpush1.xpose.msra.mxu0 0.0
        %1835 = vmatprep.subr.mxu0 0.0
        %1836 = vmatpush1.xpose.msra.mxu0 0.0
        %1837 = vmatprep.subr.mxu0 0.0
        %1838 = vmatpush1.xpose.msra.mxu0 0.0
        %1839 = vmatprep.subr.mxu0 0.0
        %1840 = vmatpush1.xpose.msra.mxu0 0.0
        %1841 = vmatprep.subr.mxu0 0.0
        %1842 = vmatpush1.xpose.msra.mxu0 0.0
        %1843 = vmatprep.subr.mxu0 0.0
        %1844 = vmatpush1.xpose.msra.mxu0 0.0
        %1845 = vmatprep.subr.mxu0 0.0
        %1846 = vmatpush1.xpose.msra.mxu0 0.0
        %1847 = vmatprep.subr.mxu0 0.0
        %1848 = vmatpush1.xpose.msra.mxu0 0.0
        %1849 = vmatprep.subr.mxu0 0.0
        %1850 = vmatpush1.xpose.msra.mxu0 0.0
        %1851 = vmatprep.subr.mxu0 0.0
        %1852 = vmatpush1.xpose.msra.mxu0 0.0
        %1853 = vmatprep.subr.mxu0 0.0
        %1854 = vmatpush1.xpose.msra.mxu0 0.0
        %1855 = vmatprep.subr.mxu0 0.0
        %1856 = vmatpush1.xpose.msra.mxu0 0.0
        %1857 = vmatprep.subr.mxu0 0.0
        %1858 = vmatpush1.xpose.msra.mxu0 0.0
        %1859 = vmatprep.subr.mxu0 0.0
        %1860 = vmatpush1.xpose.msra.mxu0 0.0
        %1861 = vmatprep.subr.mxu0 0.0
        %1862 = vmatpush1.xpose.msra.mxu0 0.0
        %1863 = vmatprep.subr.mxu0 0.0
        %1864 = vmatpush1.xpose.msra.mxu0 0.0
        %1865 = vmatprep.subr.mxu0 0.0
        %1866 = vmatpush1.xpose.msra.mxu0 0.0
        %1867 = vmatprep.subr.mxu0 0.0
        %1868 = vmatpush1.xpose.msra.mxu0 0.0
        %1869 = vmatprep.subr.mxu0 0.0
        %1870 = vmatpush1.xpose.msra.mxu0 0.0
        %1871 = vmatprep.subr.mxu0 0.0
        %1872 = vmatpush1.xpose.msra.mxu0 0.0
        %1873 = vmatprep.subr.mxu0 0.0
        %1874 = vmatpush1.xpose.msra.mxu0 0.0
        %1875 = vmatprep.subr.mxu0 0.0
        %1876 = vmatpush1.xpose.msra.mxu0 0.0
        %1877 = vmatprep.subr.mxu0 0.0
        %1878 = vmatpush1.xpose.msra.mxu0 0.0
        %1879 = vmatprep.subr.mxu0 0.0
        %1880 = vmatpush1.xpose.msra.mxu0 0.0
        %1881 = vmatprep.subr.mxu0 0.0
        %1882 = vmatpush1.xpose.msra.mxu0 0.0
        %1883 = vmatprep.mubr.f32.mxu0 0.0
        %1884 = vmatmul.mubr.f32.gmra.mrb[0].mxu0 %v1815
        %v1885 = vpop.f32.mrb[0].mxu0
        %v1886 = vadd.f32 0.0, %v1885
        %v1887 = vpop.f32.mrb[0].mxu0
        %1888 = vdwg.mxu0
        %v1889 = vmul.f32 %v1886, 0.35355338
        %v1890 = vmin.f32 %v1889, 7.999756
        %v1891 = vmax.f32 %v1890, -7.999756
        %v1892 = vmul.f32 %v1891, 4096.0
        %v1893 = vcvt.f32.s32.to.zero.pseudo %v1892
        %v1894 = vcvt.s32.f32 %v1893
        %v1895 = vmul.f32 %v1894, 0.00024414063
        %v1896 = vsel %vm1042, %v1895, -inf
        %1897 = vmax.xlane.f32.xlu0 %v1896
        %v1898 = vpop.xlane.xlu0 %1897
        %v1899 = vsub.f32 %v1895, %v1898
        %v1900 = vmul.f32 %v1899, 1.442695
        %v1901 = vpow.pop %v1900
        %v1902 = vsel %vm1042, %v1901, 0.0
        %1903 = vadd.xlane.f32.xlu0 %v1902
        %v1904 = vpop.xlane.xlu0 %1903
        %v1905 = vrcp.pop %v1904
        %v1906 = vmul.f32 %v1901, %v1905
        %v1907 = vmin.f32 %v1906, 7.999756
        %v1908 = vmax.f32 %v1907, -7.999756
        %v1909 = vmul.f32 %v1908, 4096.0
        %v1910 = vcvt.f32.s32.to.zero.pseudo %v1909
        %v1911 = vcvt.s32.f32 %v1910
        %v1912 = vmul.f32 %v1911, 0.00024414063
        %1913 = vrot.lane.b32.xlu0 %v1037, 104
        %v1914 = vpop.permute.xlu0 %1913
        %v1917 = vsel %vm1042, %v1912, 0
        %1919 = vmatprep.subr.mxu0 0.0
        %1920 = vmatpush1.msra.mxu0 %v1914
        %1921 = vmatprep.subr.mxu0 0.0
        %1922 = vmatpush1.msra.mxu0 0.0
        %1923 = vmatprep.subr.mxu0 0.0
        %1924 = vmatpush1.msra.mxu0 0.0
        %1925 = vmatprep.subr.mxu0 0.0
        %1926 = vmatpush1.msra.mxu0 0.0
        %1927 = vmatprep.subr.mxu0 0.0
        %1928 = vmatpush1.msra.mxu0 0.0
        %1929 = vmatprep.subr.mxu0 0.0
        %1930 = vmatpush1.msra.mxu0 0.0
        %1931 = vmatprep.subr.mxu0 0.0
        %1932 = vmatpush1.msra.mxu0 0.0
        %1933 = vmatprep.subr.mxu0 0.0
        %1934 = vmatpush1.msra.mxu0 0.0
        %1935 = vmatprep.subr.mxu0 0.0
        %1936 = vmatpush1.msra.mxu0 0.0
        %1937 = vmatprep.subr.mxu0 0.0
        %1938 = vmatpush1.msra.mxu0 0.0
        %1939 = vmatprep.subr.mxu0 0.0
        %1940 = vmatpush1.msra.mxu0 0.0
        %1941 = vmatprep.subr.mxu0 0.0
        %1942 = vmatpush1.msra.mxu0 0.0
        %1943 = vmatprep.subr.mxu0 0.0
        %1944 = vmatpush1.msra.mxu0 0.0
        %1945 = vmatprep.subr.mxu0 0.0
        %1946 = vmatpush1.msra.mxu0 0.0
        %1947 = vmatprep.subr.mxu0 0.0
        %1948 = vmatpush1.msra.mxu0 0.0
        %1949 = vmatprep.subr.mxu0 0.0
        %1950 = vmatpush1.msra.mxu0 0.0
        %1951 = vmatprep.subr.mxu0 0.0
        %1952 = vmatpush1.msra.mxu0 0.0
        %1953 = vmatprep.subr.mxu0 0.0
        %1954 = vmatpush1.msra.mxu0 0.0
        %1955 = vmatprep.subr.mxu0 0.0
        %1956 = vmatpush1.msra.mxu0 0.0
        %1957 = vmatprep.subr.mxu0 0.0
        %1958 = vmatpush1.msra.mxu0 0.0
        %1959 = vmatprep.subr.mxu0 0.0
        %1960 = vmatpush1.msra.mxu0 0.0
        %1961 = vmatprep.subr.mxu0 0.0
        %1962 = vmatpush1.msra.mxu0 0.0
        %1963 = vmatprep.subr.mxu0 0.0
        %1964 = vmatpush1.msra.mxu0 0.0
        %1965 = vmatprep.subr.mxu0 0.0
        %1966 = vmatpush1.msra.mxu0 0.0
        %1967 = vmatprep.subr.mxu0 0.0
        %1968 = vmatpush1.msra.mxu0 0.0
        %1969 = vmatprep.subr.mxu0 0.0
        %1970 = vmatpush1.msra.mxu0 0.0
        %1971 = vmatprep.subr.mxu0 0.0
        %1972 = vmatpush1.msra.mxu0 0.0
        %1973 = vmatprep.subr.mxu0 0.0
        %1974 = vmatpush1.msra.mxu0 0.0
        %1975 = vmatprep.subr.mxu0 0.0
        %1976 = vmatpush1.msra.mxu0 0.0
        %1977 = vmatprep.subr.mxu0 0.0
        %1978 = vmatpush1.msra.mxu0 0.0
        %1979 = vmatprep.subr.mxu0 0.0
        %1980 = vmatpush1.msra.mxu0 0.0
        %1981 = vmatprep.subr.mxu0 0.0
        %1982 = vmatpush1.msra.mxu0 0.0
        %1983 = vmatprep.mubr.f32.mxu0 0.0
        %1984 = vmatmul.mubr.f32.gmra.mrb[0].mxu0 %v1917
        %v1985 = vpop.f32.mrb[0].mxu0
        %v1986 = vadd.f32 0.0, %v1985
        %v1987 = vpop.f32.mrb[0].mxu0
        %1988 = vdwg.mxu0
        %v1989 = vmin.f32 %v1986, 7.999756
        %v1990 = vmax.f32 %v1989, -7.999756
        %v1991 = vmul.f32 %v1990, 4096.0
        %v1992 = vcvt.f32.s32.to.zero.pseudo %v1991
        %v1993 = vcvt.s32.f32 %v1992
        %v1994 = vmul.f32 %v1993, 0.00024414063
        %v1996 = vsel %vm1042, %v1994, 0
        %1998 = vmatprep.subr.mxu0 0.0
        %1999 = vmatpush1.msra.mxu0 %v1041
        %2000 = vmatprep.subr.mxu0 0.0
        %2001 = vmatpush1.msra.mxu0 0.0
        %2002 = vmatprep.subr.mxu0 0.0
        %2003 = vmatpush1.msra.mxu0 0.0
        %2004 = vmatprep.subr.mxu0 0.0
        %2005 = vmatpush1.msra.mxu0 0.0
        %2006 = vmatprep.subr.mxu0 0.0
        %2007 = vmatpush1.msra.mxu0 0.0
        %2008 = vmatprep.subr.mxu0 0.0
        %2009 = vmatpush1.msra.mxu0 0.0
        %2010 = vmatprep.subr.mxu0 0.0
        %2011 = vmatpush1.msra.mxu0 0.0
        %2012 = vmatprep.subr.mxu0 0.0
        %2013 = vmatpush1.msra.mxu0 0.0
        %2014 = vmatprep.subr.mxu0 0.0
        %2015 = vmatpush1.msra.mxu0 0.0
        %2016 = vmatprep.subr.mxu0 0.0
        %2017 = vmatpush1.msra.mxu0 0.0
        %2018 = vmatprep.subr.mxu0 0.0
        %2019 = vmatpush1.msra.mxu0 0.0
        %2020 = vmatprep.subr.mxu0 0.0
        %2021 = vmatpush1.msra.mxu0 0.0
        %2022 = vmatprep.subr.mxu0 0.0
        %2023 = vmatpush1.msra.mxu0 0.0
        %2024 = vmatprep.subr.mxu0 0.0
        %2025 = vmatpush1.msra.mxu0 0.0
        %2026 = vmatprep.subr.mxu0 0.0
        %2027 = vmatpush1.msra.mxu0 0.0
        %2028 = vmatprep.subr.mxu0 0.0
        %2029 = vmatpush1.msra.mxu0 0.0
        %2030 = vmatprep.subr.mxu0 0.0
        %2031 = vmatpush1.msra.mxu0 0.0
        %2032 = vmatprep.subr.mxu0 0.0
        %2033 = vmatpush1.msra.mxu0 0.0
        %2034 = vmatprep.subr.mxu0 0.0
        %2035 = vmatpush1.msra.mxu0 0.0
        %2036 = vmatprep.subr.mxu0 0.0
        %2037 = vmatpush1.msra.mxu0 0.0
        %2038 = vmatprep.subr.mxu0 0.0
        %2039 = vmatpush1.msra.mxu0 0.0
        %2040 = vmatprep.subr.mxu0 0.0
        %2041 = vmatpush1.msra.mxu0 0.0
        %2042 = vmatprep.subr.mxu0 0.0
        %2043 = vmatpush1.msra.mxu0 0.0
        %2044 = vmatprep.subr.mxu0 0.0
        %2045 = vmatpush1.msra.mxu0 0.0
        %2046 = vmatprep.subr.mxu0 0.0
        %2047 = vmatpush1.msra.mxu0 0.0
        %2048 = vmatprep.subr.mxu0 0.0
        %2049 = vmatpush1.msra.mxu0 0.0
        %2050 = vmatprep.subr.mxu0 0.0
        %2051 = vmatpush1.msra.mxu0 0.0
        %2052 = vmatprep.subr.mxu0 0.0
        %2053 = vmatpush1.msra.mxu0 0.0
        %2054 = vmatprep.subr.mxu0 0.0
        %2055 = vmatpush1.msra.mxu0 0.0
        %2056 = vmatprep.subr.mxu0 0.0
        %2057 = vmatpush1.msra.mxu0 0.0
        %2058 = vmatprep.subr.mxu0 0.0
        %2059 = vmatpush1.msra.mxu0 0.0
        %2060 = vmatprep.subr.mxu0 0.0
        %2061 = vmatpush1.msra.mxu0 0.0
        %2062 = vmatprep.mubr.f32.mxu0 0.0
        %2063 = vmatmul.mubr.f32.gmra.mrb[0].mxu0 %v1996
        %v2064 = vpop.f32.mrb[0].mxu0
        %v2065 = vadd.f32 0.0, %v2064
        %v2066 = vpop.f32.mrb[0].mxu0
        %2067 = vdwg.mxu0
        %v2068 = vadd.f32 %v1810, %v2065
        %v2069 = vld [vmem:[%s732] sm:$0x1]
        %v2071 = vlaneseq
        %v2072 = vshrl.u32 %v2071, 7
        %v2073 = vsub.s32 0, %v2072
        %v2074 = vrot.slane %v2069, %v2073
        %v2076 = vadd.f32 %v2068, %v2074
        %v2077 = vmin.f32 %v2076, 7.999756
        %v2078 = vmax.f32 %v2077, -7.999756
        %v2079 = vmul.f32 %v2078, 4096.0
        %v2080 = vcvt.f32.s32.to.zero.pseudo %v2079
        %v2081 = vcvt.s32.f32 %v2080
        %v2082 = vmul.f32 %v2081, 0.00024414063
        %v2083 = vadd.f32 %v2082, %v757
        %v2084 = vmin.f32 %v2083, 7.999756
        %v2085 = vmax.f32 %v2084, -7.999756
        %v2086 = vmul.f32 %v2085, 4096.0
        %v2087 = vcvt.f32.s32.to.zero.pseudo %v2086
        %v2088 = vcvt.s32.f32 %v2087
        %v2089 = vmul.f32 %v2088, 0.00024414063
        %v2090 = vld [vmem:[%s735] sm:$0x1]
        %v2091 = vld [vmem:[%s738] sm:$0x1]
        %v2092 = vsel %vm760, %v2089, 0.0
        %2093 = vadd.xlane.f32.xlu0 %v2092
        %v2094 = vpop.xlane.xlu0 %2093
        %v2095 = vmul.f32 %v2094, %v764
        %v2096 = vsub.f32 %v2089, %v2095
        %v2097 = vmul.f32 %v2096, %v2096
        %v2098 = vsel %vm760, %v2097, 0.0
        %2099 = vadd.xlane.f32.xlu0 %v2098
        %v2100 = vpop.xlane.xlu0 %2099
        %v2101 = vmul.f32 %v2100, %v764
        %v2102 = vadd.f32 %v2101, 1e-05
        %v2103 = vrsqrt.pop %v2102
        %v2104 = vmul.f32 %v2096, %v2103
        %v2106 = vlaneseq
        %v2107 = vshrl.u32 %v2106, 7
        %v2108 = vsub.s32 0, %v2107
        %v2109 = vrot.slane %v2090, %v2108
        %v2111 = vmul.f32 %v2104, %v2109
        %v2113 = vlaneseq
        %v2114 = vshrl.u32 %v2113, 7
        %v2115 = vsub.s32 0, %v2114
        %v2116 = vrot.slane %v2091, %v2115
        %v2118 = vadd.f32 %v2111, %v2116
        %v2119 = vmin.f32 %v2118, 7.999756
        %v2120 = vmax.f32 %v2119, -7.999756
        %v2121 = vmul.f32 %v2120, 4096.0
        %v2122 = vcvt.f32.s32.to.zero.pseudo %v2121
        %v2123 = vcvt.s32.f32 %v2122
        %v2124 = vmul.f32 %v2123, 0.00024414063
        %v2125 = vld [vmem:[%s613] sm:$0xff]
        %v2126 = vld [vmem:[%s613 + $0x8] sm:$0xff]
        %v2127 = vld [vmem:[%s613 + $0x10] sm:$0xff]
        %v2128 = vld [vmem:[%s613 + $0x18] sm:$0xff]
        %v2129 = vld [vmem:[%s741] sm:$0x1]
        %v2131 = vlaneseq
        %v2132 = vshrl.u32 %v2131, 7
        %v2133 = vsub.s32 0, %v2132
        %v2134 = vrot.slane %v2129, %v2133
        %v2137 = vsel %vm760, %v2124, 0
        %2139 = vmatprep.subr.mxu0 0.0
        %2140 = vmatpush1.msra.mxu0 %v2125
        %2141 = vmatprep.subr.mxu0 0.0
        %2142 = vmatpush1.msra.mxu0 %v2126
        %2143 = vmatprep.subr.mxu0 0.0
        %2144 = vmatpush1.msra.mxu0 %v2127
        %2145 = vmatprep.subr.mxu0 0.0
        %2146 = vmatpush1.msra.mxu0 %v2128
        %2147 = vmatprep.subr.mxu0 0.0
        %2148 = vmatpush1.msra.mxu0 0.0
        %2149 = vmatprep.subr.mxu0 0.0
        %2150 = vmatpush1.msra.mxu0 0.0
        %2151 = vmatprep.subr.mxu0 0.0
        %2152 = vmatpush1.msra.mxu0 0.0
        %2153 = vmatprep.subr.mxu0 0.0
        %2154 = vmatpush1.msra.mxu0 0.0
        %2155 = vmatprep.subr.mxu0 0.0
        %2156 = vmatpush1.msra.mxu0 0.0
        %2157 = vmatprep.subr.mxu0 0.0
        %2158 = vmatpush1.msra.mxu0 0.0
        %2159 = vmatprep.subr.mxu0 0.0
        %2160 = vmatpush1.msra.mxu0 0.0
        %2161 = vmatprep.subr.mxu0 0.0
        %2162 = vmatpush1.msra.mxu0 0.0
        %2163 = vmatprep.subr.mxu0 0.0
        %2164 = vmatpush1.msra.mxu0 0.0
        %2165 = vmatprep.subr.mxu0 0.0
        %2166 = vmatpush1.msra.mxu0 0.0
        %2167 = vmatprep.subr.mxu0 0.0
        %2168 = vmatpush1.msra.mxu0 0.0
        %2169 = vmatprep.subr.mxu0 0.0
        %2170 = vmatpush1.msra.mxu0 0.0
        %2171 = vmatprep.subr.mxu0 0.0
        %2172 = vmatpush1.msra.mxu0 0.0
        %2173 = vmatprep.subr.mxu0 0.0
        %2174 = vmatpush1.msra.mxu0 0.0
        %2175 = vmatprep.subr.mxu0 0.0
        %2176 = vmatpush1.msra.mxu0 0.0
        %2177 = vmatprep.subr.mxu0 0.0
        %2178 = vmatpush1.msra.mxu0 0.0
        %2179 = vmatprep.subr.mxu0 0.0
        %2180 = vmatpush1.msra.mxu0 0.0
        %2181 = vmatprep.subr.mxu0 0.0
        %2182 = vmatpush1.msra.mxu0 0.0
        %2183 = vmatprep.subr.mxu0 0.0
        %2184 = vmatpush1.msra.mxu0 0.0
        %2185 = vmatprep.subr.mxu0 0.0
        %2186 = vmatpush1.msra.mxu0 0.0
        %2187 = vmatprep.subr.mxu0 0.0
        %2188 = vmatpush1.msra.mxu0 0.0
        %2189 = vmatprep.subr.mxu0 0.0
        %2190 = vmatpush1.msra.mxu0 0.0
        %2191 = vmatprep.subr.mxu0 0.0
        %2192 = vmatpush1.msra.mxu0 0.0
        %2193 = vmatprep.subr.mxu0 0.0
        %2194 = vmatpush1.msra.mxu0 0.0
        %2195 = vmatprep.subr.mxu0 0.0
        %2196 = vmatpush1.msra.mxu0 0.0
        %2197 = vmatprep.subr.mxu0 0.0
        %2198 = vmatpush1.msra.mxu0 0.0
        %2199 = vmatprep.subr.mxu0 0.0
        %2200 = vmatpush1.msra.mxu0 0.0
        %2201 = vmatprep.subr.mxu0 0.0
        %2202 = vmatpush1.msra.mxu0 0.0
        %2203 = vmatprep.mubr.f32.mxu0 0.0
        %2204 = vmatmul.mubr.f32.gmra.mrb[0].mxu0 %v2137
        %v2205 = vpop.f32.mrb[0].mxu0
        %v2206 = vadd.f32 %v2134, %v2205
        %v2207 = vpop.f32.mrb[0].mxu0
        %2208 = vdwg.mxu0
        %v2209 = vmin.f32 %v2206, 7.999756
        %v2210 = vmax.f32 %v2209, -7.999756
        %v2211 = vmul.f32 %v2210, 4096.0
        %v2212 = vcvt.f32.s32.to.zero.pseudo %v2211
        %v2213 = vcvt.s32.f32 %v2212
        %v2214 = vmul.f32 %v2213, 0.00024414063
        %v2215 = vmul.f32 %v2214, 0.5
        %v2216 = vmul.f32 %v2214, 0.70710677
        %vm2217 = vcmp.ge.f32.partialorder %v2216, 0.0
        %v2218 = vsel %vm2217, 1.0, -1.0
        %v2219 = vand.u32 2147483647, %v2216
        %v2220 = vmul.f32 %v2219, 0.3275911
        %v2221 = vadd.f32 %v2220, 1.0
        %v2222 = vrcp.pop %v2221
        %v2223 = vmul.f32 %v2222, 1.0614054
        %v2224 = vadd.f32 %v2223, -1.4531521
        %v2225 = vmul.f32 %v2224, %v2222
        %v2226 = vadd.f32 %v2225, 1.4214138
        %v2227 = vmul.f32 %v2226, %v2222
        %v2228 = vadd.f32 %v2227, -0.28449672
        %v2229 = vmul.f32 %v2228, %v2222
        %v2230 = vadd.f32 %v2229, 0.2548296
        %v2231 = vmul.f32 %v2230, %v2222
        %v2232 = vsub.f32 0.0, %v2219
        %v2233 = vmul.f32 %v2232, %v2219
        %v2234 = vmul.f32 %v2233, 1.442695
        %v2235 = vpow.pop %v2234
        %v2236 = vmul.f32 %v2231, %v2235
        %v2237 = vsub.f32 1.0, %v2236
        %v2238 = vmul.f32 %v2218, %v2237
        %v2239 = vadd.f32 %v2238, 1.0
        %v2240 = vmul.f32 %v2215, %v2239
        %v2241 = vmin.f32 %v2240, 7.999756
        %v2242 = vmax.f32 %v2241, -7.999756
        %v2243 = vmul.f32 %v2242, 4096.0
        %v2244 = vcvt.f32.s32.to.zero.pseudo %v2243
        %v2245 = vcvt.s32.f32 %v2244
        %v2246 = vmul.f32 %v2245, 0.00024414063
        %v2247 = vld [vmem:[%s746] sm:$0xff]
        %v2248 = vld [vmem:[%s746 + $0x8] sm:$0xff]
        %v2249 = vld [vmem:[%s746 + $0x10] sm:$0xff]
        %v2250 = vld [vmem:[%s746 + $0x18] sm:$0xff]
        %v2251 = vld [vmem:[%s746 + $0x20] sm:$0xff]
        %v2252 = vld [vmem:[%s746 + $0x28] sm:$0xff]
        %v2253 = vld [vmem:[%s746 + $0x30] sm:$0xff]
        %v2254 = vld [vmem:[%s746 + $0x38] sm:$0xff]
        %v2255 = vld [vmem:[%s749] sm:$0x1]
        %v2257 = vlaneseq
        %v2258 = vshrl.u32 %v2257, 7
        %v2259 = vsub.s32 0, %v2258
        %v2260 = vrot.slane %v2255, %v2259
        %vm2262 = vcmask 523264
        %v2264 = vsel %vm2262, %v2246, 0
        %2266 = vmatprep.subr.mxu0 0.0
        %2267 = vmatpush1.msra.mxu0 %v2247
        %2268 = vmatprep.subr.mxu0 0.0
        %2269 = vmatpush1.msra.mxu0 %v2248
        %2270 = vmatprep.subr.mxu0 0.0
        %2271 = vmatpush1.msra.mxu0 %v2249
        %2272 = vmatprep.subr.mxu0 0.0
        %2273 = vmatpush1.msra.mxu0 %v2250
        %2274 = vmatprep.subr.mxu0 0.0
        %2275 = vmatpush1.msra.mxu0 %v2251
        %2276 = vmatprep.subr.mxu0 0.0
        %2277 = vmatpush1.msra.mxu0 %v2252
        %2278 = vmatprep.subr.mxu0 0.0
        %2279 = vmatpush1.msra.mxu0 %v2253
        %2280 = vmatprep.subr.mxu0 0.0
        %2281 = vmatpush1.msra.mxu0 %v2254
        %2282 = vmatprep.subr.mxu0 0.0
        %2283 = vmatpush1.msra.mxu0 0.0
        %2284 = vmatprep.subr.mxu0 0.0
        %2285 = vmatpush1.msra.mxu0 0.0
        %2286 = vmatprep.subr.mxu0 0.0
        %2287 = vmatpush1.msra.mxu0 0.0
        %2288 = vmatprep.subr.mxu0 0.0
        %2289 = vmatpush1.msra.mxu0 0.0
        %2290 = vmatprep.subr.mxu0 0.0
        %2291 = vmatpush1.msra.mxu0 0.0
        %2292 = vmatprep.subr.mxu0 0.0
        %2293 = vmatpush1.msra.mxu0 0.0
        %2294 = vmatprep.subr.mxu0 0.0
        %2295 = vmatpush1.msra.mxu0 0.0
        %2296 = vmatprep.subr.mxu0 0.0
        %2297 = vmatpush1.msra.mxu0 0.0
        %2298 = vmatprep.subr.mxu0 0.0
        %2299 = vmatpush1.msra.mxu0 0.0
        %2300 = vmatprep.subr.mxu0 0.0
        %2301 = vmatpush1.msra.mxu0 0.0
        %2302 = vmatprep.subr.mxu0 0.0
        %2303 = vmatpush1.msra.mxu0 0.0
        %2304 = vmatprep.subr.mxu0 0.0
        %2305 = vmatpush1.msra.mxu0 0.0
        %2306 = vmatprep.subr.mxu0 0.0
        %2307 = vmatpush1.msra.mxu0 0.0
        %2308 = vmatprep.subr.mxu0 0.0
        %2309 = vmatpush1.msra.mxu0 0.0
        %2310 = vmatprep.subr.mxu0 0.0
        %2311 = vmatpush1.msra.mxu0 0.0
        %2312 = vmatprep.subr.mxu0 0.0
        %2313 = vmatpush1.msra.mxu0 0.0
        %2314 = vmatprep.subr.mxu0 0.0
        %2315 = vmatpush1.msra.mxu0 0.0
        %2316 = vmatprep.subr.mxu0 0.0
        %2317 = vmatpush1.msra.mxu0 0.0
        %2318 = vmatprep.subr.mxu0 0.0
        %2319 = vmatpush1.msra.mxu0 0.0
        %2320 = vmatprep.subr.mxu0 0.0
        %2321 = vmatpush1.msra.mxu0 0.0
        %2322 = vmatprep.subr.mxu0 0.0
        %2323 = vmatpush1.msra.mxu0 0.0
        %2324 = vmatprep.subr.mxu0 0.0
        %2325 = vmatpush1.msra.mxu0 0.0
        %2326 = vmatprep.subr.mxu0 0.0
        %2327 = vmatpush1.msra.mxu0 0.0
        %2328 = vmatprep.subr.mxu0 0.0
        %2329 = vmatpush1.msra.mxu0 0.0
        %2330 = vmatprep.mubr.f32.mxu0 0.0
        %2331 = vmatmul.mubr.f32.gmra.mrb[0].mxu0 %v2264
        %v2332 = vpop.f32.mrb[0].mxu0
        %v2333 = vadd.f32 %v2260, %v2332
        %v2334 = vpop.f32.mrb[0].mxu0
        %2335 = vdwg.mxu0
        %v2336 = vmin.f32 %v2333, 7.999756
        %v2337 = vmax.f32 %v2336, -7.999756
        %v2338 = vmul.f32 %v2337, 4096.0
        %v2339 = vcvt.f32.s32.to.zero.pseudo %v2338
        %v2340 = vcvt.s32.f32 %v2339
        %v2341 = vmul.f32 %v2340, 0.00024414063
        %v2342 = vadd.f32 %v2341, %v2089
        %v2343 = vmin.f32 %v2342, 7.999756
        %v2344 = vmax.f32 %v2343, -7.999756
        %v2345 = vmul.f32 %v2344, 4096.0
        %v2346 = vcvt.f32.s32.to.zero.pseudo %v2345
        %v2347 = vcvt.s32.f32 %v2346
        %v2348 = vmul.f32 %v2347, 0.00024414063
        %2349 = vst.msk [vmem:[%s708] sm:$0xff] %vm760, %v2348
        %s2350 = sand.u32 %s418, 1
        %s2351 = scalar_lea.sflag [#allocation4], %s2350
        %s2352 = sand.u32 %s418, 1
        %s2353 = smul.addr %s2352, 8
        %s2354 = scalar_lea.vmem [#allocation8], %s2353
        // Predicated region
        $region93: #{tpu_custom_call.1} parent=75 // pred_check
          %p2355 = pneg %p428
        $region94: #{tpu_custom_call.1} parent=75 // pred_check_branch
          %2357 = sbr.rel (%p2355) target = $region96
        $region95: #{tpu_custom_call.1} parent=75 // pred_region
          %s2359 = ssub.s32 128, 128
          %2360 = vsyncadd %s2351, %s2359
          %s2361 = smul.addr %s38, 128
          %s2362 = scalar_lea.hbm %s14, %s2361
          %s2364 = sshll.u32 %s2354, 4
          %s2365 = int_to_ptr.vmem [resolvable:$true] %s2364
          %2367 = dma.vmem_to_hbm [thread:$0]  %s2365, 128, %s2362, %s2351
        $region96: #{tpu_custom_call.1} parent=75 // pred_fallthru
          _
      $region76: #{tpu_custom_call.1} parent=5 // pred_fallthru
        _
      %p2368 = scmp.le.s32.totalorder 2, %s29
      // Predicated region
      $region97: #{tpu_custom_call.1} parent=5 // pred_check
        %p2369 = pneg %p2368
      $region98: #{tpu_custom_call.1} parent=5 // pred_check_branch
        %2371 = sbr.rel (%p2369) target = $region100
      $region99: #{tpu_custom_call.1} parent=5 // pred_region
        %s2372 = ssub.s32 %s29, 2
        // Predicated region
        $region101: #{tpu_custom_call.1} parent=99 // pred_check
          %p2373 = pneg %p434
        $region102: #{tpu_custom_call.1} parent=99 // pred_check_branch
          %2375 = sbr.rel (%p2373) target = $region104
        $region103: #{tpu_custom_call.1} parent=99 // pred_region
          %s2376 = sand.u32 %s419, 1
          %s2377 = scalar_lea.sflag [#allocation4], %s2376
          %s2378 = sand.u32 %s419, 1
          %s2379 = smul.addr %s2378, 8
          %s2380 = scalar_lea.vmem [#allocation8], %s2379
          %2381 = dma.done %s2377, 128
        $region104: #{tpu_custom_call.1} parent=99 // pred_fallthru
          _
      $region100: #{tpu_custom_call.1} parent=5 // pred_fallthru
        _
    $region6: #{tpu_custom_call.1} parent=1 // loop_footer
      %s33 = sadd.s32 1, %s29
    $region7: #{tpu_custom_call.1} parent=1 // loop_footer_branch
      %28 = sbr.rel target = $region3
    $region8: #{tpu_custom_call.1} parent=1 // loop_exit
      _
    %2382 = vsyncpa [#allocation3], 1
    %s2383 = scalar_lea.sflag [#allocation3], 1
    %2384 = vsyncpa %s2383, 1
    %2385 = vsyncpa [#allocation6], 1
    %s2386 = scalar_lea.sflag [#allocation6], 1
    %2387 = vsyncpa %s2386, 1
    %2388 = vsyncpa [#allocation4], 1
    %s2389 = scalar_lea.sflag [#allocation4], 1
    %2390 = vsyncpa %s2389, 1

</llo_original>
